<compile_context>
chip_gen: v7x
topology: tpu7x:2x2x1
jax: 0.10.0
libtpu: 0.0.40
codegen_flags: <defaults>
</compile_context>

<pallas_src>
import functools

import numpy as np
import jax
import jax.numpy as jnp
from jax import lax
from jax.experimental import pallas as pl
from jax.experimental.pallas import tpu as pltpu


def _to_pair(v):
    if isinstance(v, (tuple, list)):
        assert len(v) == 2
        return (int(v[0]), int(v[1]))
    return (int(v), int(v))


def _round_up(x, m):
    return (x + m - 1) // m * m


def _unfold_kernel(p_ref, s_ref, x_ref, o_ref, *, c_blk, ph, pw, nH, nW,
                   mm_dtype, precision):
    # p_ref: (ph*nH, H)   one-hot row selector; row r = i*nH + h selects source
    #                     row h*ph + i - padh (all-zero row => padding => 0).
    # s_ref: (W, pw*nW)   one-hot col selector; col c = j*nW + w selects source
    #                     col w*pw + j - padw (all-zero col => padding => 0).
    # x_ref: (c_blk, H, W)             raw (un-padded) input channels
    # o_ref: (c_blk, ph, pw, nH, nW)   o[c,i,j,h,w] = x_padded[c, h*ph+i, w*pw+j]
    p = p_ref[...]
    s = s_ref[...]
    for c in range(c_blk):
        x = x_ref[c]
        if x.dtype != mm_dtype:
            x = x.astype(mm_dtype)          # no-op for bf16/f32 native paths
        rows = jnp.dot(p, x, preferred_element_type=jnp.float32,
                       precision=precision)               # (ph*nH, W), f32 acc
        z = jnp.dot(rows.astype(mm_dtype), s,
                    preferred_element_type=jnp.float32,
                    precision=precision)                   # (ph*nH, pw*nW)
        # Scatter z (i-major rows, j-major cols) into the (ph, pw, nH, nW)
        # layout with static VMEM slice stores; the whole block is written back
        # to HBM as a single contiguous DMA at the grid-step boundary.
        for i in range(ph):
            zi = z[i * nH:(i + 1) * nH, :]
            for j in range(pw):
                o_ref[c, i, j] = zi[:, j * nW:(j + 1) * nW].astype(o_ref.dtype)


def _build_selectors(H, W, ph, pw, padh, padw, nH, nW, dtype):
    r = np.arange(ph * nH)
    src_row = (r % nH) * ph + (r // nH) - padh            # i-major rows
    P = (src_row[:, None] == np.arange(H)[None, :])       # (ph*nH, H)
    c = np.arange(pw * nW)
    src_col = (c % nW) * pw + (c // nW) - padw             # j-major cols
    S = (np.arange(W)[:, None] == src_col[None, :])        # (W, pw*nW)
    return jnp.asarray(P, dtype=dtype), jnp.asarray(S, dtype=dtype)


def _pick_c_block(B, C, H, W, ph, pw, nH, nW, itemsize):
    # Pack multiple channels per grid step when planes are small so each
    # HBM<->VMEM DMA is reasonably sized, while keeping the double-buffered
    # VMEM footprint (with (8,128) tile padding) well under budget and
    # keeping >= 2 parallel grid steps for the two v7x TensorCores.
    plane_in = H * W * itemsize
    in_vmem = _round_up(H, 8) * _round_up(W, 128) * itemsize
    out_vmem = ph * pw * _round_up(nH, 8) * _round_up(nW, 128) * itemsize
    per_chan_vmem = in_vmem + out_vmem
    target_dma = 512 * 1024                 # aim for ~0.5 MiB input DMAs
    vmem_budget = 12 * 1024 * 1024          # per buffer; x2 double-buffering
    c_blk = min(C, 8,
                max(1, target_dma // max(plane_in, 1)),
                max(1, vmem_budget // max(per_chan_vmem, 1)))
    while c_blk > 1 and B * ((C + c_blk - 1) // c_blk) < 2:
        c_blk -= 1                          # keep >= 2 grid steps if possible
    while C % c_blk:
        c_blk -= 1                          # even tiling of the channel axis
    return c_blk


def unfold_pallas(data, patch_size, padding):
    # Matches torch.nn.Unfold(kernel_size=patch, stride=patch, padding=pad):
    # dilation == 1, stride == kernel_size (tail rows/cols past the last full
    # patch are dropped, as torch does).
    ph, pw = patch_size
    padh, padw = padding
    B, C, H, W = data.shape
    nH = (H + 2 * padh - ph) // ph + 1
    nW = (W + 2 * padw - pw) // pw + 1
    assert nH > 0 and nW > 0, "patch larger than padded input"

    if data.dtype == jnp.bfloat16:
        # Native single-pass bf16 MXU; 0/1 selection is exact in bf16.
        mm_dtype, precision = jnp.bfloat16, None
    else:
        # f32 (and other dtypes via f32): HIGHEST keeps the one-hot selection
        # bit-exact for raw float32 data (default precision rounds operands
        # to bf16 on the MXU).
        # TODO(synk): integer dtypes with |x| >= 2^24 lose exactness on this
        # f32 path; a non-MXU gather path would be needed for those.
        mm_dtype, precision = jnp.float32, lax.Precision.HIGHEST

    P, S = _build_selectors(H, W, ph, pw, padh, padw, nH, nW, mm_dtype)
    c_blk = _pick_c_block(B, C, H, W, ph, pw, nH, nW, data.dtype.itemsize)

    kernel = functools.partial(
        _unfold_kernel, c_blk=c_blk, ph=ph, pw=pw, nH=nH, nW=nW,
        mm_dtype=mm_dtype, precision=precision)

    out6 = pl.pallas_call(
        kernel,
        out_shape=jax.ShapeDtypeStruct((B, C, ph, pw, nH, nW), data.dtype),
        grid_spec=pltpu.PrefetchScalarGridSpec(
            num_scalar_prefetch=0,
            grid=(B, C // c_blk),
            in_specs=[
                # Selectors: constant block index -> DMA'd once, resident.
                pl.BlockSpec((ph * nH, H), lambda b, c: (0, 0)),
                pl.BlockSpec((W, pw * nW), lambda b, c: (0, 0)),
                # One contiguous (c_blk, H, W) input block per step.
                pl.BlockSpec((None, c_blk, H, W), lambda b, c: (b, c, 0, 0)),
            ],
            # One contiguous (c_blk, ph, pw, nH, nW) output block per step
            # (single writeback DMA instead of pw masked nW-wide stores).
            out_specs=pl.BlockSpec((None, c_blk, ph, pw, nH, nW),
                                   lambda b, c: (b, c, 0, 0, 0, 0)),
        ),
        compiler_params=pltpu.CompilerParams(
            dimension_semantics=("parallel", "parallel"),
            vmem_limit_bytes=32 * 1024 * 1024),
    )(P, S, data)

    # Free reshape (adjacent-dim merges only) to the torch Unfold layout.
    return out6.reshape(B, C * ph * pw, nH * nW)


class UnfoldPallas:
    """Mirror of the PyTorch `Unfold` module (stride == kernel_size)."""

    def __init__(self, patch_size, padding=0, img_channel=3):
        self.patch_size = _to_pair(patch_size)
        self.padding = _to_pair(padding)
        self.img_channel = img_channel  # unused in forward, kept for parity

    def __call__(self, data):
        return unfold_pallas(data, self.patch_size, self.padding)


def unfold_ref(data, patch_size, padding):
    """Pure-jnp reference matching torch.nn.Unfold(kernel=patch, stride=patch, padding=pad)."""
    ph, pw = patch_size
    padh, padw = padding
    B, C, H, W = data.shape
    nH = (H + 2 * padh - ph) // ph + 1
    nW = (W + 2 * padw - pw) // pw + 1
    xp = jnp.pad(data, ((0, 0), (0, 0), (padh, padh), (padw, padw)))
    xp = xp[:, :, : nH * ph, : nW * pw]
    x = xp.reshape(B, C, nH, ph, nW, pw)
    x = jnp.transpose(x, (0, 1, 3, 5, 2, 4))            # (B, C, ph, pw, nH, nW)
    return x.reshape(B, C * ph * pw, nH * nW)


if __name__ == "__main__":
    key = jax.random.PRNGKey(0)
    x = jax.random.normal(key, (2, 4, 16, 16), dtype=jnp.float32)

    # case 1: patch 4x4, no padding, raw float32 (bit-exact via precision=HIGHEST)
    mod = UnfoldPallas(patch_size=4, padding=0, img_channel=4)
    out = jax.block_until_ready(mod(x))
    assert out.shape == (2, 4 * 4 * 4, 16), out.shape
    np.testing.assert_allclose(np.asarray(out),
                               np.asarray(unfold_ref(x, (4, 4), (0, 0))),
                               rtol=0, atol=0)

    # case 2: patch 3x3 with padding 1 (zero padding folded into the selectors)
    mod2 = UnfoldPallas(patch_size=3, padding=1, img_channel=4)
    out2 = jax.block_until_ready(mod2(x))
    assert out2.shape == (2, 4 * 3 * 3, 36), out2.shape
    np.testing.assert_allclose(np.asarray(out2),
                               np.asarray(unfold_ref(x, (3, 3), (1, 1))),
                               rtol=0, atol=0)

    # case 3: patch 5x5, no padding, spatial size not divisible (tail dropped)
    mod3 = UnfoldPallas(patch_size=5, padding=0, img_channel=4)
    out3 = jax.block_until_ready(mod3(x))
    assert out3.shape == (2, 4 * 5 * 5, 9), out3.shape
    np.testing.assert_allclose(np.asarray(out3),
                               np.asarray(unfold_ref(x, (5, 5), (0, 0))),
                               rtol=0, atol=0)

    # case 4: native bf16 path (no f32 upcast inside the kernel)
    xb = x.astype(jnp.bfloat16)
    out4 = jax.block_until_ready(mod(xb))
    assert out4.shape == (2, 4 * 4 * 4, 16) and out4.dtype == jnp.bfloat16
    np.testing.assert_allclose(
        np.asarray(out4.astype(jnp.float32)),
        np.asarray(unfold_ref(xb, (4, 4), (0, 0)).astype(jnp.float32)),
        rtol=0, atol=0)

    print("KERNEL_OK")
</pallas_src>

<mosaic_0001>
module attributes {stable_mosaic.version = 11 : i64} {
  func.func @_unfold_kernel(%arg0: i32, %arg1: i32, %arg2: memref<16x16xf32, #tpu.memory_space<vmem>>, %arg3: memref<16x16xf32, #tpu.memory_space<vmem>>, %arg4: memref<1x4x16x16xf32, #tpu.memory_space<vmem>>, %arg5: memref<1x4x4x4x4x4xf32, #tpu.memory_space<vmem>>) attributes {dimension_semantics = [#tpu.dimension_semantics<parallel>, #tpu.dimension_semantics<parallel>], iteration_bounds = array<i64: 2, 1>, scalar_prefetch = 0 : i64, scratch_operands = 0 : i64, tpu.core_type = #tpu.core_type<tc>, window_params = [{pipeline_mode = #tpu.pipeline_mode<synchronous>, transform_indices = @transform_0, window_bounds = array<i64: 16, 16>}, {pipeline_mode = #tpu.pipeline_mode<synchronous>, transform_indices = @transform_1, window_bounds = array<i64: 16, 16>}, {transform_indices = @transform_2, window_bounds = array<i64: 1, 4, 16, 16>}, {transform_indices = @transform_3, window_bounds = array<i64: 1, 4, 4, 4, 4, 4>}]} {
    %c0 = arith.constant 0 : index
    %c0_0 = arith.constant 0 : index
    %0 = vector.load %arg2[%c0, %c0_0] : memref<16x16xf32, #tpu.memory_space<vmem>>, vector<16x16xf32>
    %c0_1 = arith.constant 0 : index
    %c0_2 = arith.constant 0 : index
    %1 = vector.load %arg3[%c0_1, %c0_2] : memref<16x16xf32, #tpu.memory_space<vmem>>, vector<16x16xf32>
    %c0_3 = arith.constant 0 : index
    %c0_4 = arith.constant 0 : index
    %c0_5 = arith.constant 0 : index
    %c0_6 = arith.constant 0 : index
    %2 = vector.load %arg4[%c0_3, %c0_4, %c0_5, %c0_6] : memref<1x4x16x16xf32, #tpu.memory_space<vmem>>, vector<1x1x16x16xf32>
    %3 = vector.shape_cast %2 : vector<1x1x16x16xf32> to vector<16x16xf32>
    %cst = arith.constant dense<0.000000e+00> : vector<16x16xf32>
    %4 = tpu.matmul %0, %3, %cst {dimension_numbers = #tpu.dot_dimension_numbers<[1], [0], [0], [1], [0, 0, 1, 1], [], []>, precision = #tpu.contract_precision<fp32>} : vector<16x16xf32>, vector<16x16xf32>, vector<16x16xf32> -> vector<16x16xf32>
    %cst_7 = arith.constant dense<0.000000e+00> : vector<16x16xf32>
    %5 = tpu.matmul %4, %1, %cst_7 {dimension_numbers = #tpu.dot_dimension_numbers<[1], [0], [0], [1], [0, 0, 1, 1], [], []>, precision = #tpu.contract_precision<fp32>} : vector<16x16xf32>, vector<16x16xf32>, vector<16x16xf32> -> vector<16x16xf32>
    %6 = vector.extract_strided_slice %5 {offsets = [0, 0], sizes = [4, 16], strides = [1, 1]} : vector<16x16xf32> to vector<4x16xf32>
    %7 = vector.extract_strided_slice %6 {offsets = [0, 0], sizes = [4, 4], strides = [1, 1]} : vector<4x16xf32> to vector<4x4xf32>
    %c0_8 = arith.constant 0 : index
    %c0_9 = arith.constant 0 : index
    %c0_10 = arith.constant 0 : index
    %c0_11 = arith.constant 0 : index
    %c0_12 = arith.constant 0 : index
    %c0_13 = arith.constant 0 : index
    %8 = vector.load %arg5[%c0_8, %c0_9, %c0_10, %c0_11, %c0_12, %c0_13] : memref<1x4x4x4x4x4xf32, #tpu.memory_space<vmem>>, vector<1x1x1x1x4x4xf32>
    %9 = vector.shape_cast %8 : vector<1x1x1x1x4x4xf32> to vector<4x4xf32>
    %10 = vector.shape_cast %7 : vector<4x4xf32> to vector<1x1x1x1x4x4xf32>
    tpu.vector_store %arg5[%c0_8, %c0_9, %c0_10, %c0_11, %c0_12, %c0_13], %10 {strides = array<i32>} : memref<1x4x4x4x4x4xf32, #tpu.memory_space<vmem>>, vector<1x1x1x1x4x4xf32>,
    %11 = vector.extract_strided_slice %6 {offsets = [0, 4], sizes = [4, 4], strides = [1, 1]} : vector<4x16xf32> to vector<4x4xf32>
    %c0_14 = arith.constant 0 : index
    %c0_15 = arith.constant 0 : index
    %c0_16 = arith.constant 0 : index
    %c1 = arith.constant 1 : index
    %c0_17 = arith.constant 0 : index
    %c0_18 = arith.constant 0 : index
    %12 = vector.load %arg5[%c0_14, %c0_15, %c0_16, %c1, %c0_17, %c0_18] : memref<1x4x4x4x4x4xf32, #tpu.memory_space<vmem>>, vector<1x1x1x1x4x4xf32>
    %13 = vector.shape_cast %12 : vector<1x1x1x1x4x4xf32> to vector<4x4xf32>
    %14 = vector.shape_cast %11 : vector<4x4xf32> to vector<1x1x1x1x4x4xf32>
    tpu.vector_store %arg5[%c0_14, %c0_15, %c0_16, %c1, %c0_17, %c0_18], %14 {strides = array<i32>} : memref<1x4x4x4x4x4xf32, #tpu.memory_space<vmem>>, vector<1x1x1x1x4x4xf32>,
    %15 = vector.extract_strided_slice %6 {offsets = [0, 8], sizes = [4, 4], strides = [1, 1]} : vector<4x16xf32> to vector<4x4xf32>
    %c0_19 = arith.constant 0 : index
    %c0_20 = arith.constant 0 : index
    %c0_21 = arith.constant 0 : index
    %c2 = arith.constant 2 : index
    %c0_22 = arith.constant 0 : index
    %c0_23 = arith.constant 0 : index
    %16 = vector.load %arg5[%c0_19, %c0_20, %c0_21, %c2, %c0_22, %c0_23] : memref<1x4x4x4x4x4xf32, #tpu.memory_space<vmem>>, vector<1x1x1x1x4x4xf32>
    %17 = vector.shape_cast %16 : vector<1x1x1x1x4x4xf32> to vector<4x4xf32>
    %18 = vector.shape_cast %15 : vector<4x4xf32> to vector<1x1x1x1x4x4xf32>
    tpu.vector_store %arg5[%c0_19, %c0_20, %c0_21, %c2, %c0_22, %c0_23], %18 {strides = array<i32>} : memref<1x4x4x4x4x4xf32, #tpu.memory_space<vmem>>, vector<1x1x1x1x4x4xf32>,
    %19 = vector.extract_strided_slice %6 {offsets = [0, 12], sizes = [4, 4], strides = [1, 1]} : vector<4x16xf32> to vector<4x4xf32>
    %c0_24 = arith.constant 0 : index
    %c0_25 = arith.constant 0 : index
    %c0_26 = arith.constant 0 : index
    %c3 = arith.constant 3 : index
    %c0_27 = arith.constant 0 : index
    %c0_28 = arith.constant 0 : index
    %20 = vector.load %arg5[%c0_24, %c0_25, %c0_26, %c3, %c0_27, %c0_28] : memref<1x4x4x4x4x4xf32, #tpu.memory_space<vmem>>, vector<1x1x1x1x4x4xf32>
    %21 = vector.shape_cast %20 : vector<1x1x1x1x4x4xf32> to vector<4x4xf32>
    %22 = vector.shape_cast %19 : vector<4x4xf32> to vector<1x1x1x1x4x4xf32>
    tpu.vector_store %arg5[%c0_24, %c0_25, %c0_26, %c3, %c0_27, %c0_28], %22 {strides = array<i32>} : memref<1x4x4x4x4x4xf32, #tpu.memory_space<vmem>>, vector<1x1x1x1x4x4xf32>,
    %23 = vector.extract_strided_slice %5 {offsets = [4, 0], sizes = [4, 16], strides = [1, 1]} : vector<16x16xf32> to vector<4x16xf32>
    %24 = vector.extract_strided_slice %23 {offsets = [0, 0], sizes = [4, 4], strides = [1, 1]} : vector<4x16xf32> to vector<4x4xf32>
    %c0_29 = arith.constant 0 : index
    %c0_30 = arith.constant 0 : index
    %c1_31 = arith.constant 1 : index
    %c0_32 = arith.constant 0 : index
    %c0_33 = arith.constant 0 : index
    %c0_34 = arith.constant 0 : index
    %25 = vector.load %arg5[%c0_29, %c0_30, %c1_31, %c0_32, %c0_33, %c0_34] : memref<1x4x4x4x4x4xf32, #tpu.memory_space<vmem>>, vector<1x1x1x1x4x4xf32>
    %26 = vector.shape_cast %25 : vector<1x1x1x1x4x4xf32> to vector<4x4xf32>
    %27 = vector.shape_cast %24 : vector<4x4xf32> to vector<1x1x1x1x4x4xf32>
    tpu.vector_store %arg5[%c0_29, %c0_30, %c1_31, %c0_32, %c0_33, %c0_34], %27 {strides = array<i32>} : memref<1x4x4x4x4x4xf32, #tpu.memory_space<vmem>>, vector<1x1x1x1x4x4xf32>,
    %28 = vector.extract_strided_slice %23 {offsets = [0, 4], sizes = [4, 4], strides = [1, 1]} : vector<4x16xf32> to vector<4x4xf32>
    %c0_35 = arith.constant 0 : index
    %c0_36 = arith.constant 0 : index
    %c1_37 = arith.constant 1 : index
    %c1_38 = arith.constant 1 : index
    %c0_39 = arith.constant 0 : index
    %c0_40 = arith.constant 0 : index
    %29 = vector.load %arg5[%c0_35, %c0_36, %c1_37, %c1_38, %c0_39, %c0_40] : memref<1x4x4x4x4x4xf32, #tpu.memory_space<vmem>>, vector<1x1x1x1x4x4xf32>
    %30 = vector.shape_cast %29 : vector<1x1x1x1x4x4xf32> to vector<4x4xf32>
    %31 = vector.shape_cast %28 : vector<4x4xf32> to vector<1x1x1x1x4x4xf32>
    tpu.vector_store %arg5[%c0_35, %c0_36, %c1_37, %c1_38, %c0_39, %c0_40], %31 {strides = array<i32>} : memref<1x4x4x4x4x4xf32, #tpu.memory_space<vmem>>, vector<1x1x1x1x4x4xf32>,
    %32 = vector.extract_strided_slice %23 {offsets = [0, 8], sizes = [4, 4], strides = [1, 1]} : vector<4x16xf32> to vector<4x4xf32>
    %c0_41 = arith.constant 0 : index
    %c0_42 = arith.constant 0 : index
    %c1_43 = arith.constant 1 : index
    %c2_44 = arith.constant 2 : index
    %c0_45 = arith.constant 0 : index
    %c0_46 = arith.constant 0 : index
    %33 = vector.load %arg5[%c0_41, %c0_42, %c1_43, %c2_44, %c0_45, %c0_46] : memref<1x4x4x4x4x4xf32, #tpu.memory_space<vmem>>, vector<1x1x1x1x4x4xf32>
    %34 = vector.shape_cast %33 : vector<1x1x1x1x4x4xf32> to vector<4x4xf32>
    %35 = vector.shape_cast %32 : vector<4x4xf32> to vector<1x1x1x1x4x4xf32>
    tpu.vector_store %arg5[%c0_41, %c0_42, %c1_43, %c2_44, %c0_45, %c0_46], %35 {strides = array<i32>} : memref<1x4x4x4x4x4xf32, #tpu.memory_space<vmem>>, vector<1x1x1x1x4x4xf32>,
    %36 = vector.extract_strided_slice %23 {offsets = [0, 12], sizes = [4, 4], strides = [1, 1]} : vector<4x16xf32> to vector<4x4xf32>
    %c0_47 = arith.constant 0 : index
    %c0_48 = arith.constant 0 : index
    %c1_49 = arith.constant 1 : index
    %c3_50 = arith.constant 3 : index
    %c0_51 = arith.constant 0 : index
    %c0_52 = arith.constant 0 : index
    %37 = vector.load %arg5[%c0_47, %c0_48, %c1_49, %c3_50, %c0_51, %c0_52] : memref<1x4x4x4x4x4xf32, #tpu.memory_space<vmem>>, vector<1x1x1x1x4x4xf32>
    %38 = vector.shape_cast %37 : vector<1x1x1x1x4x4xf32> to vector<4x4xf32>
    %39 = vector.shape_cast %36 : vector<4x4xf32> to vector<1x1x1x1x4x4xf32>
    tpu.vector_store %arg5[%c0_47, %c0_48, %c1_49, %c3_50, %c0_51, %c0_52], %39 {strides = array<i32>} : memref<1x4x4x4x4x4xf32, #tpu.memory_space<vmem>>, vector<1x1x1x1x4x4xf32>,
    %40 = vector.extract_strided_slice %5 {offsets = [8, 0], sizes = [4, 16], strides = [1, 1]} : vector<16x16xf32> to vector<4x16xf32>
    %41 = vector.extract_strided_slice %40 {offsets = [0, 0], sizes = [4, 4], strides = [1, 1]} : vector<4x16xf32> to vector<4x4xf32>
    %c0_53 = arith.constant 0 : index
    %c0_54 = arith.constant 0 : index
    %c2_55 = arith.constant 2 : index
    %c0_56 = arith.constant 0 : index
    %c0_57 = arith.constant 0 : index
    %c0_58 = arith.constant 0 : index
    %42 = vector.load %arg5[%c0_53, %c0_54, %c2_55, %c0_56, %c0_57, %c0_58] : memref<1x4x4x4x4x4xf32, #tpu.memory_space<vmem>>, vector<1x1x1x1x4x4xf32>
    %43 = vector.shape_cast %42 : vector<1x1x1x1x4x4xf32> to vector<4x4xf32>
    %44 = vector.shape_cast %41 : vector<4x4xf32> to vector<1x1x1x1x4x4xf32>
    tpu.vector_store %arg5[%c0_53, %c0_54, %c2_55, %c0_56, %c0_57, %c0_58], %44 {strides = array<i32>} : memref<1x4x4x4x4x4xf32, #tpu.memory_space<vmem>>, vector<1x1x1x1x4x4xf32>,
    %45 = vector.extract_strided_slice %40 {offsets = [0, 4], sizes = [4, 4], strides = [1, 1]} : vector<4x16xf32> to vector<4x4xf32>
    %c0_59 = arith.constant 0 : index
    %c0_60 = arith.constant 0 : index
    %c2_61 = arith.constant 2 : index
    %c1_62 = arith.constant 1 : index
    %c0_63 = arith.constant 0 : index
    %c0_64 = arith.constant 0 : index
    %46 = vector.load %arg5[%c0_59, %c0_60, %c2_61, %c1_62, %c0_63, %c0_64] : memref<1x4x4x4x4x4xf32, #tpu.memory_space<vmem>>, vector<1x1x1x1x4x4xf32>
    %47 = vector.shape_cast %46 : vector<1x1x1x1x4x4xf32> to vector<4x4xf32>
    %48 = vector.shape_cast %45 : vector<4x4xf32> to vector<1x1x1x1x4x4xf32>
    tpu.vector_store %arg5[%c0_59, %c0_60, %c2_61, %c1_62, %c0_63, %c0_64], %48 {strides = array<i32>} : memref<1x4x4x4x4x4xf32, #tpu.memory_space<vmem>>, vector<1x1x1x1x4x4xf32>,
    %49 = vector.extract_strided_slice %40 {offsets = [0, 8], sizes = [4, 4], strides = [1, 1]} : vector<4x16xf32> to vector<4x4xf32>
    %c0_65 = arith.constant 0 : index
    %c0_66 = arith.constant 0 : index
    %c2_67 = arith.constant 2 : index
    %c2_68 = arith.constant 2 : index
    %c0_69 = arith.constant 0 : index
    %c0_70 = arith.constant 0 : index
    %50 = vector.load %arg5[%c0_65, %c0_66, %c2_67, %c2_68, %c0_69, %c0_70] : memref<1x4x4x4x4x4xf32, #tpu.memory_space<vmem>>, vector<1x1x1x1x4x4xf32>
    %51 = vector.shape_cast %50 : vector<1x1x1x1x4x4xf32> to vector<4x4xf32>
    %52 = vector.shape_cast %49 : vector<4x4xf32> to vector<1x1x1x1x4x4xf32>
    tpu.vector_store %arg5[%c0_65, %c0_66, %c2_67, %c2_68, %c0_69, %c0_70], %52 {strides = array<i32>} : memref<1x4x4x4x4x4xf32, #tpu.memory_space<vmem>>, vector<1x1x1x1x4x4xf32>,
    %53 = vector.extract_strided_slice %40 {offsets = [0, 12], sizes = [4, 4], strides = [1, 1]} : vector<4x16xf32> to vector<4x4xf32>
    %c0_71 = arith.constant 0 : index
    %c0_72 = arith.constant 0 : index
    %c2_73 = arith.constant 2 : index
    %c3_74 = arith.constant 3 : index
    %c0_75 = arith.constant 0 : index
    %c0_76 = arith.constant 0 : index
    %54 = vector.load %arg5[%c0_71, %c0_72, %c2_73, %c3_74, %c0_75, %c0_76] : memref<1x4x4x4x4x4xf32, #tpu.memory_space<vmem>>, vector<1x1x1x1x4x4xf32>
    %55 = vector.shape_cast %54 : vector<1x1x1x1x4x4xf32> to vector<4x4xf32>
    %56 = vector.shape_cast %53 : vector<4x4xf32> to vector<1x1x1x1x4x4xf32>
    tpu.vector_store %arg5[%c0_71, %c0_72, %c2_73, %c3_74, %c0_75, %c0_76], %56 {strides = array<i32>} : memref<1x4x4x4x4x4xf32, #tpu.memory_space<vmem>>, vector<1x1x1x1x4x4xf32>,
    %57 = vector.extract_strided_slice %5 {offsets = [12, 0], sizes = [4, 16], strides = [1, 1]} : vector<16x16xf32> to vector<4x16xf32>
    %58 = vector.extract_strided_slice %57 {offsets = [0, 0], sizes = [4, 4], strides = [1, 1]} : vector<4x16xf32> to vector<4x4xf32>
    %c0_77 = arith.constant 0 : index
    %c0_78 = arith.constant 0 : index
    %c3_79 = arith.constant 3 : index
    %c0_80 = arith.constant 0 : index
    %c0_81 = arith.constant 0 : index
    %c0_82 = arith.constant 0 : index
    %59 = vector.load %arg5[%c0_77, %c0_78, %c3_79, %c0_80, %c0_81, %c0_82] : memref<1x4x4x4x4x4xf32, #tpu.memory_space<vmem>>, vector<1x1x1x1x4x4xf32>
    %60 = vector.shape_cast %59 : vector<1x1x1x1x4x4xf32> to vector<4x4xf32>
    %61 = vector.shape_cast %58 : vector<4x4xf32> to vector<1x1x1x1x4x4xf32>
    tpu.vector_store %arg5[%c0_77, %c0_78, %c3_79, %c0_80, %c0_81, %c0_82], %61 {strides = array<i32>} : memref<1x4x4x4x4x4xf32, #tpu.memory_space<vmem>>, vector<1x1x1x1x4x4xf32>,
    %62 = vector.extract_strided_slice %57 {offsets = [0, 4], sizes = [4, 4], strides = [1, 1]} : vector<4x16xf32> to vector<4x4xf32>
    %c0_83 = arith.constant 0 : index
    %c0_84 = arith.constant 0 : index
    %c3_85 = arith.constant 3 : index
    %c1_86 = arith.constant 1 : index
    %c0_87 = arith.constant 0 : index
    %c0_88 = arith.constant 0 : index
    %63 = vector.load %arg5[%c0_83, %c0_84, %c3_85, %c1_86, %c0_87, %c0_88] : memref<1x4x4x4x4x4xf32, #tpu.memory_space<vmem>>, vector<1x1x1x1x4x4xf32>
    %64 = vector.shape_cast %63 : vector<1x1x1x1x4x4xf32> to vector<4x4xf32>
    %65 = vector.shape_cast %62 : vector<4x4xf32> to vector<1x1x1x1x4x4xf32>
    tpu.vector_store %arg5[%c0_83, %c0_84, %c3_85, %c1_86, %c0_87, %c0_88], %65 {strides = array<i32>} : memref<1x4x4x4x4x4xf32, #tpu.memory_space<vmem>>, vector<1x1x1x1x4x4xf32>,
    %66 = vector.extract_strided_slice %57 {offsets = [0, 8], sizes = [4, 4], strides = [1, 1]} : vector<4x16xf32> to vector<4x4xf32>
    %c0_89 = arith.constant 0 : index
    %c0_90 = arith.constant 0 : index
    %c3_91 = arith.constant 3 : index
    %c2_92 = arith.constant 2 : index
    %c0_93 = arith.constant 0 : index
    %c0_94 = arith.constant 0 : index
    %67 = vector.load %arg5[%c0_89, %c0_90, %c3_91, %c2_92, %c0_93, %c0_94] : memref<1x4x4x4x4x4xf32, #tpu.memory_space<vmem>>, vector<1x1x1x1x4x4xf32>
    %68 = vector.shape_cast %67 : vector<1x1x1x1x4x4xf32> to vector<4x4xf32>
    %69 = vector.shape_cast %66 : vector<4x4xf32> to vector<1x1x1x1x4x4xf32>
    tpu.vector_store %arg5[%c0_89, %c0_90, %c3_91, %c2_92, %c0_93, %c0_94], %69 {strides = array<i32>} : memref<1x4x4x4x4x4xf32, #tpu.memory_space<vmem>>, vector<1x1x1x1x4x4xf32>,
    %70 = vector.extract_strided_slice %57 {offsets = [0, 12], sizes = [4, 4], strides = [1, 1]} : vector<4x16xf32> to vector<4x4xf32>
    %c0_95 = arith.constant 0 : index
    %c0_96 = arith.constant 0 : index
    %c3_97 = arith.constant 3 : index
    %c3_98 = arith.constant 3 : index
    %c0_99 = arith.constant 0 : index
    %c0_100 = arith.constant 0 : index
    %71 = vector.load %arg5[%c0_95, %c0_96, %c3_97, %c3_98, %c0_99, %c0_100] : memref<1x4x4x4x4x4xf32, #tpu.memory_space<vmem>>, vector<1x1x1x1x4x4xf32>
    %72 = vector.shape_cast %71 : vector<1x1x1x1x4x4xf32> to vector<4x4xf32>
    %73 = vector.shape_cast %70 : vector<4x4xf32> to vector<1x1x1x1x4x4xf32>
    tpu.vector_store %arg5[%c0_95, %c0_96, %c3_97, %c3_98, %c0_99, %c0_100], %73 {strides = array<i32>} : memref<1x4x4x4x4x4xf32, #tpu.memory_space<vmem>>, vector<1x1x1x1x4x4xf32>,
    %c0_101 = arith.constant 0 : index
    %c1_102 = arith.constant 1 : index
    %c0_103 = arith.constant 0 : index
    %c0_104 = arith.constant 0 : index
    %74 = vector.load %arg4[%c0_101, %c1_102, %c0_103, %c0_104] : memref<1x4x16x16xf32, #tpu.memory_space<vmem>>, vector<1x1x16x16xf32>
    %75 = vector.shape_cast %74 : vector<1x1x16x16xf32> to vector<16x16xf32>
    %cst_105 = arith.constant dense<0.000000e+00> : vector<16x16xf32>
    %76 = tpu.matmul %0, %75, %cst_105 {dimension_numbers = #tpu.dot_dimension_numbers<[1], [0], [0], [1], [0, 0, 1, 1], [], []>, precision = #tpu.contract_precision<fp32>} : vector<16x16xf32>, vector<16x16xf32>, vector<16x16xf32> -> vector<16x16xf32>
    %cst_106 = arith.constant dense<0.000000e+00> : vector<16x16xf32>
    %77 = tpu.matmul %76, %1, %cst_106 {dimension_numbers = #tpu.dot_dimension_numbers<[1], [0], [0], [1], [0, 0, 1, 1], [], []>, precision = #tpu.contract_precision<fp32>} : vector<16x16xf32>, vector<16x16xf32>, vector<16x16xf32> -> vector<16x16xf32>
    %78 = vector.extract_strided_slice %77 {offsets = [0, 0], sizes = [4, 16], strides = [1, 1]} : vector<16x16xf32> to vector<4x16xf32>
    %79 = vector.extract_strided_slice %78 {offsets = [0, 0], sizes = [4, 4], strides = [1, 1]} : vector<4x16xf32> to vector<4x4xf32>
    %c0_107 = arith.constant 0 : index
    %c1_108 = arith.constant 1 : index
    %c0_109 = arith.constant 0 : index
    %c0_110 = arith.constant 0 : index
    %c0_111 = arith.constant 0 : index
    %c0_112 = arith.constant 0 : index
    %80 = vector.load %arg5[%c0_107, %c1_108, %c0_109, %c0_110, %c0_111, %c0_112] : memref<1x4x4x4x4x4xf32, #tpu.memory_space<vmem>>, vector<1x1x1x1x4x4xf32>
    %81 = vector.shape_cast %80 : vector<1x1x1x1x4x4xf32> to vector<4x4xf32>
    %82 = vector.shape_cast %79 : vector<4x4xf32> to vector<1x1x1x1x4x4xf32>
    tpu.vector_store %arg5[%c0_107, %c1_108, %c0_109, %c0_110, %c0_111, %c0_112], %82 {strides = array<i32>} : memref<1x4x4x4x4x4xf32, #tpu.memory_space<vmem>>, vector<1x1x1x1x4x4xf32>,
    %83 = vector.extract_strided_slice %78 {offsets = [0, 4], sizes = [4, 4], strides = [1, 1]} : vector<4x16xf32> to vector<4x4xf32>
    %c0_113 = arith.constant 0 : index
    %c1_114 = arith.constant 1 : index
    %c0_115 = arith.constant 0 : index
    %c1_116 = arith.constant 1 : index
    %c0_117 = arith.constant 0 : index
    %c0_118 = arith.constant 0 : index
    %84 = vector.load %arg5[%c0_113, %c1_114, %c0_115, %c1_116, %c0_117, %c0_118] : memref<1x4x4x4x4x4xf32, #tpu.memory_space<vmem>>, vector<1x1x1x1x4x4xf32>
    %85 = vector.shape_cast %84 : vector<1x1x1x1x4x4xf32> to vector<4x4xf32>
    %86 = vector.shape_cast %83 : vector<4x4xf32> to vector<1x1x1x1x4x4xf32>
    tpu.vector_store %arg5[%c0_113, %c1_114, %c0_115, %c1_116, %c0_117, %c0_118], %86 {strides = array<i32>} : memref<1x4x4x4x4x4xf32, #tpu.memory_space<vmem>>, vector<1x1x1x1x4x4xf32>,
    %87 = vector.extract_strided_slice %78 {offsets = [0, 8], sizes = [4, 4], strides = [1, 1]} : vector<4x16xf32> to vector<4x4xf32>
    %c0_119 = arith.constant 0 : index
    %c1_120 = arith.constant 1 : index
    %c0_121 = arith.constant 0 : index
    %c2_122 = arith.constant 2 : index
    %c0_123 = arith.constant 0 : index
    %c0_124 = arith.constant 0 : index
    %88 = vector.load %arg5[%c0_119, %c1_120, %c0_121, %c2_122, %c0_123, %c0_124] : memref<1x4x4x4x4x4xf32, #tpu.memory_space<vmem>>, vector<1x1x1x1x4x4xf32>
    %89 = vector.shape_cast %88 : vector<1x1x1x1x4x4xf32> to vector<4x4xf32>
    %90 = vector.shape_cast %87 : vector<4x4xf32> to vector<1x1x1x1x4x4xf32>
    tpu.vector_store %arg5[%c0_119, %c1_120, %c0_121, %c2_122, %c0_123, %c0_124], %90 {strides = array<i32>} : memref<1x4x4x4x4x4xf32, #tpu.memory_space<vmem>>, vector<1x1x1x1x4x4xf32>,
    %91 = vector.extract_strided_slice %78 {offsets = [0, 12], sizes = [4, 4], strides = [1, 1]} : vector<4x16xf32> to vector<4x4xf32>
    %c0_125 = arith.constant 0 : index
    %c1_126 = arith.constant 1 : index
    %c0_127 = arith.constant 0 : index
    %c3_128 = arith.constant 3 : index
    %c0_129 = arith.constant 0 : index
    %c0_130 = arith.constant 0 : index
    %92 = vector.load %arg5[%c0_125, %c1_126, %c0_127, %c3_128, %c0_129, %c0_130] : memref<1x4x4x4x4x4xf32, #tpu.memory_space<vmem>>, vector<1x1x1x1x4x4xf32>
    %93 = vector.shape_cast %92 : vector<1x1x1x1x4x4xf32> to vector<4x4xf32>
    %94 = vector.shape_cast %91 : vector<4x4xf32> to vector<1x1x1x1x4x4xf32>
    tpu.vector_store %arg5[%c0_125, %c1_126, %c0_127, %c3_128, %c0_129, %c0_130], %94 {strides = array<i32>} : memref<1x4x4x4x4x4xf32, #tpu.memory_space<vmem>>, vector<1x1x1x1x4x4xf32>,
    %95 = vector.extract_strided_slice %77 {offsets = [4, 0], sizes = [4, 16], strides = [1, 1]} : vector<16x16xf32> to vector<4x16xf32>
    %96 = vector.extract_strided_slice %95 {offsets = [0, 0], sizes = [4, 4], strides = [1, 1]} : vector<4x16xf32> to vector<4x4xf32>
    %c0_131 = arith.constant 0 : index
    %c1_132 = arith.constant 1 : index
    %c1_133 = arith.constant 1 : index
    %c0_134 = arith.constant 0 : index
    %c0_135 = arith.constant 0 : index
    %c0_136 = arith.constant 0 : index
    %97 = vector.load %arg5[%c0_131, %c1_132, %c1_133, %c0_134, %c0_135, %c0_136] : memref<1x4x4x4x4x4xf32, #tpu.memory_space<vmem>>, vector<1x1x1x1x4x4xf32>
    %98 = vector.shape_cast %97 : vector<1x1x1x1x4x4xf32> to vector<4x4xf32>
    %99 = vector.shape_cast %96 : vector<4x4xf32> to vector<1x1x1x1x4x4xf32>
    tpu.vector_store %arg5[%c0_131, %c1_132, %c1_133, %c0_134, %c0_135, %c0_136], %99 {strides = array<i32>} : memref<1x4x4x4x4x4xf32, #tpu.memory_space<vmem>>, vector<1x1x1x1x4x4xf32>,
    %100 = vector.extract_strided_slice %95 {offsets = [0, 4], sizes = [4, 4], strides = [1, 1]} : vector<4x16xf32> to vector<4x4xf32>
    %c0_137 = arith.constant 0 : index
    %c1_138 = arith.constant 1 : index
    %c1_139 = arith.constant 1 : index
    %c1_140 = arith.constant 1 : index
    %c0_141 = arith.constant 0 : index
    %c0_142 = arith.constant 0 : index
    %101 = vector.load %arg5[%c0_137, %c1_138, %c1_139, %c1_140, %c0_141, %c0_142] : memref<1x4x4x4x4x4xf32, #tpu.memory_space<vmem>>, vector<1x1x1x1x4x4xf32>
    %102 = vector.shape_cast %101 : vector<1x1x1x1x4x4xf32> to vector<4x4xf32>
    %103 = vector.shape_cast %100 : vector<4x4xf32> to vector<1x1x1x1x4x4xf32>
    tpu.vector_store %arg5[%c0_137, %c1_138, %c1_139, %c1_140, %c0_141, %c0_142], %103 {strides = array<i32>} : memref<1x4x4x4x4x4xf32, #tpu.memory_space<vmem>>, vector<1x1x1x1x4x4xf32>,
    %104 = vector.extract_strided_slice %95 {offsets = [0, 8], sizes = [4, 4], strides = [1, 1]} : vector<4x16xf32> to vector<4x4xf32>
    %c0_143 = arith.constant 0 : index
    %c1_144 = arith.constant 1 : index
    %c1_145 = arith.constant 1 : index
    %c2_146 = arith.constant 2 : index
    %c0_147 = arith.constant 0 : index
    %c0_148 = arith.constant 0 : index
    %105 = vector.load %arg5[%c0_143, %c1_144, %c1_145, %c2_146, %c0_147, %c0_148] : memref<1x4x4x4x4x4xf32, #tpu.memory_space<vmem>>, vector<1x1x1x1x4x4xf32>
    %106 = vector.shape_cast %105 : vector<1x1x1x1x4x4xf32> to vector<4x4xf32>
    %107 = vector.shape_cast %104 : vector<4x4xf32> to vector<1x1x1x1x4x4xf32>
    tpu.vector_store %arg5[%c0_143, %c1_144, %c1_145, %c2_146, %c0_147, %c0_148], %107 {strides = array<i32>} : memref<1x4x4x4x4x4xf32, #tpu.memory_space<vmem>>, vector<1x1x1x1x4x4xf32>,
    %108 = vector.extract_strided_slice %95 {offsets = [0, 12], sizes = [4, 4], strides = [1, 1]} : vector<4x16xf32> to vector<4x4xf32>
    %c0_149 = arith.constant 0 : index
    %c1_150 = arith.constant 1 : index
    %c1_151 = arith.constant 1 : index
    %c3_152 = arith.constant 3 : index
    %c0_153 = arith.constant 0 : index
    %c0_154 = arith.constant 0 : index
    %109 = vector.load %arg5[%c0_149, %c1_150, %c1_151, %c3_152, %c0_153, %c0_154] : memref<1x4x4x4x4x4xf32, #tpu.memory_space<vmem>>, vector<1x1x1x1x4x4xf32>
    %110 = vector.shape_cast %109 : vector<1x1x1x1x4x4xf32> to vector<4x4xf32>
    %111 = vector.shape_cast %108 : vector<4x4xf32> to vector<1x1x1x1x4x4xf32>
    tpu.vector_store %arg5[%c0_149, %c1_150, %c1_151, %c3_152, %c0_153, %c0_154], %111 {strides = array<i32>} : memref<1x4x4x4x4x4xf32, #tpu.memory_space<vmem>>, vector<1x1x1x1x4x4xf32>,
    %112 = vector.extract_strided_slice %77 {offsets = [8, 0], sizes = [4, 16], strides = [1, 1]} : vector<16x16xf32> to vector<4x16xf32>
    %113 = vector.extract_strided_slice %112 {offsets = [0, 0], sizes = [4, 4], strides = [1, 1]} : vector<4x16xf32> to vector<4x4xf32>
    %c0_155 = arith.constant 0 : index
    %c1_156 = arith.constant 1 : index
    %c2_157 = arith.constant 2 : index
    %c0_158 = arith.constant 0 : index
    %c0_159 = arith.constant 0 : index
    %c0_160 = arith.constant 0 : index
    %114 = vector.load %arg5[%c0_155, %c1_156, %c2_157, %c0_158, %c0_159, %c0_160] : memref<1x4x4x4x4x4xf32, #tpu.memory_space<vmem>>, vector<1x1x1x1x4x4xf32>
    %115 = vector.shape_cast %114 : vector<1x1x1x1x4x4xf32> to vector<4x4xf32>
    %116 = vector.shape_cast %113 : vector<4x4xf32> to vector<1x1x1x1x4x4xf32>
    tpu.vector_store %arg5[%c0_155, %c1_156, %c2_157, %c0_158, %c0_159, %c0_160], %116 {strides = array<i32>} : memref<1x4x4x4x4x4xf32, #tpu.memory_space<vmem>>, vector<1x1x1x1x4x4xf32>,
    %117 = vector.extract_strided_slice %112 {offsets = [0, 4], sizes = [4, 4], strides = [1, 1]} : vector<4x16xf32> to vector<4x4xf32>
    %c0_161 = arith.constant 0 : index
    %c1_162 = arith.constant 1 : index
    %c2_163 = arith.constant 2 : index
    %c1_164 = arith.constant 1 : index
    %c0_165 = arith.constant 0 : index
    %c0_166 = arith.constant 0 : index
    %118 = vector.load %arg5[%c0_161, %c1_162, %c2_163, %c1_164, %c0_165, %c0_166] : memref<1x4x4x4x4x4xf32, #tpu.memory_space<vmem>>, vector<1x1x1x1x4x4xf32>
    %119 = vector.shape_cast %118 : vector<1x1x1x1x4x4xf32> to vector<4x4xf32>
    %120 = vector.shape_cast %117 : vector<4x4xf32> to vector<1x1x1x1x4x4xf32>
    tpu.vector_store %arg5[%c0_161, %c1_162, %c2_163, %c1_164, %c0_165, %c0_166], %120 {strides = array<i32>} : memref<1x4x4x4x4x4xf32, #tpu.memory_space<vmem>>, vector<1x1x1x1x4x4xf32>,
    %121 = vector.extract_strided_slice %112 {offsets = [0, 8], sizes = [4, 4], strides = [1, 1]} : vector<4x16xf32> to vector<4x4xf32>
    %c0_167 = arith.constant 0 : index
    %c1_168 = arith.constant 1 : index
    %c2_169 = arith.constant 2 : index
    %c2_170 = arith.constant 2 : index
    %c0_171 = arith.constant 0 : index
    %c0_172 = arith.constant 0 : index
    %122 = vector.load %arg5[%c0_167, %c1_168, %c2_169, %c2_170, %c0_171, %c0_172] : memref<1x4x4x4x4x4xf32, #tpu.memory_space<vmem>>, vector<1x1x1x1x4x4xf32>
    %123 = vector.shape_cast %122 : vector<1x1x1x1x4x4xf32> to vector<4x4xf32>
    %124 = vector.shape_cast %121 : vector<4x4xf32> to vector<1x1x1x1x4x4xf32>
    tpu.vector_store %arg5[%c0_167, %c1_168, %c2_169, %c2_170, %c0_171, %c0_172], %124 {strides = array<i32>} : memref<1x4x4x4x4x4xf32, #tpu.memory_space<vmem>>, vector<1x1x1x1x4x4xf32>,
    %125 = vector.extract_strided_slice %112 {offsets = [0, 12], sizes = [4, 4], strides = [1, 1]} : vector<4x16xf32> to vector<4x4xf32>
    %c0_173 = arith.constant 0 : index
    %c1_174 = arith.constant 1 : index
    %c2_175 = arith.constant 2 : index
    %c3_176 = arith.constant 3 : index
    %c0_177 = arith.constant 0 : index
    %c0_178 = arith.constant 0 : index
    %126 = vector.load %arg5[%c0_173, %c1_174, %c2_175, %c3_176, %c0_177, %c0_178] : memref<1x4x4x4x4x4xf32, #tpu.memory_space<vmem>>, vector<1x1x1x1x4x4xf32>
    %127 = vector.shape_cast %126 : vector<1x1x1x1x4x4xf32> to vector<4x4xf32>
    %128 = vector.shape_cast %125 : vector<4x4xf32> to vector<1x1x1x1x4x4xf32>
    tpu.vector_store %arg5[%c0_173, %c1_174, %c2_175, %c3_176, %c0_177, %c0_178], %128 {strides = array<i32>} : memref<1x4x4x4x4x4xf32, #tpu.memory_space<vmem>>, vector<1x1x1x1x4x4xf32>,
    %129 = vector.extract_strided_slice %77 {offsets = [12, 0], sizes = [4, 16], strides = [1, 1]} : vector<16x16xf32> to vector<4x16xf32>
    %130 = vector.extract_strided_slice %129 {offsets = [0, 0], sizes = [4, 4], strides = [1, 1]} : vector<4x16xf32> to vector<4x4xf32>
    %c0_179 = arith.constant 0 : index
    %c1_180 = arith.constant 1 : index
    %c3_181 = arith.constant 3 : index
    %c0_182 = arith.constant 0 : index
    %c0_183 = arith.constant 0 : index
    %c0_184 = arith.constant 0 : index
    %131 = vector.load %arg5[%c0_179, %c1_180, %c3_181, %c0_182, %c0_183, %c0_184] : memref<1x4x4x4x4x4xf32, #tpu.memory_space<vmem>>, vector<1x1x1x1x4x4xf32>
    %132 = vector.shape_cast %131 : vector<1x1x1x1x4x4xf32> to vector<4x4xf32>
    %133 = vector.shape_cast %130 : vector<4x4xf32> to vector<1x1x1x1x4x4xf32>
    tpu.vector_store %arg5[%c0_179, %c1_180, %c3_181, %c0_182, %c0_183, %c0_184], %133 {strides = array<i32>} : memref<1x4x4x4x4x4xf32, #tpu.memory_space<vmem>>, vector<1x1x1x1x4x4xf32>,
    %134 = vector.extract_strided_slice %129 {offsets = [0, 4], sizes = [4, 4], strides = [1, 1]} : vector<4x16xf32> to vector<4x4xf32>
    %c0_185 = arith.constant 0 : index
    %c1_186 = arith.constant 1 : index
    %c3_187 = arith.constant 3 : index
    %c1_188 = arith.constant 1 : index
    %c0_189 = arith.constant 0 : index
    %c0_190 = arith.constant 0 : index
    %135 = vector.load %arg5[%c0_185, %c1_186, %c3_187, %c1_188, %c0_189, %c0_190] : memref<1x4x4x4x4x4xf32, #tpu.memory_space<vmem>>, vector<1x1x1x1x4x4xf32>
    %136 = vector.shape_cast %135 : vector<1x1x1x1x4x4xf32> to vector<4x4xf32>
    %137 = vector.shape_cast %134 : vector<4x4xf32> to vector<1x1x1x1x4x4xf32>
    tpu.vector_store %arg5[%c0_185, %c1_186, %c3_187, %c1_188, %c0_189, %c0_190], %137 {strides = array<i32>} : memref<1x4x4x4x4x4xf32, #tpu.memory_space<vmem>>, vector<1x1x1x1x4x4xf32>,
    %138 = vector.extract_strided_slice %129 {offsets = [0, 8], sizes = [4, 4], strides = [1, 1]} : vector<4x16xf32> to vector<4x4xf32>
    %c0_191 = arith.constant 0 : index
    %c1_192 = arith.constant 1 : index
    %c3_193 = arith.constant 3 : index
    %c2_194 = arith.constant 2 : index
    %c0_195 = arith.constant 0 : index
    %c0_196 = arith.constant 0 : index
    %139 = vector.load %arg5[%c0_191, %c1_192, %c3_193, %c2_194, %c0_195, %c0_196] : memref<1x4x4x4x4x4xf32, #tpu.memory_space<vmem>>, vector<1x1x1x1x4x4xf32>
    %140 = vector.shape_cast %139 : vector<1x1x1x1x4x4xf32> to vector<4x4xf32>
    %141 = vector.shape_cast %138 : vector<4x4xf32> to vector<1x1x1x1x4x4xf32>
    tpu.vector_store %arg5[%c0_191, %c1_192, %c3_193, %c2_194, %c0_195, %c0_196], %141 {strides = array<i32>} : memref<1x4x4x4x4x4xf32, #tpu.memory_space<vmem>>, vector<1x1x1x1x4x4xf32>,
    %142 = vector.extract_strided_slice %129 {offsets = [0, 12], sizes = [4, 4], strides = [1, 1]} : vector<4x16xf32> to vector<4x4xf32>
    %c0_197 = arith.constant 0 : index
    %c1_198 = arith.constant 1 : index
    %c3_199 = arith.constant 3 : index
    %c3_200 = arith.constant 3 : index
    %c0_201 = arith.constant 0 : index
    %c0_202 = arith.constant 0 : index
    %143 = vector.load %arg5[%c0_197, %c1_198, %c3_199, %c3_200, %c0_201, %c0_202] : memref<1x4x4x4x4x4xf32, #tpu.memory_space<vmem>>, vector<1x1x1x1x4x4xf32>
    %144 = vector.shape_cast %143 : vector<1x1x1x1x4x4xf32> to vector<4x4xf32>
    %145 = vector.shape_cast %142 : vector<4x4xf32> to vector<1x1x1x1x4x4xf32>
    tpu.vector_store %arg5[%c0_197, %c1_198, %c3_199, %c3_200, %c0_201, %c0_202], %145 {strides = array<i32>} : memref<1x4x4x4x4x4xf32, #tpu.memory_space<vmem>>, vector<1x1x1x1x4x4xf32>,
    %c0_203 = arith.constant 0 : index
    %c2_204 = arith.constant 2 : index
    %c0_205 = arith.constant 0 : index
    %c0_206 = arith.constant 0 : index
    %146 = vector.load %arg4[%c0_203, %c2_204, %c0_205, %c0_206] : memref<1x4x16x16xf32, #tpu.memory_space<vmem>>, vector<1x1x16x16xf32>
    %147 = vector.shape_cast %146 : vector<1x1x16x16xf32> to vector<16x16xf32>
    %cst_207 = arith.constant dense<0.000000e+00> : vector<16x16xf32>
    %148 = tpu.matmul %0, %147, %cst_207 {dimension_numbers = #tpu.dot_dimension_numbers<[1], [0], [0], [1], [0, 0, 1, 1], [], []>, precision = #tpu.contract_precision<fp32>} : vector<16x16xf32>, vector<16x16xf32>, vector<16x16xf32> -> vector<16x16xf32>
    %cst_208 = arith.constant dense<0.000000e+00> : vector<16x16xf32>
    %149 = tpu.matmul %148, %1, %cst_208 {dimension_numbers = #tpu.dot_dimension_numbers<[1], [0], [0], [1], [0, 0, 1, 1], [], []>, precision = #tpu.contract_precision<fp32>} : vector<16x16xf32>, vector<16x16xf32>, vector<16x16xf32> -> vector<16x16xf32>
    %150 = vector.extract_strided_slice %149 {offsets = [0, 0], sizes = [4, 16], strides = [1, 1]} : vector<16x16xf32> to vector<4x16xf32>
    %151 = vector.extract_strided_slice %150 {offsets = [0, 0], sizes = [4, 4], strides = [1, 1]} : vector<4x16xf32> to vector<4x4xf32>
    %c0_209 = arith.constant 0 : index
    %c2_210 = arith.constant 2 : index
    %c0_211 = arith.constant 0 : index
    %c0_212 = arith.constant 0 : index
    %c0_213 = arith.constant 0 : index
    %c0_214 = arith.constant 0 : index
    %152 = vector.load %arg5[%c0_209, %c2_210, %c0_211, %c0_212, %c0_213, %c0_214] : memref<1x4x4x4x4x4xf32, #tpu.memory_space<vmem>>, vector<1x1x1x1x4x4xf32>
    %153 = vector.shape_cast %152 : vector<1x1x1x1x4x4xf32> to vector<4x4xf32>
    %154 = vector.shape_cast %151 : vector<4x4xf32> to vector<1x1x1x1x4x4xf32>
    tpu.vector_store %arg5[%c0_209, %c2_210, %c0_211, %c0_212, %c0_213, %c0_214], %154 {strides = array<i32>} : memref<1x4x4x4x4x4xf32, #tpu.memory_space<vmem>>, vector<1x1x1x1x4x4xf32>,
    %155 = vector.extract_strided_slice %150 {offsets = [0, 4], sizes = [4, 4], strides = [1, 1]} : vector<4x16xf32> to vector<4x4xf32>
    %c0_215 = arith.constant 0 : index
    %c2_216 = arith.constant 2 : index
    %c0_217 = arith.constant 0 : index
    %c1_218 = arith.constant 1 : index
    %c0_219 = arith.constant 0 : index
    %c0_220 = arith.constant 0 : index
    %156 = vector.load %arg5[%c0_215, %c2_216, %c0_217, %c1_218, %c0_219, %c0_220] : memref<1x4x4x4x4x4xf32, #tpu.memory_space<vmem>>, vector<1x1x1x1x4x4xf32>
    %157 = vector.shape_cast %156 : vector<1x1x1x1x4x4xf32> to vector<4x4xf32>
    %158 = vector.shape_cast %155 : vector<4x4xf32> to vector<1x1x1x1x4x4xf32>
    tpu.vector_store %arg5[%c0_215, %c2_216, %c0_217, %c1_218, %c0_219, %c0_220], %158 {strides = array<i32>} : memref<1x4x4x4x4x4xf32, #tpu.memory_space<vmem>>, vector<1x1x1x1x4x4xf32>,
    %159 = vector.extract_strided_slice %150 {offsets = [0, 8], sizes = [4, 4], strides = [1, 1]} : vector<4x16xf32> to vector<4x4xf32>
    %c0_221 = arith.constant 0 : index
    %c2_222 = arith.constant 2 : index
    %c0_223 = arith.constant 0 : index
    %c2_224 = arith.constant 2 : index
    %c0_225 = arith.constant 0 : index
    %c0_226 = arith.constant 0 : index
    %160 = vector.load %arg5[%c0_221, %c2_222, %c0_223, %c2_224, %c0_225, %c0_226] : memref<1x4x4x4x4x4xf32, #tpu.memory_space<vmem>>, vector<1x1x1x1x4x4xf32>
    %161 = vector.shape_cast %160 : vector<1x1x1x1x4x4xf32> to vector<4x4xf32>
    %162 = vector.shape_cast %159 : vector<4x4xf32> to vector<1x1x1x1x4x4xf32>
    tpu.vector_store %arg5[%c0_221, %c2_222, %c0_223, %c2_224, %c0_225, %c0_226], %162 {strides = array<i32>} : memref<1x4x4x4x4x4xf32, #tpu.memory_space<vmem>>, vector<1x1x1x1x4x4xf32>,
    %163 = vector.extract_strided_slice %150 {offsets = [0, 12], sizes = [4, 4], strides = [1, 1]} : vector<4x16xf32> to vector<4x4xf32>
    %c0_227 = arith.constant 0 : index
    %c2_228 = arith.constant 2 : index
    %c0_229 = arith.constant 0 : index
    %c3_230 = arith.constant 3 : index
    %c0_231 = arith.constant 0 : index
    %c0_232 = arith.constant 0 : index
    %164 = vector.load %arg5[%c0_227, %c2_228, %c0_229, %c3_230, %c0_231, %c0_232] : memref<1x4x4x4x4x4xf32, #tpu.memory_space<vmem>>, vector<1x1x1x1x4x4xf32>
    %165 = vector.shape_cast %164 : vector<1x1x1x1x4x4xf32> to vector<4x4xf32>
    %166 = vector.shape_cast %163 : vector<4x4xf32> to vector<1x1x1x1x4x4xf32>
    tpu.vector_store %arg5[%c0_227, %c2_228, %c0_229, %c3_230, %c0_231, %c0_232], %166 {strides = array<i32>} : memref<1x4x4x4x4x4xf32, #tpu.memory_space<vmem>>, vector<1x1x1x1x4x4xf32>,
    %167 = vector.extract_strided_slice %149 {offsets = [4, 0], sizes = [4, 16], strides = [1, 1]} : vector<16x16xf32> to vector<4x16xf32>
    %168 = vector.extract_strided_slice %167 {offsets = [0, 0], sizes = [4, 4], strides = [1, 1]} : vector<4x16xf32> to vector<4x4xf32>
    %c0_233 = arith.constant 0 : index
    %c2_234 = arith.constant 2 : index
    %c1_235 = arith.constant 1 : index
    %c0_236 = arith.constant 0 : index
    %c0_237 = arith.constant 0 : index
    %c0_238 = arith.constant 0 : index
    %169 = vector.load %arg5[%c0_233, %c2_234, %c1_235, %c0_236, %c0_237, %c0_238] : memref<1x4x4x4x4x4xf32, #tpu.memory_space<vmem>>, vector<1x1x1x1x4x4xf32>
    %170 = vector.shape_cast %169 : vector<1x1x1x1x4x4xf32> to vector<4x4xf32>
    %171 = vector.shape_cast %168 : vector<4x4xf32> to vector<1x1x1x1x4x4xf32>
    tpu.vector_store %arg5[%c0_233, %c2_234, %c1_235, %c0_236, %c0_237, %c0_238], %171 {strides = array<i32>} : memref<1x4x4x4x4x4xf32, #tpu.memory_space<vmem>>, vector<1x1x1x1x4x4xf32>,
    %172 = vector.extract_strided_slice %167 {offsets = [0, 4], sizes = [4, 4], strides = [1, 1]} : vector<4x16xf32> to vector<4x4xf32>
    %c0_239 = arith.constant 0 : index
    %c2_240 = arith.constant 2 : index
    %c1_241 = arith.constant 1 : index
    %c1_242 = arith.constant 1 : index
    %c0_243 = arith.constant 0 : index
    %c0_244 = arith.constant 0 : index
    %173 = vector.load %arg5[%c0_239, %c2_240, %c1_241, %c1_242, %c0_243, %c0_244] : memref<1x4x4x4x4x4xf32, #tpu.memory_space<vmem>>, vector<1x1x1x1x4x4xf32>
    %174 = vector.shape_cast %173 : vector<1x1x1x1x4x4xf32> to vector<4x4xf32>
    %175 = vector.shape_cast %172 : vector<4x4xf32> to vector<1x1x1x1x4x4xf32>
    tpu.vector_store %arg5[%c0_239, %c2_240, %c1_241, %c1_242, %c0_243, %c0_244], %175 {strides = array<i32>} : memref<1x4x4x4x4x4xf32, #tpu.memory_space<vmem>>, vector<1x1x1x1x4x4xf32>,
    %176 = vector.extract_strided_slice %167 {offsets = [0, 8], sizes = [4, 4], strides = [1, 1]} : vector<4x16xf32> to vector<4x4xf32>
    %c0_245 = arith.constant 0 : index
    %c2_246 = arith.constant 2 : index
    %c1_247 = arith.constant 1 : index
    %c2_248 = arith.constant 2 : index
    %c0_249 = arith.constant 0 : index
    %c0_250 = arith.constant 0 : index
    %177 = vector.load %arg5[%c0_245, %c2_246, %c1_247, %c2_248, %c0_249, %c0_250] : memref<1x4x4x4x4x4xf32, #tpu.memory_space<vmem>>, vector<1x1x1x1x4x4xf32>
    %178 = vector.shape_cast %177 : vector<1x1x1x1x4x4xf32> to vector<4x4xf32>
    %179 = vector.shape_cast %176 : vector<4x4xf32> to vector<1x1x1x1x4x4xf32>
    tpu.vector_store %arg5[%c0_245, %c2_246, %c1_247, %c2_248, %c0_249, %c0_250], %179 {strides = array<i32>} : memref<1x4x4x4x4x4xf32, #tpu.memory_space<vmem>>, vector<1x1x1x1x4x4xf32>,
    %180 = vector.extract_strided_slice %167 {offsets = [0, 12], sizes = [4, 4], strides = [1, 1]} : vector<4x16xf32> to vector<4x4xf32>
    %c0_251 = arith.constant 0 : index
    %c2_252 = arith.constant 2 : index
    %c1_253 = arith.constant 1 : index
    %c3_254 = arith.constant 3 : index
    %c0_255 = arith.constant 0 : index
    %c0_256 = arith.constant 0 : index
    %181 = vector.load %arg5[%c0_251, %c2_252, %c1_253, %c3_254, %c0_255, %c0_256] : memref<1x4x4x4x4x4xf32, #tpu.memory_space<vmem>>, vector<1x1x1x1x4x4xf32>
    %182 = vector.shape_cast %181 : vector<1x1x1x1x4x4xf32> to vector<4x4xf32>
    %183 = vector.shape_cast %180 : vector<4x4xf32> to vector<1x1x1x1x4x4xf32>
    tpu.vector_store %arg5[%c0_251, %c2_252, %c1_253, %c3_254, %c0_255, %c0_256], %183 {strides = array<i32>} : memref<1x4x4x4x4x4xf32, #tpu.memory_space<vmem>>, vector<1x1x1x1x4x4xf32>,
    %184 = vector.extract_strided_slice %149 {offsets = [8, 0], sizes = [4, 16], strides = [1, 1]} : vector<16x16xf32> to vector<4x16xf32>
    %185 = vector.extract_strided_slice %184 {offsets = [0, 0], sizes = [4, 4], strides = [1, 1]} : vector<4x16xf32> to vector<4x4xf32>
    %c0_257 = arith.constant 0 : index
    %c2_258 = arith.constant 2 : index
    %c2_259 = arith.constant 2 : index
    %c0_260 = arith.constant 0 : index
    %c0_261 = arith.constant 0 : index
    %c0_262 = arith.constant 0 : index
    %186 = vector.load %arg5[%c0_257, %c2_258, %c2_259, %c0_260, %c0_261, %c0_262] : memref<1x4x4x4x4x4xf32, #tpu.memory_space<vmem>>, vector<1x1x1x1x4x4xf32>
    %187 = vector.shape_cast %186 : vector<1x1x1x1x4x4xf32> to vector<4x4xf32>
    %188 = vector.shape_cast %185 : vector<4x4xf32> to vector<1x1x1x1x4x4xf32>
    tpu.vector_store %arg5[%c0_257, %c2_258, %c2_259, %c0_260, %c0_261, %c0_262], %188 {strides = array<i32>} : memref<1x4x4x4x4x4xf32, #tpu.memory_space<vmem>>, vector<1x1x1x1x4x4xf32>,
    %189 = vector.extract_strided_slice %184 {offsets = [0, 4], sizes = [4, 4], strides = [1, 1]} : vector<4x16xf32> to vector<4x4xf32>
    %c0_263 = arith.constant 0 : index
    %c2_264 = arith.constant 2 : index
    %c2_265 = arith.constant 2 : index
    %c1_266 = arith.constant 1 : index
    %c0_267 = arith.constant 0 : index
    %c0_268 = arith.constant 0 : index
    %190 = vector.load %arg5[%c0_263, %c2_264, %c2_265, %c1_266, %c0_267, %c0_268] : memref<1x4x4x4x4x4xf32, #tpu.memory_space<vmem>>, vector<1x1x1x1x4x4xf32>
    %191 = vector.shape_cast %190 : vector<1x1x1x1x4x4xf32> to vector<4x4xf32>
    %192 = vector.shape_cast %189 : vector<4x4xf32> to vector<1x1x1x1x4x4xf32>
    tpu.vector_store %arg5[%c0_263, %c2_264, %c2_265, %c1_266, %c0_267, %c0_268], %192 {strides = array<i32>} : memref<1x4x4x4x4x4xf32, #tpu.memory_space<vmem>>, vector<1x1x1x1x4x4xf32>,
    %193 = vector.extract_strided_slice %184 {offsets = [0, 8], sizes = [4, 4], strides = [1, 1]} : vector<4x16xf32> to vector<4x4xf32>
    %c0_269 = arith.constant 0 : index
    %c2_270 = arith.constant 2 : index
    %c2_271 = arith.constant 2 : index
    %c2_272 = arith.constant 2 : index
    %c0_273 = arith.constant 0 : index
    %c0_274 = arith.constant 0 : index
    %194 = vector.load %arg5[%c0_269, %c2_270, %c2_271, %c2_272, %c0_273, %c0_274] : memref<1x4x4x4x4x4xf32, #tpu.memory_space<vmem>>, vector<1x1x1x1x4x4xf32>
    %195 = vector.shape_cast %194 : vector<1x1x1x1x4x4xf32> to vector<4x4xf32>
    %196 = vector.shape_cast %193 : vector<4x4xf32> to vector<1x1x1x1x4x4xf32>
    tpu.vector_store %arg5[%c0_269, %c2_270, %c2_271, %c2_272, %c0_273, %c0_274], %196 {strides = array<i32>} : memref<1x4x4x4x4x4xf32, #tpu.memory_space<vmem>>, vector<1x1x1x1x4x4xf32>,
    %197 = vector.extract_strided_slice %184 {offsets = [0, 12], sizes = [4, 4], strides = [1, 1]} : vector<4x16xf32> to vector<4x4xf32>
    %c0_275 = arith.constant 0 : index
    %c2_276 = arith.constant 2 : index
    %c2_277 = arith.constant 2 : index
    %c3_278 = arith.constant 3 : index
    %c0_279 = arith.constant 0 : index
    %c0_280 = arith.constant 0 : index
    %198 = vector.load %arg5[%c0_275, %c2_276, %c2_277, %c3_278, %c0_279, %c0_280] : memref<1x4x4x4x4x4xf32, #tpu.memory_space<vmem>>, vector<1x1x1x1x4x4xf32>
    %199 = vector.shape_cast %198 : vector<1x1x1x1x4x4xf32> to vector<4x4xf32>
    %200 = vector.shape_cast %197 : vector<4x4xf32> to vector<1x1x1x1x4x4xf32>
    tpu.vector_store %arg5[%c0_275, %c2_276, %c2_277, %c3_278, %c0_279, %c0_280], %200 {strides = array<i32>} : memref<1x4x4x4x4x4xf32, #tpu.memory_space<vmem>>, vector<1x1x1x1x4x4xf32>,
    %201 = vector.extract_strided_slice %149 {offsets = [12, 0], sizes = [4, 16], strides = [1, 1]} : vector<16x16xf32> to vector<4x16xf32>
    %202 = vector.extract_strided_slice %201 {offsets = [0, 0], sizes = [4, 4], strides = [1, 1]} : vector<4x16xf32> to vector<4x4xf32>
    %c0_281 = arith.constant 0 : index
    %c2_282 = arith.constant 2 : index
    %c3_283 = arith.constant 3 : index
    %c0_284 = arith.constant 0 : index
    %c0_285 = arith.constant 0 : index
    %c0_286 = arith.constant 0 : index
    %203 = vector.load %arg5[%c0_281, %c2_282, %c3_283, %c0_284, %c0_285, %c0_286] : memref<1x4x4x4x4x4xf32, #tpu.memory_space<vmem>>, vector<1x1x1x1x4x4xf32>
    %204 = vector.shape_cast %203 : vector<1x1x1x1x4x4xf32> to vector<4x4xf32>
    %205 = vector.shape_cast %202 : vector<4x4xf32> to vector<1x1x1x1x4x4xf32>
    tpu.vector_store %arg5[%c0_281, %c2_282, %c3_283, %c0_284, %c0_285, %c0_286], %205 {strides = array<i32>} : memref<1x4x4x4x4x4xf32, #tpu.memory_space<vmem>>, vector<1x1x1x1x4x4xf32>,
    %206 = vector.extract_strided_slice %201 {offsets = [0, 4], sizes = [4, 4], strides = [1, 1]} : vector<4x16xf32> to vector<4x4xf32>
    %c0_287 = arith.constant 0 : index
    %c2_288 = arith.constant 2 : index
    %c3_289 = arith.constant 3 : index
    %c1_290 = arith.constant 1 : index
    %c0_291 = arith.constant 0 : index
    %c0_292 = arith.constant 0 : index
    %207 = vector.load %arg5[%c0_287, %c2_288, %c3_289, %c1_290, %c0_291, %c0_292] : memref<1x4x4x4x4x4xf32, #tpu.memory_space<vmem>>, vector<1x1x1x1x4x4xf32>
    %208 = vector.shape_cast %207 : vector<1x1x1x1x4x4xf32> to vector<4x4xf32>
    %209 = vector.shape_cast %206 : vector<4x4xf32> to vector<1x1x1x1x4x4xf32>
    tpu.vector_store %arg5[%c0_287, %c2_288, %c3_289, %c1_290, %c0_291, %c0_292], %209 {strides = array<i32>} : memref<1x4x4x4x4x4xf32, #tpu.memory_space<vmem>>, vector<1x1x1x1x4x4xf32>,
    %210 = vector.extract_strided_slice %201 {offsets = [0, 8], sizes = [4, 4], strides = [1, 1]} : vector<4x16xf32> to vector<4x4xf32>
    %c0_293 = arith.constant 0 : index
    %c2_294 = arith.constant 2 : index
    %c3_295 = arith.constant 3 : index
    %c2_296 = arith.constant 2 : index
    %c0_297 = arith.constant 0 : index
    %c0_298 = arith.constant 0 : index
    %211 = vector.load %arg5[%c0_293, %c2_294, %c3_295, %c2_296, %c0_297, %c0_298] : memref<1x4x4x4x4x4xf32, #tpu.memory_space<vmem>>, vector<1x1x1x1x4x4xf32>
    %212 = vector.shape_cast %211 : vector<1x1x1x1x4x4xf32> to vector<4x4xf32>
    %213 = vector.shape_cast %210 : vector<4x4xf32> to vector<1x1x1x1x4x4xf32>
    tpu.vector_store %arg5[%c0_293, %c2_294, %c3_295, %c2_296, %c0_297, %c0_298], %213 {strides = array<i32>} : memref<1x4x4x4x4x4xf32, #tpu.memory_space<vmem>>, vector<1x1x1x1x4x4xf32>,
    %214 = vector.extract_strided_slice %201 {offsets = [0, 12], sizes = [4, 4], strides = [1, 1]} : vector<4x16xf32> to vector<4x4xf32>
    %c0_299 = arith.constant 0 : index
    %c2_300 = arith.constant 2 : index
    %c3_301 = arith.constant 3 : index
    %c3_302 = arith.constant 3 : index
    %c0_303 = arith.constant 0 : index
    %c0_304 = arith.constant 0 : index
    %215 = vector.load %arg5[%c0_299, %c2_300, %c3_301, %c3_302, %c0_303, %c0_304] : memref<1x4x4x4x4x4xf32, #tpu.memory_space<vmem>>, vector<1x1x1x1x4x4xf32>
    %216 = vector.shape_cast %215 : vector<1x1x1x1x4x4xf32> to vector<4x4xf32>
    %217 = vector.shape_cast %214 : vector<4x4xf32> to vector<1x1x1x1x4x4xf32>
    tpu.vector_store %arg5[%c0_299, %c2_300, %c3_301, %c3_302, %c0_303, %c0_304], %217 {strides = array<i32>} : memref<1x4x4x4x4x4xf32, #tpu.memory_space<vmem>>, vector<1x1x1x1x4x4xf32>,
    %c0_305 = arith.constant 0 : index
    %c3_306 = arith.constant 3 : index
    %c0_307 = arith.constant 0 : index
    %c0_308 = arith.constant 0 : index
    %218 = vector.load %arg4[%c0_305, %c3_306, %c0_307, %c0_308] : memref<1x4x16x16xf32, #tpu.memory_space<vmem>>, vector<1x1x16x16xf32>
    %219 = vector.shape_cast %218 : vector<1x1x16x16xf32> to vector<16x16xf32>
    %cst_309 = arith.constant dense<0.000000e+00> : vector<16x16xf32>
    %220 = tpu.matmul %0, %219, %cst_309 {dimension_numbers = #tpu.dot_dimension_numbers<[1], [0], [0], [1], [0, 0, 1, 1], [], []>, precision = #tpu.contract_precision<fp32>} : vector<16x16xf32>, vector<16x16xf32>, vector<16x16xf32> -> vector<16x16xf32>
    %cst_310 = arith.constant dense<0.000000e+00> : vector<16x16xf32>
    %221 = tpu.matmul %220, %1, %cst_310 {dimension_numbers = #tpu.dot_dimension_numbers<[1], [0], [0], [1], [0, 0, 1, 1], [], []>, precision = #tpu.contract_precision<fp32>} : vector<16x16xf32>, vector<16x16xf32>, vector<16x16xf32> -> vector<16x16xf32>
    %222 = vector.extract_strided_slice %221 {offsets = [0, 0], sizes = [4, 16], strides = [1, 1]} : vector<16x16xf32> to vector<4x16xf32>
    %223 = vector.extract_strided_slice %222 {offsets = [0, 0], sizes = [4, 4], strides = [1, 1]} : vector<4x16xf32> to vector<4x4xf32>
    %c0_311 = arith.constant 0 : index
    %c3_312 = arith.constant 3 : index
    %c0_313 = arith.constant 0 : index
    %c0_314 = arith.constant 0 : index
    %c0_315 = arith.constant 0 : index
    %c0_316 = arith.constant 0 : index
    %224 = vector.load %arg5[%c0_311, %c3_312, %c0_313, %c0_314, %c0_315, %c0_316] : memref<1x4x4x4x4x4xf32, #tpu.memory_space<vmem>>, vector<1x1x1x1x4x4xf32>
    %225 = vector.shape_cast %224 : vector<1x1x1x1x4x4xf32> to vector<4x4xf32>
    %226 = vector.shape_cast %223 : vector<4x4xf32> to vector<1x1x1x1x4x4xf32>
    tpu.vector_store %arg5[%c0_311, %c3_312, %c0_313, %c0_314, %c0_315, %c0_316], %226 {strides = array<i32>} : memref<1x4x4x4x4x4xf32, #tpu.memory_space<vmem>>, vector<1x1x1x1x4x4xf32>,
    %227 = vector.extract_strided_slice %222 {offsets = [0, 4], sizes = [4, 4], strides = [1, 1]} : vector<4x16xf32> to vector<4x4xf32>
    %c0_317 = arith.constant 0 : index
    %c3_318 = arith.constant 3 : index
    %c0_319 = arith.constant 0 : index
    %c1_320 = arith.constant 1 : index
    %c0_321 = arith.constant 0 : index
    %c0_322 = arith.constant 0 : index
    %228 = vector.load %arg5[%c0_317, %c3_318, %c0_319, %c1_320, %c0_321, %c0_322] : memref<1x4x4x4x4x4xf32, #tpu.memory_space<vmem>>, vector<1x1x1x1x4x4xf32>
    %229 = vector.shape_cast %228 : vector<1x1x1x1x4x4xf32> to vector<4x4xf32>
    %230 = vector.shape_cast %227 : vector<4x4xf32> to vector<1x1x1x1x4x4xf32>
    tpu.vector_store %arg5[%c0_317, %c3_318, %c0_319, %c1_320, %c0_321, %c0_322], %230 {strides = array<i32>} : memref<1x4x4x4x4x4xf32, #tpu.memory_space<vmem>>, vector<1x1x1x1x4x4xf32>,
    %231 = vector.extract_strided_slice %222 {offsets = [0, 8], sizes = [4, 4], strides = [1, 1]} : vector<4x16xf32> to vector<4x4xf32>
    %c0_323 = arith.constant 0 : index
    %c3_324 = arith.constant 3 : index
    %c0_325 = arith.constant 0 : index
    %c2_326 = arith.constant 2 : index
    %c0_327 = arith.constant 0 : index
    %c0_328 = arith.constant 0 : index
    %232 = vector.load %arg5[%c0_323, %c3_324, %c0_325, %c2_326, %c0_327, %c0_328] : memref<1x4x4x4x4x4xf32, #tpu.memory_space<vmem>>, vector<1x1x1x1x4x4xf32>
    %233 = vector.shape_cast %232 : vector<1x1x1x1x4x4xf32> to vector<4x4xf32>
    %234 = vector.shape_cast %231 : vector<4x4xf32> to vector<1x1x1x1x4x4xf32>
    tpu.vector_store %arg5[%c0_323, %c3_324, %c0_325, %c2_326, %c0_327, %c0_328], %234 {strides = array<i32>} : memref<1x4x4x4x4x4xf32, #tpu.memory_space<vmem>>, vector<1x1x1x1x4x4xf32>,
    %235 = vector.extract_strided_slice %222 {offsets = [0, 12], sizes = [4, 4], strides = [1, 1]} : vector<4x16xf32> to vector<4x4xf32>
    %c0_329 = arith.constant 0 : index
    %c3_330 = arith.constant 3 : index
    %c0_331 = arith.constant 0 : index
    %c3_332 = arith.constant 3 : index
    %c0_333 = arith.constant 0 : index
    %c0_334 = arith.constant 0 : index
    %236 = vector.load %arg5[%c0_329, %c3_330, %c0_331, %c3_332, %c0_333, %c0_334] : memref<1x4x4x4x4x4xf32, #tpu.memory_space<vmem>>, vector<1x1x1x1x4x4xf32>
    %237 = vector.shape_cast %236 : vector<1x1x1x1x4x4xf32> to vector<4x4xf32>
    %238 = vector.shape_cast %235 : vector<4x4xf32> to vector<1x1x1x1x4x4xf32>
    tpu.vector_store %arg5[%c0_329, %c3_330, %c0_331, %c3_332, %c0_333, %c0_334], %238 {strides = array<i32>} : memref<1x4x4x4x4x4xf32, #tpu.memory_space<vmem>>, vector<1x1x1x1x4x4xf32>,
    %239 = vector.extract_strided_slice %221 {offsets = [4, 0], sizes = [4, 16], strides = [1, 1]} : vector<16x16xf32> to vector<4x16xf32>
    %240 = vector.extract_strided_slice %239 {offsets = [0, 0], sizes = [4, 4], strides = [1, 1]} : vector<4x16xf32> to vector<4x4xf32>
    %c0_335 = arith.constant 0 : index
    %c3_336 = arith.constant 3 : index
    %c1_337 = arith.constant 1 : index
    %c0_338 = arith.constant 0 : index
    %c0_339 = arith.constant 0 : index
    %c0_340 = arith.constant 0 : index
    %241 = vector.load %arg5[%c0_335, %c3_336, %c1_337, %c0_338, %c0_339, %c0_340] : memref<1x4x4x4x4x4xf32, #tpu.memory_space<vmem>>, vector<1x1x1x1x4x4xf32>
    %242 = vector.shape_cast %241 : vector<1x1x1x1x4x4xf32> to vector<4x4xf32>
    %243 = vector.shape_cast %240 : vector<4x4xf32> to vector<1x1x1x1x4x4xf32>
    tpu.vector_store %arg5[%c0_335, %c3_336, %c1_337, %c0_338, %c0_339, %c0_340], %243 {strides = array<i32>} : memref<1x4x4x4x4x4xf32, #tpu.memory_space<vmem>>, vector<1x1x1x1x4x4xf32>,
    %244 = vector.extract_strided_slice %239 {offsets = [0, 4], sizes = [4, 4], strides = [1, 1]} : vector<4x16xf32> to vector<4x4xf32>
    %c0_341 = arith.constant 0 : index
    %c3_342 = arith.constant 3 : index
    %c1_343 = arith.constant 1 : index
    %c1_344 = arith.constant 1 : index
    %c0_345 = arith.constant 0 : index
    %c0_346 = arith.constant 0 : index
    %245 = vector.load %arg5[%c0_341, %c3_342, %c1_343, %c1_344, %c0_345, %c0_346] : memref<1x4x4x4x4x4xf32, #tpu.memory_space<vmem>>, vector<1x1x1x1x4x4xf32>
    %246 = vector.shape_cast %245 : vector<1x1x1x1x4x4xf32> to vector<4x4xf32>
    %247 = vector.shape_cast %244 : vector<4x4xf32> to vector<1x1x1x1x4x4xf32>
    tpu.vector_store %arg5[%c0_341, %c3_342, %c1_343, %c1_344, %c0_345, %c0_346], %247 {strides = array<i32>} : memref<1x4x4x4x4x4xf32, #tpu.memory_space<vmem>>, vector<1x1x1x1x4x4xf32>,
    %248 = vector.extract_strided_slice %239 {offsets = [0, 8], sizes = [4, 4], strides = [1, 1]} : vector<4x16xf32> to vector<4x4xf32>
    %c0_347 = arith.constant 0 : index
    %c3_348 = arith.constant 3 : index
    %c1_349 = arith.constant 1 : index
    %c2_350 = arith.constant 2 : index
    %c0_351 = arith.constant 0 : index
    %c0_352 = arith.constant 0 : index
    %249 = vector.load %arg5[%c0_347, %c3_348, %c1_349, %c2_350, %c0_351, %c0_352] : memref<1x4x4x4x4x4xf32, #tpu.memory_space<vmem>>, vector<1x1x1x1x4x4xf32>
    %250 = vector.shape_cast %249 : vector<1x1x1x1x4x4xf32> to vector<4x4xf32>
    %251 = vector.shape_cast %248 : vector<4x4xf32> to vector<1x1x1x1x4x4xf32>
    tpu.vector_store %arg5[%c0_347, %c3_348, %c1_349, %c2_350, %c0_351, %c0_352], %251 {strides = array<i32>} : memref<1x4x4x4x4x4xf32, #tpu.memory_space<vmem>>, vector<1x1x1x1x4x4xf32>,
    %252 = vector.extract_strided_slice %239 {offsets = [0, 12], sizes = [4, 4], strides = [1, 1]} : vector<4x16xf32> to vector<4x4xf32>
    %c0_353 = arith.constant 0 : index
    %c3_354 = arith.constant 3 : index
    %c1_355 = arith.constant 1 : index
    %c3_356 = arith.constant 3 : index
    %c0_357 = arith.constant 0 : index
    %c0_358 = arith.constant 0 : index
    %253 = vector.load %arg5[%c0_353, %c3_354, %c1_355, %c3_356, %c0_357, %c0_358] : memref<1x4x4x4x4x4xf32, #tpu.memory_space<vmem>>, vector<1x1x1x1x4x4xf32>
    %254 = vector.shape_cast %253 : vector<1x1x1x1x4x4xf32> to vector<4x4xf32>
    %255 = vector.shape_cast %252 : vector<4x4xf32> to vector<1x1x1x1x4x4xf32>
    tpu.vector_store %arg5[%c0_353, %c3_354, %c1_355, %c3_356, %c0_357, %c0_358], %255 {strides = array<i32>} : memref<1x4x4x4x4x4xf32, #tpu.memory_space<vmem>>, vector<1x1x1x1x4x4xf32>,
    %256 = vector.extract_strided_slice %221 {offsets = [8, 0], sizes = [4, 16], strides = [1, 1]} : vector<16x16xf32> to vector<4x16xf32>
    %257 = vector.extract_strided_slice %256 {offsets = [0, 0], sizes = [4, 4], strides = [1, 1]} : vector<4x16xf32> to vector<4x4xf32>
    %c0_359 = arith.constant 0 : index
    %c3_360 = arith.constant 3 : index
    %c2_361 = arith.constant 2 : index
    %c0_362 = arith.constant 0 : index
    %c0_363 = arith.constant 0 : index
    %c0_364 = arith.constant 0 : index
    %258 = vector.load %arg5[%c0_359, %c3_360, %c2_361, %c0_362, %c0_363, %c0_364] : memref<1x4x4x4x4x4xf32, #tpu.memory_space<vmem>>, vector<1x1x1x1x4x4xf32>
    %259 = vector.shape_cast %258 : vector<1x1x1x1x4x4xf32> to vector<4x4xf32>
    %260 = vector.shape_cast %257 : vector<4x4xf32> to vector<1x1x1x1x4x4xf32>
    tpu.vector_store %arg5[%c0_359, %c3_360, %c2_361, %c0_362, %c0_363, %c0_364], %260 {strides = array<i32>} : memref<1x4x4x4x4x4xf32, #tpu.memory_space<vmem>>, vector<1x1x1x1x4x4xf32>,
    %261 = vector.extract_strided_slice %256 {offsets = [0, 4], sizes = [4, 4], strides = [1, 1]} : vector<4x16xf32> to vector<4x4xf32>
    %c0_365 = arith.constant 0 : index
    %c3_366 = arith.constant 3 : index
    %c2_367 = arith.constant 2 : index
    %c1_368 = arith.constant 1 : index
    %c0_369 = arith.constant 0 : index
    %c0_370 = arith.constant 0 : index
    %262 = vector.load %arg5[%c0_365, %c3_366, %c2_367, %c1_368, %c0_369, %c0_370] : memref<1x4x4x4x4x4xf32, #tpu.memory_space<vmem>>, vector<1x1x1x1x4x4xf32>
    %263 = vector.shape_cast %262 : vector<1x1x1x1x4x4xf32> to vector<4x4xf32>
    %264 = vector.shape_cast %261 : vector<4x4xf32> to vector<1x1x1x1x4x4xf32>
    tpu.vector_store %arg5[%c0_365, %c3_366, %c2_367, %c1_368, %c0_369, %c0_370], %264 {strides = array<i32>} : memref<1x4x4x4x4x4xf32, #tpu.memory_space<vmem>>, vector<1x1x1x1x4x4xf32>,
    %265 = vector.extract_strided_slice %256 {offsets = [0, 8], sizes = [4, 4], strides = [1, 1]} : vector<4x16xf32> to vector<4x4xf32>
    %c0_371 = arith.constant 0 : index
    %c3_372 = arith.constant 3 : index
    %c2_373 = arith.constant 2 : index
    %c2_374 = arith.constant 2 : index
    %c0_375 = arith.constant 0 : index
    %c0_376 = arith.constant 0 : index
    %266 = vector.load %arg5[%c0_371, %c3_372, %c2_373, %c2_374, %c0_375, %c0_376] : memref<1x4x4x4x4x4xf32, #tpu.memory_space<vmem>>, vector<1x1x1x1x4x4xf32>
    %267 = vector.shape_cast %266 : vector<1x1x1x1x4x4xf32> to vector<4x4xf32>
    %268 = vector.shape_cast %265 : vector<4x4xf32> to vector<1x1x1x1x4x4xf32>
    tpu.vector_store %arg5[%c0_371, %c3_372, %c2_373, %c2_374, %c0_375, %c0_376], %268 {strides = array<i32>} : memref<1x4x4x4x4x4xf32, #tpu.memory_space<vmem>>, vector<1x1x1x1x4x4xf32>,
    %269 = vector.extract_strided_slice %256 {offsets = [0, 12], sizes = [4, 4], strides = [1, 1]} : vector<4x16xf32> to vector<4x4xf32>
    %c0_377 = arith.constant 0 : index
    %c3_378 = arith.constant 3 : index
    %c2_379 = arith.constant 2 : index
    %c3_380 = arith.constant 3 : index
    %c0_381 = arith.constant 0 : index
    %c0_382 = arith.constant 0 : index
    %270 = vector.load %arg5[%c0_377, %c3_378, %c2_379, %c3_380, %c0_381, %c0_382] : memref<1x4x4x4x4x4xf32, #tpu.memory_space<vmem>>, vector<1x1x1x1x4x4xf32>
    %271 = vector.shape_cast %270 : vector<1x1x1x1x4x4xf32> to vector<4x4xf32>
    %272 = vector.shape_cast %269 : vector<4x4xf32> to vector<1x1x1x1x4x4xf32>
    tpu.vector_store %arg5[%c0_377, %c3_378, %c2_379, %c3_380, %c0_381, %c0_382], %272 {strides = array<i32>} : memref<1x4x4x4x4x4xf32, #tpu.memory_space<vmem>>, vector<1x1x1x1x4x4xf32>,
    %273 = vector.extract_strided_slice %221 {offsets = [12, 0], sizes = [4, 16], strides = [1, 1]} : vector<16x16xf32> to vector<4x16xf32>
    %274 = vector.extract_strided_slice %273 {offsets = [0, 0], sizes = [4, 4], strides = [1, 1]} : vector<4x16xf32> to vector<4x4xf32>
    %c0_383 = arith.constant 0 : index
    %c3_384 = arith.constant 3 : index
    %c3_385 = arith.constant 3 : index
    %c0_386 = arith.constant 0 : index
    %c0_387 = arith.constant 0 : index
    %c0_388 = arith.constant 0 : index
    %275 = vector.load %arg5[%c0_383, %c3_384, %c3_385, %c0_386, %c0_387, %c0_388] : memref<1x4x4x4x4x4xf32, #tpu.memory_space<vmem>>, vector<1x1x1x1x4x4xf32>
    %276 = vector.shape_cast %275 : vector<1x1x1x1x4x4xf32> to vector<4x4xf32>
    %277 = vector.shape_cast %274 : vector<4x4xf32> to vector<1x1x1x1x4x4xf32>
    tpu.vector_store %arg5[%c0_383, %c3_384, %c3_385, %c0_386, %c0_387, %c0_388], %277 {strides = array<i32>} : memref<1x4x4x4x4x4xf32, #tpu.memory_space<vmem>>, vector<1x1x1x1x4x4xf32>,
    %278 = vector.extract_strided_slice %273 {offsets = [0, 4], sizes = [4, 4], strides = [1, 1]} : vector<4x16xf32> to vector<4x4xf32>
    %c0_389 = arith.constant 0 : index
    %c3_390 = arith.constant 3 : index
    %c3_391 = arith.constant 3 : index
    %c1_392 = arith.constant 1 : index
    %c0_393 = arith.constant 0 : index
    %c0_394 = arith.constant 0 : index
    %279 = vector.load %arg5[%c0_389, %c3_390, %c3_391, %c1_392, %c0_393, %c0_394] : memref<1x4x4x4x4x4xf32, #tpu.memory_space<vmem>>, vector<1x1x1x1x4x4xf32>
    %280 = vector.shape_cast %279 : vector<1x1x1x1x4x4xf32> to vector<4x4xf32>
    %281 = vector.shape_cast %278 : vector<4x4xf32> to vector<1x1x1x1x4x4xf32>
    tpu.vector_store %arg5[%c0_389, %c3_390, %c3_391, %c1_392, %c0_393, %c0_394], %281 {strides = array<i32>} : memref<1x4x4x4x4x4xf32, #tpu.memory_space<vmem>>, vector<1x1x1x1x4x4xf32>,
    %282 = vector.extract_strided_slice %273 {offsets = [0, 8], sizes = [4, 4], strides = [1, 1]} : vector<4x16xf32> to vector<4x4xf32>
    %c0_395 = arith.constant 0 : index
    %c3_396 = arith.constant 3 : index
    %c3_397 = arith.constant 3 : index
    %c2_398 = arith.constant 2 : index
    %c0_399 = arith.constant 0 : index
    %c0_400 = arith.constant 0 : index
    %283 = vector.load %arg5[%c0_395, %c3_396, %c3_397, %c2_398, %c0_399, %c0_400] : memref<1x4x4x4x4x4xf32, #tpu.memory_space<vmem>>, vector<1x1x1x1x4x4xf32>
    %284 = vector.shape_cast %283 : vector<1x1x1x1x4x4xf32> to vector<4x4xf32>
    %285 = vector.shape_cast %282 : vector<4x4xf32> to vector<1x1x1x1x4x4xf32>
    tpu.vector_store %arg5[%c0_395, %c3_396, %c3_397, %c2_398, %c0_399, %c0_400], %285 {strides = array<i32>} : memref<1x4x4x4x4x4xf32, #tpu.memory_space<vmem>>, vector<1x1x1x1x4x4xf32>,
    %286 = vector.extract_strided_slice %273 {offsets = [0, 12], sizes = [4, 4], strides = [1, 1]} : vector<4x16xf32> to vector<4x4xf32>
    %c0_401 = arith.constant 0 : index
    %c3_402 = arith.constant 3 : index
    %c3_403 = arith.constant 3 : index
    %c3_404 = arith.constant 3 : index
    %c0_405 = arith.constant 0 : index
    %c0_406 = arith.constant 0 : index
    %287 = vector.load %arg5[%c0_401, %c3_402, %c3_403, %c3_404, %c0_405, %c0_406] : memref<1x4x4x4x4x4xf32, #tpu.memory_space<vmem>>, vector<1x1x1x1x4x4xf32>
    %288 = vector.shape_cast %287 : vector<1x1x1x1x4x4xf32> to vector<4x4xf32>
    %289 = vector.shape_cast %286 : vector<4x4xf32> to vector<1x1x1x1x4x4xf32>
    tpu.vector_store %arg5[%c0_401, %c3_402, %c3_403, %c3_404, %c0_405, %c0_406], %289 {strides = array<i32>} : memref<1x4x4x4x4x4xf32, #tpu.memory_space<vmem>>, vector<1x1x1x1x4x4xf32>,
    return
  }
  func.func @transform_0(%arg0: i32, %arg1: i32) -> (i32, i32) {
    %c0_i32 = arith.constant 0 : i32
    %c0_i32_0 = arith.constant 0 : i32
    %c0_i32_1 = arith.constant 0 : i32
    return %c0_i32, %c0_i32_0 : i32, i32
  }
  func.func @transform_1(%arg0: i32, %arg1: i32) -> (i32, i32) {
    %c0_i32 = arith.constant 0 : i32
    %c0_i32_0 = arith.constant 0 : i32
    %c0_i32_1 = arith.constant 0 : i32
    return %c0_i32, %c0_i32_0 : i32, i32
  }
  func.func @transform_2(%arg0: i32, %arg1: i32) -> (i32, i32, i32, i32) {
    %c0_i32 = arith.constant 0 : i32
    %c0_i32_0 = arith.constant 0 : i32
    %c0_i32_1 = arith.constant 0 : i32
    return %arg0, %arg1, %c0_i32, %c0_i32_0 : i32, i32, i32, i32
  }
  func.func @transform_3(%arg0: i32, %arg1: i32) -> (i32, i32, i32, i32, i32, i32) {
    %c0_i32 = arith.constant 0 : i32
    %c0_i32_0 = arith.constant 0 : i32
    %c0_i32_1 = arith.constant 0 : i32
    %c0_i32_2 = arith.constant 0 : i32
    %c0_i32_3 = arith.constant 0 : i32
    return %arg0, %arg1, %c0_i32, %c0_i32_0, %c0_i32_1, %c0_i32_2 : i32, i32, i32, i32, i32, i32
  }
}

</mosaic_0001>

<llo_original>
// kernel: tpu_custom_call.1
$region0: #{tpu_custom_call.1}
  #allocation0 [shape = 'u32[]', space=smem, size = 0x4, offset = 0x4, fixed_abs, tag = 'smem constant byte address 0x4 - core index']
  #allocation1 [shape = 'u32[144,128]{1,0:T(1,128)}', space=vmem, size = 0x12000, scoped, tag = 'internal scratch']
  %s0 = inlined_call_operand.hbm [shape: f32[16,16], index: 0, kind: input, shape index: {}]
  %s1 = inlined_call_operand.hbm [shape: f32[16,16], index: 1, kind: input, shape index: {}]
  %s2 = inlined_call_operand.hbm [shape: f32[2,4,16,16], index: 2, kind: input, shape index: {}]
  %s3 = inlined_call_operand.hbm [shape: f32[2,4,4,4,4,4], index: 3, kind: output, shape index: {}]
  %s4 = sld [smem:[#allocation0]]
  $region57: #{tpu_custom_call.1} parent=0
    _
  %s6 = ssub.s32 1, %s4
  %s7 = scalar_select 0, %s6, %s4
  $region1: #{tpu_custom_call.1} parent=0
    #allocation2 [shape = 'u8[8192]{0}', space=vmem, size = 0x2000, scoped, tag = 'input window, operand 0, single buffered']
    #allocation3 [shape = 's32[2]{0}', space=sflag, size = 0x8, scoped, tag = 'scoped memory for tpu_custom_call.1']
    #allocation4 [shape = 's32[2]{0}', space=sflag, size = 0x8, scoped, tag = 'scoped memory for tpu_custom_call.1']
    #allocation5 [shape = 'u8[8192]{0}', space=vmem, size = 0x2000, scoped, tag = 'input window, operand 1, single buffered']
    #allocation6 [shape = 's32[1]{0}', space=sflag, size = 0x4, scoped, tag = 'scoped memory for tpu_custom_call.1']
    #allocation7 [shape = 'u8[65536]{0}', space=vmem, size = 0x10000, scoped, tag = 'input window, operand 2']
    #allocation8 [shape = 'u8[262144]{0}', space=vmem, size = 0x40000, scoped, tag = 'output window, operand 0']
    %8 = vsyncpa [#allocation3], 0
    %9 = vsyncpa [#allocation6], 0
    %10 = vsyncpa [#allocation4], 0
    %s11 = scalar_lea.sflag [#allocation4], 1
    %12 = vsyncpa %s11, 0
    loop: start=0, step=1, limit=4
    $region2: #{tpu_custom_call.1} parent=1 // loop_pre_header
      _
    $region3: #{tpu_custom_call.1} parent=1 // loop_header
      %s14 = sphi 0, %s18
      %p15 = scmp.ge.s32.totalorder %s14, 4
      %s21 = sphi 0, %s33
      %s22 = sphi 0, %s29
      %s23 = sphi 0, %s21
      %s24 = sphi 0, %s22
      %s25 = sphi 0, %s23
      %s26 = sphi 0, %s24
      %s34 = sphi 0, %s34
      %s36 = sphi 0, %s34
      %s37 = sphi 0, %s36
      %s51 = sphi 0, %s37
      %s55 = sphi 0, %s55
      %s57 = sphi 0, %s55
      %s58 = sphi 0, %s57
      %s72 = sphi 0, %s58
      %s80 = sphi 0, %s82
      %s83 = sphi 0, %s80
      %s84 = sphi 0, %s83
      %s100 = sphi 0, %s84
      %s108 = sphi 0, %s110
      %s111 = sphi 0, %s108
      %s112 = sphi 0, %s111
      %s128 = sphi 0, %s112
    $region4: #{tpu_custom_call.1} parent=1 // loop_header_branch
      %17 = sbr.rel (%p15) target = $region8
    $region5: #{tpu_custom_call.1} parent=1 // loop_body
      %s19 = ssub.s32 %s14, 1
      %s20 = ssub.s32 %s14, 2
      %s27 = sadd.s32 1, %s22
      %p28 = scmp.ge.s32.totalorder %s27, 1
      %s29 = scalar_select %p28, 0, %s27
      %s30 = sadd.s32 1, %s21
      %s31 = scalar_select %p28, %s30, %s21
      %p32 = scmp.ge.s32.totalorder %s31, 2
      %s33 = scalar_select %p32, 0, %s31
      %s35 = sadd.s32 %s34, 1
      %p38 = scmp.eq.s32.totalorder %s14, 1
      %p39 = scmp.ne.s32.totalorder %s34, %s36
      %p40 = scmp.eq.s32.totalorder %s14, 0
      %p41 = por %p39, %p40
      %p42 = scmp.ne.s32.totalorder %s34, %s36
      %p43 = scmp.eq.s32.totalorder %s19, 1
      %p44 = por %p42, %p43
      %p45 = scmp.ne.s32.totalorder %s36, %s37
      %p46 = scmp.eq.s32.totalorder %s19, 0
      %p47 = por %p45, %p46
      %p48 = scmp.ne.s32.totalorder %s36, %s37
      %p49 = scmp.eq.s32.totalorder %s20, 1
      %p50 = por %p48, %p49
      %p52 = scmp.ne.s32.totalorder %s37, %s51
      %p53 = scmp.eq.s32.totalorder %s20, 0
      %p54 = por %p52, %p53
      %s56 = sadd.s32 %s55, 1
      %p59 = scmp.eq.s32.totalorder %s14, 1
      %p60 = scmp.ne.s32.totalorder %s55, %s57
      %p61 = scmp.eq.s32.totalorder %s14, 0
      %p62 = por %p60, %p61
      %p63 = scmp.ne.s32.totalorder %s55, %s57
      %p64 = scmp.eq.s32.totalorder %s19, 1
      %p65 = por %p63, %p64
      %p66 = scmp.ne.s32.totalorder %s57, %s58
      %p67 = scmp.eq.s32.totalorder %s19, 0
      %p68 = por %p66, %p67
      %p69 = scmp.ne.s32.totalorder %s57, %s58
      %p70 = scmp.eq.s32.totalorder %s20, 1
      %p71 = por %p69, %p70
      %p73 = scmp.ne.s32.totalorder %s58, %s72
      %p74 = scmp.eq.s32.totalorder %s20, 0
      %p75 = por %p73, %p74
      %s76 = ssub.s32 %s21, %s33
      %s77 = ssub.s32 %s22, %s29
      %s78 = sor.u32 %s76, %s77
      %p79 = scmp.eq.s32.totalorder %s78, 0
      %s81 = sadd.s32 %s80, 1
      %s82 = scalar_select %p79, %s80, %s81
      %p85 = pneg %p79
      %p86 = scmp.eq.s32.totalorder %s14, 1
      %p87 = por %p85, %p86
      %p88 = scmp.ne.s32.totalorder %s80, %s83
      %p89 = scmp.eq.s32.totalorder %s14, 0
      %p90 = por %p88, %p89
      %p91 = scmp.ne.s32.totalorder %s80, %s83
      %p92 = scmp.eq.s32.totalorder %s19, 1
      %p93 = por %p91, %p92
      %p94 = scmp.ne.s32.totalorder %s83, %s84
      %p95 = scmp.eq.s32.totalorder %s19, 0
      %p96 = por %p94, %p95
      %p97 = scmp.ne.s32.totalorder %s83, %s84
      %p98 = scmp.eq.s32.totalorder %s20, 1
      %p99 = por %p97, %p98
      %p101 = scmp.ne.s32.totalorder %s84, %s100
      %p102 = scmp.eq.s32.totalorder %s20, 0
      %p103 = por %p101, %p102
      %s104 = ssub.s32 %s21, %s33
      %s105 = ssub.s32 %s22, %s29
      %s106 = sor.u32 %s104, %s105
      %p107 = scmp.eq.s32.totalorder %s106, 0
      %s109 = sadd.s32 %s108, 1
      %s110 = scalar_select %p107, %s108, %s109
      %p113 = pneg %p107
      %p114 = scmp.eq.s32.totalorder %s14, 1
      %p115 = por %p113, %p114
      %p116 = scmp.ne.s32.totalorder %s108, %s111
      %p117 = scmp.eq.s32.totalorder %s14, 0
      %p118 = por %p116, %p117
      %p119 = scmp.ne.s32.totalorder %s108, %s111
      %p120 = scmp.eq.s32.totalorder %s19, 1
      %p121 = por %p119, %p120
      %p122 = scmp.ne.s32.totalorder %s111, %s112
      %p123 = scmp.eq.s32.totalorder %s19, 0
      %p124 = por %p122, %p123
      %p125 = scmp.ne.s32.totalorder %s111, %s112
      %p126 = scmp.eq.s32.totalorder %s20, 1
      %p127 = por %p125, %p126
      %p129 = scmp.ne.s32.totalorder %s112, %s128
      %p130 = scmp.eq.s32.totalorder %s20, 0
      %p131 = por %p129, %p130
      %p132 = scmp.le.s32.totalorder 1, %s14
      %p133 = scmp.lt.s32.totalorder %s14, 3
      %p134 = pnand %p132, %p133
      %p135 = pneg %p134
      // Predicated region
      $region9: #{tpu_custom_call.1} parent=5 // pred_check
        _
      $region10: #{tpu_custom_call.1} parent=5 // pred_check_branch
        %137 = sbr.rel (%p134) target = $region12
      $region11: #{tpu_custom_call.1} parent=5 // pred_region
        %s138 = ssub.s32 %s14, 1
        // Predicated region
        $region13: #{tpu_custom_call.1} parent=11 // pred_check
          %p139 = pneg %p47
        $region14: #{tpu_custom_call.1} parent=11 // pred_check_branch
          %141 = sbr.rel (%p139) target = $region16
        $region15: #{tpu_custom_call.1} parent=11 // pred_region
          %s143 = ssub.s32 256, 256
          %144 = vsyncadd [#allocation3], %s143
          %s145 = sshll.u32 [#allocation2], 4
          %s146 = int_to_ptr.vmem [resolvable:$true] %s145
          %151 = dma.hbm_to_vmem [thread:$0]  %s0, 256, %s146, [#allocation3], 128, 128, 8
        $region16: #{tpu_custom_call.1} parent=11 // pred_fallthru
          _
        // Predicated region
        $region17: #{tpu_custom_call.1} parent=11 // pred_check
          %p152 = pneg %p68
        $region18: #{tpu_custom_call.1} parent=11 // pred_check_branch
          %154 = sbr.rel (%p152) target = $region20
        $region19: #{tpu_custom_call.1} parent=11 // pred_region
          %s156 = ssub.s32 256, 256
          %157 = vsyncadd [#allocation6], %s156
          %s158 = sshll.u32 [#allocation5], 4
          %s159 = int_to_ptr.vmem [resolvable:$true] %s158
          %164 = dma.hbm_to_vmem [thread:$0]  %s1, 256, %s159, [#allocation6], 128, 128, 8
        $region20: #{tpu_custom_call.1} parent=11 // pred_fallthru
          _
      $region12: #{tpu_custom_call.1} parent=5 // pred_fallthru
        _
      %p165 = scmp.lt.s32.totalorder %s14, 2
      // Predicated region
      $region21: #{tpu_custom_call.1} parent=5 // pred_check
        %p166 = pneg %p165
      $region22: #{tpu_custom_call.1} parent=5 // pred_check_branch
        %168 = sbr.rel (%p166) target = $region24
      $region23: #{tpu_custom_call.1} parent=5 // pred_region
        // Predicated region
        $region25: #{tpu_custom_call.1} parent=23 // pred_check
          %p169 = pneg %p90
        $region26: #{tpu_custom_call.1} parent=23 // pred_check_branch
          %171 = sbr.rel (%p169) target = $region28
        $region27: #{tpu_custom_call.1} parent=23 // pred_region
          %s172 = sand.u32 %s14, 1
          %s173 = scalar_lea.sflag [#allocation3], %s172
          %s174 = sand.u32 %s80, 1
          %s175 = smul.addr %s174, 64
          %s176 = scalar_lea.vmem [#allocation7], %s175
          %s177 = smul.u32 4, %s22
          %s179 = ssub.s32 1024, 1024
          %180 = vsyncadd %s173, %s179
          %s181 = smul.addr %s177, 2
          %s182 = smul.addr %s21, 8
          %s183 = sadd.s32 %s181, %s182
          %s184 = smul.addr %s183, 128
          %s185 = scalar_lea.hbm %s2, %s184
          %s186 = sshll.u32 %s176, 4
          %s187 = int_to_ptr.vmem [resolvable:$true] %s186
          %192 = dma.hbm_to_vmem [thread:$0]  %s185, 1024, %s187, %s173, 128, 128, 8
        $region28: #{tpu_custom_call.1} parent=23 // pred_fallthru
          _
      $region24: #{tpu_custom_call.1} parent=5 // pred_fallthru
        _
      %p193 = scmp.le.s32.totalorder 1, %s14
      %p194 = scmp.lt.s32.totalorder %s14, 3
      %p195 = pnand %p193, %p194
      %p196 = pneg %p195
      // Predicated region
      $region29: #{tpu_custom_call.1} parent=5 // pred_check
        _
      $region30: #{tpu_custom_call.1} parent=5 // pred_check_branch
        %198 = sbr.rel (%p195) target = $region32
      $region31: #{tpu_custom_call.1} parent=5 // pred_region
        %s199 = ssub.s32 %s14, 1
        // Predicated region
        $region33: #{tpu_custom_call.1} parent=31 // pred_check
          %p200 = pneg %p47
        $region34: #{tpu_custom_call.1} parent=31 // pred_check_branch
          %202 = sbr.rel (%p200) target = $region36
        $region35: #{tpu_custom_call.1} parent=31 // pred_region
          %203 = dma.done [#allocation3], 256
        $region36: #{tpu_custom_call.1} parent=31 // pred_fallthru
          _
        // Predicated region
        $region37: #{tpu_custom_call.1} parent=31 // pred_check
          %p204 = pneg %p68
        $region38: #{tpu_custom_call.1} parent=31 // pred_check_branch
          %206 = sbr.rel (%p204) target = $region40
        $region39: #{tpu_custom_call.1} parent=31 // pred_region
          %207 = dma.done [#allocation6], 256
        $region40: #{tpu_custom_call.1} parent=31 // pred_fallthru
          _
        %s208 = sand.u32 %s19, 1
        %s209 = scalar_lea.sflag [#allocation3], %s208
        %s210 = sand.u32 %s83, 1
        %s211 = smul.addr %s210, 64
        %s212 = scalar_lea.vmem [#allocation7], %s211
        // Predicated region
        $region41: #{tpu_custom_call.1} parent=31 // pred_check
          %p213 = pneg %p96
        $region42: #{tpu_custom_call.1} parent=31 // pred_check_branch
          %215 = sbr.rel (%p213) target = $region44
        $region43: #{tpu_custom_call.1} parent=31 // pred_region
          %216 = dma.done %s209, 1024
        $region44: #{tpu_custom_call.1} parent=31 // pred_fallthru
          _
        %p217 = pneg %p47
        %p218 = pneg %p44
        %p219 = pneg %p68
        %p220 = pneg %p65
        %s221 = sand.u32 %s19, 1
        %s222 = scalar_lea.sflag [#allocation3], %s221
        %s223 = sand.u32 %s83, 1
        %s224 = smul.addr %s223, 64
        %s225 = scalar_lea.vmem [#allocation7], %s224
        %p226 = pneg %p96
        %p227 = pneg %p93
        %p228 = pneg %p124
        %p229 = pneg %p121
        %s230 = sand.u32 %s111, 1
        %s231 = scalar_lea.sflag [#allocation4], %s230
        %s232 = sand.u32 %s111, 1
        %s233 = smul.addr %s232, 256
        %s234 = scalar_lea.vmem [#allocation8], %s233
        %s235 = smul.u32 4, %s24
        %s236 = smul.u32 4, %s24
        %v237 = vld [vmem:[#allocation2] sm:$0xff]
        %v238 = vld [vmem:[#allocation2 + $0x8] sm:$0xff]
        %v239 = vld [vmem:[#allocation5] sm:$0xff]
        %v240 = vld [vmem:[#allocation5 + $0x8] sm:$0xff]
        %v241 = vld [vmem:[%s212] sm:$0xff]
        %v242 = vld [vmem:[%s212 + $0x8] sm:$0xff]
        %vm243 = vcmask 130048
        %v245 = vsel %vm243, %v237, 0
        %v248 = vsel %vm243, %v238, 0
        %250 = vmatprep.subr.mxu0 0.0
        %v251 = vand.u32 %v241, 4294901760
        %252 = vmatpush1.msra.mxu0 %v251
        %253 = vmatprep.subr.mxu0 0.0
        %v254 = vand.u32 %v242, 4294901760
        %255 = vmatpush1.msra.mxu0 %v254
        %256 = vmatprep.subr.mxu0 0.0
        %257 = vmatpush1.msra.mxu0 0.0
        %258 = vmatprep.subr.mxu0 0.0
        %259 = vmatpush1.msra.mxu0 0.0
        %260 = vmatprep.subr.mxu0 0.0
        %261 = vmatpush1.msra.mxu0 0.0
        %262 = vmatprep.subr.mxu0 0.0
        %263 = vmatpush1.msra.mxu0 0.0
        %264 = vmatprep.subr.mxu0 0.0
        %265 = vmatpush1.msra.mxu0 0.0
        %266 = vmatprep.subr.mxu0 0.0
        %267 = vmatpush1.msra.mxu0 0.0
        %268 = vmatprep.subr.mxu0 0.0
        %269 = vmatpush1.msra.mxu0 0.0
        %270 = vmatprep.subr.mxu0 0.0
        %271 = vmatpush1.msra.mxu0 0.0
        %272 = vmatprep.subr.mxu0 0.0
        %273 = vmatpush1.msra.mxu0 0.0
        %274 = vmatprep.subr.mxu0 0.0
        %275 = vmatpush1.msra.mxu0 0.0
        %276 = vmatprep.subr.mxu0 0.0
        %277 = vmatpush1.msra.mxu0 0.0
        %278 = vmatprep.subr.mxu0 0.0
        %279 = vmatpush1.msra.mxu0 0.0
        %280 = vmatprep.subr.mxu0 0.0
        %281 = vmatpush1.msra.mxu0 0.0
        %282 = vmatprep.subr.mxu0 0.0
        %283 = vmatpush1.msra.mxu0 0.0
        %284 = vmatprep.subr.mxu0 0.0
        %285 = vmatpush1.msra.mxu0 0.0
        %286 = vmatprep.subr.mxu0 0.0
        %287 = vmatpush1.msra.mxu0 0.0
        %288 = vmatprep.subr.mxu0 0.0
        %289 = vmatpush1.msra.mxu0 0.0
        %290 = vmatprep.subr.mxu0 0.0
        %291 = vmatpush1.msra.mxu0 0.0
        %292 = vmatprep.subr.mxu0 0.0
        %293 = vmatpush1.msra.mxu0 0.0
        %294 = vmatprep.subr.mxu0 0.0
        %295 = vmatpush1.msra.mxu0 0.0
        %296 = vmatprep.subr.mxu0 0.0
        %297 = vmatpush1.msra.mxu0 0.0
        %298 = vmatprep.subr.mxu0 0.0
        %299 = vmatpush1.msra.mxu0 0.0
        %300 = vmatprep.subr.mxu0 0.0
        %301 = vmatpush1.msra.mxu0 0.0
        %302 = vmatprep.subr.mxu0 0.0
        %303 = vmatpush1.msra.mxu0 0.0
        %304 = vmatprep.subr.mxu0 0.0
        %305 = vmatpush1.msra.mxu0 0.0
        %306 = vmatprep.subr.mxu0 0.0
        %307 = vmatpush1.msra.mxu0 0.0
        %308 = vmatprep.subr.mxu0 0.0
        %309 = vmatpush1.msra.mxu0 0.0
        %310 = vmatprep.subr.mxu0 0.0
        %311 = vmatpush1.msra.mxu0 0.0
        %312 = vmatprep.subr.mxu0 0.0
        %313 = vmatpush1.msra.mxu0 0.0
        %314 = vmatprep.subr.mxu0 0.0
        %315 = vmatpush1.msra.mxu0 0.0
        %316 = vmatprep.mubr.f32.mxu0 0.0
        %v317 = vand.u32 %v245, 4294901760
        %v318 = vsub.f32 %v245, %v317
        %v319 = vand.u32 %v318, 4294901760
        %v320 = vsub.f32 %v318, %v319
        %v321 = vand.u32 %v320, 4294901760
        %322 = vmatmul.mubr.f32.gmra.mrb[0].mxu0 %v321
        %v323 = vpop.f32.mrb[0].mxu0
        %v324 = vadd.f32 0.0, %v323
        %v325 = vpop.f32.mrb[0].mxu0
        %326 = vmatprep.mubr.f32.mxu0 0.0
        %v327 = vand.u32 %v248, 4294901760
        %v328 = vsub.f32 %v248, %v327
        %v329 = vand.u32 %v328, 4294901760
        %v330 = vsub.f32 %v328, %v329
        %v331 = vand.u32 %v330, 4294901760
        %332 = vmatmul.mubr.f32.gmra.mrb[0].mxu0 %v331
        %v333 = vpop.f32.mrb[0].mxu0
        %v334 = vadd.f32 0.0, %v333
        %v335 = vpop.f32.mrb[0].mxu0
        %336 = vdwg.mxu0
        %337 = vmatprep.subr.mxu0 0.0
        %v338 = vand.u32 %v241, 4294901760
        %v339 = vsub.f32 %v241, %v338
        %v340 = vand.u32 %v339, 4294901760
        %v341 = vsub.f32 %v339, %v340
        %v342 = vand.u32 %v341, 4294901760
        %343 = vmatpush1.msra.mxu0 %v342
        %344 = vmatprep.subr.mxu0 0.0
        %v345 = vand.u32 %v242, 4294901760
        %v346 = vsub.f32 %v242, %v345
        %v347 = vand.u32 %v346, 4294901760
        %v348 = vsub.f32 %v346, %v347
        %v349 = vand.u32 %v348, 4294901760
        %350 = vmatpush1.msra.mxu0 %v349
        %351 = vmatprep.subr.mxu0 0.0
        %352 = vmatpush1.msra.mxu0 0.0
        %353 = vmatprep.subr.mxu0 0.0
        %354 = vmatpush1.msra.mxu0 0.0
        %355 = vmatprep.subr.mxu0 0.0
        %356 = vmatpush1.msra.mxu0 0.0
        %357 = vmatprep.subr.mxu0 0.0
        %358 = vmatpush1.msra.mxu0 0.0
        %359 = vmatprep.subr.mxu0 0.0
        %360 = vmatpush1.msra.mxu0 0.0
        %361 = vmatprep.subr.mxu0 0.0
        %362 = vmatpush1.msra.mxu0 0.0
        %363 = vmatprep.subr.mxu0 0.0
        %364 = vmatpush1.msra.mxu0 0.0
        %365 = vmatprep.subr.mxu0 0.0
        %366 = vmatpush1.msra.mxu0 0.0
        %367 = vmatprep.subr.mxu0 0.0
        %368 = vmatpush1.msra.mxu0 0.0
        %369 = vmatprep.subr.mxu0 0.0
        %370 = vmatpush1.msra.mxu0 0.0
        %371 = vmatprep.subr.mxu0 0.0
        %372 = vmatpush1.msra.mxu0 0.0
        %373 = vmatprep.subr.mxu0 0.0
        %374 = vmatpush1.msra.mxu0 0.0
        %375 = vmatprep.subr.mxu0 0.0
        %376 = vmatpush1.msra.mxu0 0.0
        %377 = vmatprep.subr.mxu0 0.0
        %378 = vmatpush1.msra.mxu0 0.0
        %379 = vmatprep.subr.mxu0 0.0
        %380 = vmatpush1.msra.mxu0 0.0
        %381 = vmatprep.subr.mxu0 0.0
        %382 = vmatpush1.msra.mxu0 0.0
        %383 = vmatprep.subr.mxu0 0.0
        %384 = vmatpush1.msra.mxu0 0.0
        %385 = vmatprep.subr.mxu0 0.0
        %386 = vmatpush1.msra.mxu0 0.0
        %387 = vmatprep.subr.mxu0 0.0
        %388 = vmatpush1.msra.mxu0 0.0
        %389 = vmatprep.subr.mxu0 0.0
        %390 = vmatpush1.msra.mxu0 0.0
        %391 = vmatprep.subr.mxu0 0.0
        %392 = vmatpush1.msra.mxu0 0.0
        %393 = vmatprep.subr.mxu0 0.0
        %394 = vmatpush1.msra.mxu0 0.0
        %395 = vmatprep.subr.mxu0 0.0
        %396 = vmatpush1.msra.mxu0 0.0
        %397 = vmatprep.subr.mxu0 0.0
        %398 = vmatpush1.msra.mxu0 0.0
        %399 = vmatprep.subr.mxu0 0.0
        %400 = vmatpush1.msra.mxu0 0.0
        %401 = vmatprep.subr.mxu0 0.0
        %402 = vmatpush1.msra.mxu0 0.0
        %403 = vmatprep.subr.mxu0 0.0
        %404 = vmatpush1.msra.mxu0 0.0
        %405 = vmatprep.subr.mxu0 0.0
        %406 = vmatpush1.msra.mxu0 0.0
        %407 = vmatprep.subr.mxu0 0.0
        %408 = vmatpush1.msra.mxu0 0.0
        %409 = vmatprep.subr.mxu0 0.0
        %410 = vmatpush1.msra.mxu0 0.0
        %411 = vmatprep.mubr.f32.mxu0 0.0
        %v412 = vand.u32 %v245, 4294901760
        %413 = vmatmul.mubr.f32.gmra.mrb[0].mxu0 %v412
        %v414 = vpop.f32.mrb[0].mxu0
        %v415 = vadd.f32 %v324, %v414
        %v416 = vpop.f32.mrb[0].mxu0
        %417 = vmatprep.mubr.f32.mxu0 0.0
        %v418 = vand.u32 %v248, 4294901760
        %419 = vmatmul.mubr.f32.gmra.mrb[0].mxu0 %v418
        %v420 = vpop.f32.mrb[0].mxu0
        %v421 = vadd.f32 %v334, %v420
        %v422 = vpop.f32.mrb[0].mxu0
        %423 = vdwg.mxu0
        %424 = vmatprep.subr.mxu0 0.0
        %v425 = vand.u32 %v241, 4294901760
        %v426 = vsub.f32 %v241, %v425
        %427 = vmatpush1.msra.mxu0 %v426
        %428 = vmatprep.subr.mxu0 0.0
        %v429 = vand.u32 %v242, 4294901760
        %v430 = vsub.f32 %v242, %v429
        %431 = vmatpush1.msra.mxu0 %v430
        %432 = vmatprep.subr.mxu0 0.0
        %433 = vmatpush1.msra.mxu0 0.0
        %434 = vmatprep.subr.mxu0 0.0
        %435 = vmatpush1.msra.mxu0 0.0
        %436 = vmatprep.subr.mxu0 0.0
        %437 = vmatpush1.msra.mxu0 0.0
        %438 = vmatprep.subr.mxu0 0.0
        %439 = vmatpush1.msra.mxu0 0.0
        %440 = vmatprep.subr.mxu0 0.0
        %441 = vmatpush1.msra.mxu0 0.0
        %442 = vmatprep.subr.mxu0 0.0
        %443 = vmatpush1.msra.mxu0 0.0
        %444 = vmatprep.subr.mxu0 0.0
        %445 = vmatpush1.msra.mxu0 0.0
        %446 = vmatprep.subr.mxu0 0.0
        %447 = vmatpush1.msra.mxu0 0.0
        %448 = vmatprep.subr.mxu0 0.0
        %449 = vmatpush1.msra.mxu0 0.0
        %450 = vmatprep.subr.mxu0 0.0
        %451 = vmatpush1.msra.mxu0 0.0
        %452 = vmatprep.subr.mxu0 0.0
        %453 = vmatpush1.msra.mxu0 0.0
        %454 = vmatprep.subr.mxu0 0.0
        %455 = vmatpush1.msra.mxu0 0.0
        %456 = vmatprep.subr.mxu0 0.0
        %457 = vmatpush1.msra.mxu0 0.0
        %458 = vmatprep.subr.mxu0 0.0
        %459 = vmatpush1.msra.mxu0 0.0
        %460 = vmatprep.subr.mxu0 0.0
        %461 = vmatpush1.msra.mxu0 0.0
        %462 = vmatprep.subr.mxu0 0.0
        %463 = vmatpush1.msra.mxu0 0.0
        %464 = vmatprep.subr.mxu0 0.0
        %465 = vmatpush1.msra.mxu0 0.0
        %466 = vmatprep.subr.mxu0 0.0
        %467 = vmatpush1.msra.mxu0 0.0
        %468 = vmatprep.subr.mxu0 0.0
        %469 = vmatpush1.msra.mxu0 0.0
        %470 = vmatprep.subr.mxu0 0.0
        %471 = vmatpush1.msra.mxu0 0.0
        %472 = vmatprep.subr.mxu0 0.0
        %473 = vmatpush1.msra.mxu0 0.0
        %474 = vmatprep.subr.mxu0 0.0
        %475 = vmatpush1.msra.mxu0 0.0
        %476 = vmatprep.subr.mxu0 0.0
        %477 = vmatpush1.msra.mxu0 0.0
        %478 = vmatprep.subr.mxu0 0.0
        %479 = vmatpush1.msra.mxu0 0.0
        %480 = vmatprep.subr.mxu0 0.0
        %481 = vmatpush1.msra.mxu0 0.0
        %482 = vmatprep.subr.mxu0 0.0
        %483 = vmatpush1.msra.mxu0 0.0
        %484 = vmatprep.subr.mxu0 0.0
        %485 = vmatpush1.msra.mxu0 0.0
        %486 = vmatprep.subr.mxu0 0.0
        %487 = vmatpush1.msra.mxu0 0.0
        %488 = vmatprep.subr.mxu0 0.0
        %489 = vmatpush1.msra.mxu0 0.0
        %490 = vmatprep.subr.mxu0 0.0
        %491 = vmatpush1.msra.mxu0 0.0
        %492 = vmatprep.mubr.f32.mxu0 0.0
        %v493 = vand.u32 %v245, 4294901760
        %v494 = vsub.f32 %v245, %v493
        %495 = vmatmul.mubr.f32.gmra.mrb[0].mxu0 %v494
        %v496 = vpop.f32.mrb[0].mxu0
        %v497 = vadd.f32 %v415, %v496
        %v498 = vpop.f32.mrb[0].mxu0
        %499 = vmatprep.mubr.f32.mxu0 0.0
        %v500 = vand.u32 %v248, 4294901760
        %v501 = vsub.f32 %v248, %v500
        %502 = vmatmul.mubr.f32.gmra.mrb[0].mxu0 %v501
        %v503 = vpop.f32.mrb[0].mxu0
        %v504 = vadd.f32 %v421, %v503
        %v505 = vpop.f32.mrb[0].mxu0
        %506 = vdwg.mxu0
        %507 = vmatprep.subr.mxu0 0.0
        %v508 = vand.u32 %v241, 4294901760
        %509 = vmatpush1.msra.mxu0 %v508
        %510 = vmatprep.subr.mxu0 0.0
        %v511 = vand.u32 %v242, 4294901760
        %512 = vmatpush1.msra.mxu0 %v511
        %513 = vmatprep.subr.mxu0 0.0
        %514 = vmatpush1.msra.mxu0 0.0
        %515 = vmatprep.subr.mxu0 0.0
        %516 = vmatpush1.msra.mxu0 0.0
        %517 = vmatprep.subr.mxu0 0.0
        %518 = vmatpush1.msra.mxu0 0.0
        %519 = vmatprep.subr.mxu0 0.0
        %520 = vmatpush1.msra.mxu0 0.0
        %521 = vmatprep.subr.mxu0 0.0
        %522 = vmatpush1.msra.mxu0 0.0
        %523 = vmatprep.subr.mxu0 0.0
        %524 = vmatpush1.msra.mxu0 0.0
        %525 = vmatprep.subr.mxu0 0.0
        %526 = vmatpush1.msra.mxu0 0.0
        %527 = vmatprep.subr.mxu0 0.0
        %528 = vmatpush1.msra.mxu0 0.0
        %529 = vmatprep.subr.mxu0 0.0
        %530 = vmatpush1.msra.mxu0 0.0
        %531 = vmatprep.subr.mxu0 0.0
        %532 = vmatpush1.msra.mxu0 0.0
        %533 = vmatprep.subr.mxu0 0.0
        %534 = vmatpush1.msra.mxu0 0.0
        %535 = vmatprep.subr.mxu0 0.0
        %536 = vmatpush1.msra.mxu0 0.0
        %537 = vmatprep.subr.mxu0 0.0
        %538 = vmatpush1.msra.mxu0 0.0
        %539 = vmatprep.subr.mxu0 0.0
        %540 = vmatpush1.msra.mxu0 0.0
        %541 = vmatprep.subr.mxu0 0.0
        %542 = vmatpush1.msra.mxu0 0.0
        %543 = vmatprep.subr.mxu0 0.0
        %544 = vmatpush1.msra.mxu0 0.0
        %545 = vmatprep.subr.mxu0 0.0
        %546 = vmatpush1.msra.mxu0 0.0
        %547 = vmatprep.subr.mxu0 0.0
        %548 = vmatpush1.msra.mxu0 0.0
        %549 = vmatprep.subr.mxu0 0.0
        %550 = vmatpush1.msra.mxu0 0.0
        %551 = vmatprep.subr.mxu0 0.0
        %552 = vmatpush1.msra.mxu0 0.0
        %553 = vmatprep.subr.mxu0 0.0
        %554 = vmatpush1.msra.mxu0 0.0
        %555 = vmatprep.subr.mxu0 0.0
        %556 = vmatpush1.msra.mxu0 0.0
        %557 = vmatprep.subr.mxu0 0.0
        %558 = vmatpush1.msra.mxu0 0.0
        %559 = vmatprep.subr.mxu0 0.0
        %560 = vmatpush1.msra.mxu0 0.0
        %561 = vmatprep.subr.mxu0 0.0
        %562 = vmatpush1.msra.mxu0 0.0
        %563 = vmatprep.subr.mxu0 0.0
        %564 = vmatpush1.msra.mxu0 0.0
        %565 = vmatprep.subr.mxu0 0.0
        %566 = vmatpush1.msra.mxu0 0.0
        %567 = vmatprep.subr.mxu0 0.0
        %568 = vmatpush1.msra.mxu0 0.0
        %569 = vmatprep.subr.mxu0 0.0
        %570 = vmatpush1.msra.mxu0 0.0
        %571 = vmatprep.subr.mxu0 0.0
        %572 = vmatpush1.msra.mxu0 0.0
        %573 = vmatprep.mubr.f32.mxu0 0.0
        %v574 = vand.u32 %v245, 4294901760
        %v575 = vsub.f32 %v245, %v574
        %v576 = vand.u32 %v575, 4294901760
        %577 = vmatmul.mubr.f32.gmra.mrb[0].mxu0 %v576
        %v578 = vpop.f32.mrb[0].mxu0
        %v579 = vadd.f32 %v497, %v578
        %v580 = vpop.f32.mrb[0].mxu0
        %581 = vmatprep.mubr.f32.mxu0 0.0
        %v582 = vand.u32 %v248, 4294901760
        %v583 = vsub.f32 %v248, %v582
        %v584 = vand.u32 %v583, 4294901760
        %585 = vmatmul.mubr.f32.gmra.mrb[0].mxu0 %v584
        %v586 = vpop.f32.mrb[0].mxu0
        %v587 = vadd.f32 %v504, %v586
        %v588 = vpop.f32.mrb[0].mxu0
        %589 = vdwg.mxu0
        %590 = vmatprep.subr.mxu0 0.0
        %v591 = vand.u32 %v241, 4294901760
        %v592 = vsub.f32 %v241, %v591
        %v593 = vand.u32 %v592, 4294901760
        %594 = vmatpush1.msra.mxu0 %v593
        %595 = vmatprep.subr.mxu0 0.0
        %v596 = vand.u32 %v242, 4294901760
        %v597 = vsub.f32 %v242, %v596
        %v598 = vand.u32 %v597, 4294901760
        %599 = vmatpush1.msra.mxu0 %v598
        %600 = vmatprep.subr.mxu0 0.0
        %601 = vmatpush1.msra.mxu0 0.0
        %602 = vmatprep.subr.mxu0 0.0
        %603 = vmatpush1.msra.mxu0 0.0
        %604 = vmatprep.subr.mxu0 0.0
        %605 = vmatpush1.msra.mxu0 0.0
        %606 = vmatprep.subr.mxu0 0.0
        %607 = vmatpush1.msra.mxu0 0.0
        %608 = vmatprep.subr.mxu0 0.0
        %609 = vmatpush1.msra.mxu0 0.0
        %610 = vmatprep.subr.mxu0 0.0
        %611 = vmatpush1.msra.mxu0 0.0
        %612 = vmatprep.subr.mxu0 0.0
        %613 = vmatpush1.msra.mxu0 0.0
        %614 = vmatprep.subr.mxu0 0.0
        %615 = vmatpush1.msra.mxu0 0.0
        %616 = vmatprep.subr.mxu0 0.0
        %617 = vmatpush1.msra.mxu0 0.0
        %618 = vmatprep.subr.mxu0 0.0
        %619 = vmatpush1.msra.mxu0 0.0
        %620 = vmatprep.subr.mxu0 0.0
        %621 = vmatpush1.msra.mxu0 0.0
        %622 = vmatprep.subr.mxu0 0.0
        %623 = vmatpush1.msra.mxu0 0.0
        %624 = vmatprep.subr.mxu0 0.0
        %625 = vmatpush1.msra.mxu0 0.0
        %626 = vmatprep.subr.mxu0 0.0
        %627 = vmatpush1.msra.mxu0 0.0
        %628 = vmatprep.subr.mxu0 0.0
        %629 = vmatpush1.msra.mxu0 0.0
        %630 = vmatprep.subr.mxu0 0.0
        %631 = vmatpush1.msra.mxu0 0.0
        %632 = vmatprep.subr.mxu0 0.0
        %633 = vmatpush1.msra.mxu0 0.0
        %634 = vmatprep.subr.mxu0 0.0
        %635 = vmatpush1.msra.mxu0 0.0
        %636 = vmatprep.subr.mxu0 0.0
        %637 = vmatpush1.msra.mxu0 0.0
        %638 = vmatprep.subr.mxu0 0.0
        %639 = vmatpush1.msra.mxu0 0.0
        %640 = vmatprep.subr.mxu0 0.0
        %641 = vmatpush1.msra.mxu0 0.0
        %642 = vmatprep.subr.mxu0 0.0
        %643 = vmatpush1.msra.mxu0 0.0
        %644 = vmatprep.subr.mxu0 0.0
        %645 = vmatpush1.msra.mxu0 0.0
        %646 = vmatprep.subr.mxu0 0.0
        %647 = vmatpush1.msra.mxu0 0.0
        %648 = vmatprep.subr.mxu0 0.0
        %649 = vmatpush1.msra.mxu0 0.0
        %650 = vmatprep.subr.mxu0 0.0
        %651 = vmatpush1.msra.mxu0 0.0
        %652 = vmatprep.subr.mxu0 0.0
        %653 = vmatpush1.msra.mxu0 0.0
        %654 = vmatprep.subr.mxu0 0.0
        %655 = vmatpush1.msra.mxu0 0.0
        %656 = vmatprep.subr.mxu0 0.0
        %657 = vmatpush1.msra.mxu0 0.0
        %658 = vmatprep.subr.mxu0 0.0
        %659 = vmatpush1.msra.mxu0 0.0
        %660 = vmatprep.mubr.f32.mxu0 0.0
        %v661 = vand.u32 %v245, 4294901760
        %662 = vmatmul.mubr.f32.gmra.mrb[0].mxu0 %v661
        %v663 = vpop.f32.mrb[0].mxu0
        %v664 = vadd.f32 %v579, %v663
        %v665 = vpop.f32.mrb[0].mxu0
        %666 = vmatprep.mubr.f32.mxu0 0.0
        %v667 = vand.u32 %v248, 4294901760
        %668 = vmatmul.mubr.f32.gmra.mrb[0].mxu0 %v667
        %v669 = vpop.f32.mrb[0].mxu0
        %v670 = vadd.f32 %v587, %v669
        %v671 = vpop.f32.mrb[0].mxu0
        %672 = vdwg.mxu0
        %673 = vmatprep.subr.mxu0 0.0
        %v674 = vand.u32 %v241, 4294901760
        %675 = vmatpush1.msra.mxu0 %v674
        %676 = vmatprep.subr.mxu0 0.0
        %v677 = vand.u32 %v242, 4294901760
        %678 = vmatpush1.msra.mxu0 %v677
        %679 = vmatprep.subr.mxu0 0.0
        %680 = vmatpush1.msra.mxu0 0.0
        %681 = vmatprep.subr.mxu0 0.0
        %682 = vmatpush1.msra.mxu0 0.0
        %683 = vmatprep.subr.mxu0 0.0
        %684 = vmatpush1.msra.mxu0 0.0
        %685 = vmatprep.subr.mxu0 0.0
        %686 = vmatpush1.msra.mxu0 0.0
        %687 = vmatprep.subr.mxu0 0.0
        %688 = vmatpush1.msra.mxu0 0.0
        %689 = vmatprep.subr.mxu0 0.0
        %690 = vmatpush1.msra.mxu0 0.0
        %691 = vmatprep.subr.mxu0 0.0
        %692 = vmatpush1.msra.mxu0 0.0
        %693 = vmatprep.subr.mxu0 0.0
        %694 = vmatpush1.msra.mxu0 0.0
        %695 = vmatprep.subr.mxu0 0.0
        %696 = vmatpush1.msra.mxu0 0.0
        %697 = vmatprep.subr.mxu0 0.0
        %698 = vmatpush1.msra.mxu0 0.0
        %699 = vmatprep.subr.mxu0 0.0
        %700 = vmatpush1.msra.mxu0 0.0
        %701 = vmatprep.subr.mxu0 0.0
        %702 = vmatpush1.msra.mxu0 0.0
        %703 = vmatprep.subr.mxu0 0.0
        %704 = vmatpush1.msra.mxu0 0.0
        %705 = vmatprep.subr.mxu0 0.0
        %706 = vmatpush1.msra.mxu0 0.0
        %707 = vmatprep.subr.mxu0 0.0
        %708 = vmatpush1.msra.mxu0 0.0
        %709 = vmatprep.subr.mxu0 0.0
        %710 = vmatpush1.msra.mxu0 0.0
        %711 = vmatprep.subr.mxu0 0.0
        %712 = vmatpush1.msra.mxu0 0.0
        %713 = vmatprep.subr.mxu0 0.0
        %714 = vmatpush1.msra.mxu0 0.0
        %715 = vmatprep.subr.mxu0 0.0
        %716 = vmatpush1.msra.mxu0 0.0
        %717 = vmatprep.subr.mxu0 0.0
        %718 = vmatpush1.msra.mxu0 0.0
        %719 = vmatprep.subr.mxu0 0.0
        %720 = vmatpush1.msra.mxu0 0.0
        %721 = vmatprep.subr.mxu0 0.0
        %722 = vmatpush1.msra.mxu0 0.0
        %723 = vmatprep.subr.mxu0 0.0
        %724 = vmatpush1.msra.mxu0 0.0
        %725 = vmatprep.subr.mxu0 0.0
        %726 = vmatpush1.msra.mxu0 0.0
        %727 = vmatprep.subr.mxu0 0.0
        %728 = vmatpush1.msra.mxu0 0.0
        %729 = vmatprep.subr.mxu0 0.0
        %730 = vmatpush1.msra.mxu0 0.0
        %731 = vmatprep.subr.mxu0 0.0
        %732 = vmatpush1.msra.mxu0 0.0
        %733 = vmatprep.subr.mxu0 0.0
        %734 = vmatpush1.msra.mxu0 0.0
        %735 = vmatprep.subr.mxu0 0.0
        %736 = vmatpush1.msra.mxu0 0.0
        %737 = vmatprep.subr.mxu0 0.0
        %738 = vmatpush1.msra.mxu0 0.0
        %739 = vmatprep.mubr.f32.mxu0 0.0
        %v740 = vand.u32 %v245, 4294901760
        %741 = vmatmul.mubr.f32.gmra.mrb[0].mxu0 %v740
        %v742 = vpop.f32.mrb[0].mxu0
        %v743 = vadd.f32 %v664, %v742
        %v744 = vpop.f32.mrb[0].mxu0
        %745 = vmatprep.mubr.f32.mxu0 0.0
        %v746 = vand.u32 %v248, 4294901760
        %747 = vmatmul.mubr.f32.gmra.mrb[0].mxu0 %v746
        %v748 = vpop.f32.mrb[0].mxu0
        %v749 = vadd.f32 %v670, %v748
        %v750 = vpop.f32.mrb[0].mxu0
        %751 = vdwg.mxu0
        %v753 = vsel %vm243, %v743, 0
        %v756 = vsel %vm243, %v749, 0
        %758 = vmatprep.subr.mxu0 0.0
        %v759 = vand.u32 %v239, 4294901760
        %760 = vmatpush1.msra.mxu0 %v759
        %761 = vmatprep.subr.mxu0 0.0
        %v762 = vand.u32 %v240, 4294901760
        %763 = vmatpush1.msra.mxu0 %v762
        %764 = vmatprep.subr.mxu0 0.0
        %765 = vmatpush1.msra.mxu0 0.0
        %766 = vmatprep.subr.mxu0 0.0
        %767 = vmatpush1.msra.mxu0 0.0
        %768 = vmatprep.subr.mxu0 0.0
        %769 = vmatpush1.msra.mxu0 0.0
        %770 = vmatprep.subr.mxu0 0.0
        %771 = vmatpush1.msra.mxu0 0.0
        %772 = vmatprep.subr.mxu0 0.0
        %773 = vmatpush1.msra.mxu0 0.0
        %774 = vmatprep.subr.mxu0 0.0
        %775 = vmatpush1.msra.mxu0 0.0
        %776 = vmatprep.subr.mxu0 0.0
        %777 = vmatpush1.msra.mxu0 0.0
        %778 = vmatprep.subr.mxu0 0.0
        %779 = vmatpush1.msra.mxu0 0.0
        %780 = vmatprep.subr.mxu0 0.0
        %781 = vmatpush1.msra.mxu0 0.0
        %782 = vmatprep.subr.mxu0 0.0
        %783 = vmatpush1.msra.mxu0 0.0
        %784 = vmatprep.subr.mxu0 0.0
        %785 = vmatpush1.msra.mxu0 0.0
        %786 = vmatprep.subr.mxu0 0.0
        %787 = vmatpush1.msra.mxu0 0.0
        %788 = vmatprep.subr.mxu0 0.0
        %789 = vmatpush1.msra.mxu0 0.0
        %790 = vmatprep.subr.mxu0 0.0
        %791 = vmatpush1.msra.mxu0 0.0
        %792 = vmatprep.subr.mxu0 0.0
        %793 = vmatpush1.msra.mxu0 0.0
        %794 = vmatprep.subr.mxu0 0.0
        %795 = vmatpush1.msra.mxu0 0.0
        %796 = vmatprep.subr.mxu0 0.0
        %797 = vmatpush1.msra.mxu0 0.0
        %798 = vmatprep.subr.mxu0 0.0
        %799 = vmatpush1.msra.mxu0 0.0
        %800 = vmatprep.subr.mxu0 0.0
        %801 = vmatpush1.msra.mxu0 0.0
        %802 = vmatprep.subr.mxu0 0.0
        %803 = vmatpush1.msra.mxu0 0.0
        %804 = vmatprep.subr.mxu0 0.0
        %805 = vmatpush1.msra.mxu0 0.0
        %806 = vmatprep.subr.mxu0 0.0
        %807 = vmatpush1.msra.mxu0 0.0
        %808 = vmatprep.subr.mxu0 0.0
        %809 = vmatpush1.msra.mxu0 0.0
        %810 = vmatprep.subr.mxu0 0.0
        %811 = vmatpush1.msra.mxu0 0.0
        %812 = vmatprep.subr.mxu0 0.0
        %813 = vmatpush1.msra.mxu0 0.0
        %814 = vmatprep.subr.mxu0 0.0
        %815 = vmatpush1.msra.mxu0 0.0
        %816 = vmatprep.subr.mxu0 0.0
        %817 = vmatpush1.msra.mxu0 0.0
        %818 = vmatprep.subr.mxu0 0.0
        %819 = vmatpush1.msra.mxu0 0.0
        %820 = vmatprep.subr.mxu0 0.0
        %821 = vmatpush1.msra.mxu0 0.0
        %822 = vmatprep.subr.mxu0 0.0
        %823 = vmatpush1.msra.mxu0 0.0
        %824 = vmatprep.mubr.f32.mxu0 0.0
        %v825 = vand.u32 %v753, 4294901760
        %v826 = vsub.f32 %v753, %v825
        %v827 = vand.u32 %v826, 4294901760
        %v828 = vsub.f32 %v826, %v827
        %v829 = vand.u32 %v828, 4294901760
        %830 = vmatmul.mubr.f32.gmra.mrb[0].mxu0 %v829
        %v831 = vpop.f32.mrb[0].mxu0
        %v832 = vadd.f32 0.0, %v831
        %v833 = vpop.f32.mrb[0].mxu0
        %834 = vmatprep.mubr.f32.mxu0 0.0
        %v835 = vand.u32 %v756, 4294901760
        %v836 = vsub.f32 %v756, %v835
        %v837 = vand.u32 %v836, 4294901760
        %v838 = vsub.f32 %v836, %v837
        %v839 = vand.u32 %v838, 4294901760
        %840 = vmatmul.mubr.f32.gmra.mrb[0].mxu0 %v839
        %v841 = vpop.f32.mrb[0].mxu0
        %v842 = vadd.f32 0.0, %v841
        %v843 = vpop.f32.mrb[0].mxu0
        %844 = vdwg.mxu0
        %845 = vmatprep.subr.mxu0 0.0
        %v846 = vand.u32 %v239, 4294901760
        %v847 = vsub.f32 %v239, %v846
        %v848 = vand.u32 %v847, 4294901760
        %v849 = vsub.f32 %v847, %v848
        %v850 = vand.u32 %v849, 4294901760
        %851 = vmatpush1.msra.mxu0 %v850
        %852 = vmatprep.subr.mxu0 0.0
        %v853 = vand.u32 %v240, 4294901760
        %v854 = vsub.f32 %v240, %v853
        %v855 = vand.u32 %v854, 4294901760
        %v856 = vsub.f32 %v854, %v855
        %v857 = vand.u32 %v856, 4294901760
        %858 = vmatpush1.msra.mxu0 %v857
        %859 = vmatprep.subr.mxu0 0.0
        %860 = vmatpush1.msra.mxu0 0.0
        %861 = vmatprep.subr.mxu0 0.0
        %862 = vmatpush1.msra.mxu0 0.0
        %863 = vmatprep.subr.mxu0 0.0
        %864 = vmatpush1.msra.mxu0 0.0
        %865 = vmatprep.subr.mxu0 0.0
        %866 = vmatpush1.msra.mxu0 0.0
        %867 = vmatprep.subr.mxu0 0.0
        %868 = vmatpush1.msra.mxu0 0.0
        %869 = vmatprep.subr.mxu0 0.0
        %870 = vmatpush1.msra.mxu0 0.0
        %871 = vmatprep.subr.mxu0 0.0
        %872 = vmatpush1.msra.mxu0 0.0
        %873 = vmatprep.subr.mxu0 0.0
        %874 = vmatpush1.msra.mxu0 0.0
        %875 = vmatprep.subr.mxu0 0.0
        %876 = vmatpush1.msra.mxu0 0.0
        %877 = vmatprep.subr.mxu0 0.0
        %878 = vmatpush1.msra.mxu0 0.0
        %879 = vmatprep.subr.mxu0 0.0
        %880 = vmatpush1.msra.mxu0 0.0
        %881 = vmatprep.subr.mxu0 0.0
        %882 = vmatpush1.msra.mxu0 0.0
        %883 = vmatprep.subr.mxu0 0.0
        %884 = vmatpush1.msra.mxu0 0.0
        %885 = vmatprep.subr.mxu0 0.0
        %886 = vmatpush1.msra.mxu0 0.0
        %887 = vmatprep.subr.mxu0 0.0
        %888 = vmatpush1.msra.mxu0 0.0
        %889 = vmatprep.subr.mxu0 0.0
        %890 = vmatpush1.msra.mxu0 0.0
        %891 = vmatprep.subr.mxu0 0.0
        %892 = vmatpush1.msra.mxu0 0.0
        %893 = vmatprep.subr.mxu0 0.0
        %894 = vmatpush1.msra.mxu0 0.0
        %895 = vmatprep.subr.mxu0 0.0
        %896 = vmatpush1.msra.mxu0 0.0
        %897 = vmatprep.subr.mxu0 0.0
        %898 = vmatpush1.msra.mxu0 0.0
        %899 = vmatprep.subr.mxu0 0.0
        %900 = vmatpush1.msra.mxu0 0.0
        %901 = vmatprep.subr.mxu0 0.0
        %902 = vmatpush1.msra.mxu0 0.0
        %903 = vmatprep.subr.mxu0 0.0
        %904 = vmatpush1.msra.mxu0 0.0
        %905 = vmatprep.subr.mxu0 0.0
        %906 = vmatpush1.msra.mxu0 0.0
        %907 = vmatprep.subr.mxu0 0.0
        %908 = vmatpush1.msra.mxu0 0.0
        %909 = vmatprep.subr.mxu0 0.0
        %910 = vmatpush1.msra.mxu0 0.0
        %911 = vmatprep.subr.mxu0 0.0
        %912 = vmatpush1.msra.mxu0 0.0
        %913 = vmatprep.subr.mxu0 0.0
        %914 = vmatpush1.msra.mxu0 0.0
        %915 = vmatprep.subr.mxu0 0.0
        %916 = vmatpush1.msra.mxu0 0.0
        %917 = vmatprep.subr.mxu0 0.0
        %918 = vmatpush1.msra.mxu0 0.0
        %919 = vmatprep.mubr.f32.mxu0 0.0
        %v920 = vand.u32 %v753, 4294901760
        %921 = vmatmul.mubr.f32.gmra.mrb[0].mxu0 %v920
        %v922 = vpop.f32.mrb[0].mxu0
        %v923 = vadd.f32 %v832, %v922
        %v924 = vpop.f32.mrb[0].mxu0
        %925 = vmatprep.mubr.f32.mxu0 0.0
        %v926 = vand.u32 %v756, 4294901760
        %927 = vmatmul.mubr.f32.gmra.mrb[0].mxu0 %v926
        %v928 = vpop.f32.mrb[0].mxu0
        %v929 = vadd.f32 %v842, %v928
        %v930 = vpop.f32.mrb[0].mxu0
        %931 = vdwg.mxu0
        %932 = vmatprep.subr.mxu0 0.0
        %v933 = vand.u32 %v239, 4294901760
        %v934 = vsub.f32 %v239, %v933
        %935 = vmatpush1.msra.mxu0 %v934
        %936 = vmatprep.subr.mxu0 0.0
        %v937 = vand.u32 %v240, 4294901760
        %v938 = vsub.f32 %v240, %v937
        %939 = vmatpush1.msra.mxu0 %v938
        %940 = vmatprep.subr.mxu0 0.0
        %941 = vmatpush1.msra.mxu0 0.0
        %942 = vmatprep.subr.mxu0 0.0
        %943 = vmatpush1.msra.mxu0 0.0
        %944 = vmatprep.subr.mxu0 0.0
        %945 = vmatpush1.msra.mxu0 0.0
        %946 = vmatprep.subr.mxu0 0.0
        %947 = vmatpush1.msra.mxu0 0.0
        %948 = vmatprep.subr.mxu0 0.0
        %949 = vmatpush1.msra.mxu0 0.0
        %950 = vmatprep.subr.mxu0 0.0
        %951 = vmatpush1.msra.mxu0 0.0
        %952 = vmatprep.subr.mxu0 0.0
        %953 = vmatpush1.msra.mxu0 0.0
        %954 = vmatprep.subr.mxu0 0.0
        %955 = vmatpush1.msra.mxu0 0.0
        %956 = vmatprep.subr.mxu0 0.0
        %957 = vmatpush1.msra.mxu0 0.0
        %958 = vmatprep.subr.mxu0 0.0
        %959 = vmatpush1.msra.mxu0 0.0
        %960 = vmatprep.subr.mxu0 0.0
        %961 = vmatpush1.msra.mxu0 0.0
        %962 = vmatprep.subr.mxu0 0.0
        %963 = vmatpush1.msra.mxu0 0.0
        %964 = vmatprep.subr.mxu0 0.0
        %965 = vmatpush1.msra.mxu0 0.0
        %966 = vmatprep.subr.mxu0 0.0
        %967 = vmatpush1.msra.mxu0 0.0
        %968 = vmatprep.subr.mxu0 0.0
        %969 = vmatpush1.msra.mxu0 0.0
        %970 = vmatprep.subr.mxu0 0.0
        %971 = vmatpush1.msra.mxu0 0.0
        %972 = vmatprep.subr.mxu0 0.0
        %973 = vmatpush1.msra.mxu0 0.0
        %974 = vmatprep.subr.mxu0 0.0
        %975 = vmatpush1.msra.mxu0 0.0
        %976 = vmatprep.subr.mxu0 0.0
        %977 = vmatpush1.msra.mxu0 0.0
        %978 = vmatprep.subr.mxu0 0.0
        %979 = vmatpush1.msra.mxu0 0.0
        %980 = vmatprep.subr.mxu0 0.0
        %981 = vmatpush1.msra.mxu0 0.0
        %982 = vmatprep.subr.mxu0 0.0
        %983 = vmatpush1.msra.mxu0 0.0
        %984 = vmatprep.subr.mxu0 0.0
        %985 = vmatpush1.msra.mxu0 0.0
        %986 = vmatprep.subr.mxu0 0.0
        %987 = vmatpush1.msra.mxu0 0.0
        %988 = vmatprep.subr.mxu0 0.0
        %989 = vmatpush1.msra.mxu0 0.0
        %990 = vmatprep.subr.mxu0 0.0
        %991 = vmatpush1.msra.mxu0 0.0
        %992 = vmatprep.subr.mxu0 0.0
        %993 = vmatpush1.msra.mxu0 0.0
        %994 = vmatprep.subr.mxu0 0.0
        %995 = vmatpush1.msra.mxu0 0.0
        %996 = vmatprep.subr.mxu0 0.0
        %997 = vmatpush1.msra.mxu0 0.0
        %998 = vmatprep.subr.mxu0 0.0
        %999 = vmatpush1.msra.mxu0 0.0
        %1000 = vmatprep.mubr.f32.mxu0 0.0
        %v1001 = vand.u32 %v753, 4294901760
        %v1002 = vsub.f32 %v753, %v1001
        %1003 = vmatmul.mubr.f32.gmra.mrb[0].mxu0 %v1002
        %v1004 = vpop.f32.mrb[0].mxu0
        %v1005 = vadd.f32 %v923, %v1004
        %v1006 = vpop.f32.mrb[0].mxu0
        %1007 = vmatprep.mubr.f32.mxu0 0.0
        %v1008 = vand.u32 %v756, 4294901760
        %v1009 = vsub.f32 %v756, %v1008
        %1010 = vmatmul.mubr.f32.gmra.mrb[0].mxu0 %v1009
        %v1011 = vpop.f32.mrb[0].mxu0
        %v1012 = vadd.f32 %v929, %v1011
        %v1013 = vpop.f32.mrb[0].mxu0
        %1014 = vdwg.mxu0
        %1015 = vmatprep.subr.mxu0 0.0
        %v1016 = vand.u32 %v239, 4294901760
        %1017 = vmatpush1.msra.mxu0 %v1016
        %1018 = vmatprep.subr.mxu0 0.0
        %v1019 = vand.u32 %v240, 4294901760
        %1020 = vmatpush1.msra.mxu0 %v1019
        %1021 = vmatprep.subr.mxu0 0.0
        %1022 = vmatpush1.msra.mxu0 0.0
        %1023 = vmatprep.subr.mxu0 0.0
        %1024 = vmatpush1.msra.mxu0 0.0
        %1025 = vmatprep.subr.mxu0 0.0
        %1026 = vmatpush1.msra.mxu0 0.0
        %1027 = vmatprep.subr.mxu0 0.0
        %1028 = vmatpush1.msra.mxu0 0.0
        %1029 = vmatprep.subr.mxu0 0.0
        %1030 = vmatpush1.msra.mxu0 0.0
        %1031 = vmatprep.subr.mxu0 0.0
        %1032 = vmatpush1.msra.mxu0 0.0
        %1033 = vmatprep.subr.mxu0 0.0
        %1034 = vmatpush1.msra.mxu0 0.0
        %1035 = vmatprep.subr.mxu0 0.0
        %1036 = vmatpush1.msra.mxu0 0.0
        %1037 = vmatprep.subr.mxu0 0.0
        %1038 = vmatpush1.msra.mxu0 0.0
        %1039 = vmatprep.subr.mxu0 0.0
        %1040 = vmatpush1.msra.mxu0 0.0
        %1041 = vmatprep.subr.mxu0 0.0
        %1042 = vmatpush1.msra.mxu0 0.0
        %1043 = vmatprep.subr.mxu0 0.0
        %1044 = vmatpush1.msra.mxu0 0.0
        %1045 = vmatprep.subr.mxu0 0.0
        %1046 = vmatpush1.msra.mxu0 0.0
        %1047 = vmatprep.subr.mxu0 0.0
        %1048 = vmatpush1.msra.mxu0 0.0
        %1049 = vmatprep.subr.mxu0 0.0
        %1050 = vmatpush1.msra.mxu0 0.0
        %1051 = vmatprep.subr.mxu0 0.0
        %1052 = vmatpush1.msra.mxu0 0.0
        %1053 = vmatprep.subr.mxu0 0.0
        %1054 = vmatpush1.msra.mxu0 0.0
        %1055 = vmatprep.subr.mxu0 0.0
        %1056 = vmatpush1.msra.mxu0 0.0
        %1057 = vmatprep.subr.mxu0 0.0
        %1058 = vmatpush1.msra.mxu0 0.0
        %1059 = vmatprep.subr.mxu0 0.0
        %1060 = vmatpush1.msra.mxu0 0.0
        %1061 = vmatprep.subr.mxu0 0.0
        %1062 = vmatpush1.msra.mxu0 0.0
        %1063 = vmatprep.subr.mxu0 0.0
        %1064 = vmatpush1.msra.mxu0 0.0
        %1065 = vmatprep.subr.mxu0 0.0
        %1066 = vmatpush1.msra.mxu0 0.0
        %1067 = vmatprep.subr.mxu0 0.0
        %1068 = vmatpush1.msra.mxu0 0.0
        %1069 = vmatprep.subr.mxu0 0.0
        %1070 = vmatpush1.msra.mxu0 0.0
        %1071 = vmatprep.subr.mxu0 0.0
        %1072 = vmatpush1.msra.mxu0 0.0
        %1073 = vmatprep.subr.mxu0 0.0
        %1074 = vmatpush1.msra.mxu0 0.0
        %1075 = vmatprep.subr.mxu0 0.0
        %1076 = vmatpush1.msra.mxu0 0.0
        %1077 = vmatprep.subr.mxu0 0.0
        %1078 = vmatpush1.msra.mxu0 0.0
        %1079 = vmatprep.subr.mxu0 0.0
        %1080 = vmatpush1.msra.mxu0 0.0
        %1081 = vmatprep.mubr.f32.mxu0 0.0
        %v1082 = vand.u32 %v753, 4294901760
        %v1083 = vsub.f32 %v753, %v1082
        %v1084 = vand.u32 %v1083, 4294901760
        %1085 = vmatmul.mubr.f32.gmra.mrb[0].mxu0 %v1084
        %v1086 = vpop.f32.mrb[0].mxu0
        %v1087 = vadd.f32 %v1005, %v1086
        %v1088 = vpop.f32.mrb[0].mxu0
        %1089 = vmatprep.mubr.f32.mxu0 0.0
        %v1090 = vand.u32 %v756, 4294901760
        %v1091 = vsub.f32 %v756, %v1090
        %v1092 = vand.u32 %v1091, 4294901760
        %1093 = vmatmul.mubr.f32.gmra.mrb[0].mxu0 %v1092
        %v1094 = vpop.f32.mrb[0].mxu0
        %v1095 = vadd.f32 %v1012, %v1094
        %v1096 = vpop.f32.mrb[0].mxu0
        %1097 = vdwg.mxu0
        %1098 = vmatprep.subr.mxu0 0.0
        %v1099 = vand.u32 %v239, 4294901760
        %v1100 = vsub.f32 %v239, %v1099
        %v1101 = vand.u32 %v1100, 4294901760
        %1102 = vmatpush1.msra.mxu0 %v1101
        %1103 = vmatprep.subr.mxu0 0.0
        %v1104 = vand.u32 %v240, 4294901760
        %v1105 = vsub.f32 %v240, %v1104
        %v1106 = vand.u32 %v1105, 4294901760
        %1107 = vmatpush1.msra.mxu0 %v1106
        %1108 = vmatprep.subr.mxu0 0.0
        %1109 = vmatpush1.msra.mxu0 0.0
        %1110 = vmatprep.subr.mxu0 0.0
        %1111 = vmatpush1.msra.mxu0 0.0
        %1112 = vmatprep.subr.mxu0 0.0
        %1113 = vmatpush1.msra.mxu0 0.0
        %1114 = vmatprep.subr.mxu0 0.0
        %1115 = vmatpush1.msra.mxu0 0.0
        %1116 = vmatprep.subr.mxu0 0.0
        %1117 = vmatpush1.msra.mxu0 0.0
        %1118 = vmatprep.subr.mxu0 0.0
        %1119 = vmatpush1.msra.mxu0 0.0
        %1120 = vmatprep.subr.mxu0 0.0
        %1121 = vmatpush1.msra.mxu0 0.0
        %1122 = vmatprep.subr.mxu0 0.0
        %1123 = vmatpush1.msra.mxu0 0.0
        %1124 = vmatprep.subr.mxu0 0.0
        %1125 = vmatpush1.msra.mxu0 0.0
        %1126 = vmatprep.subr.mxu0 0.0
        %1127 = vmatpush1.msra.mxu0 0.0
        %1128 = vmatprep.subr.mxu0 0.0
        %1129 = vmatpush1.msra.mxu0 0.0
        %1130 = vmatprep.subr.mxu0 0.0
        %1131 = vmatpush1.msra.mxu0 0.0
        %1132 = vmatprep.subr.mxu0 0.0
        %1133 = vmatpush1.msra.mxu0 0.0
        %1134 = vmatprep.subr.mxu0 0.0
        %1135 = vmatpush1.msra.mxu0 0.0
        %1136 = vmatprep.subr.mxu0 0.0
        %1137 = vmatpush1.msra.mxu0 0.0
        %1138 = vmatprep.subr.mxu0 0.0
        %1139 = vmatpush1.msra.mxu0 0.0
        %1140 = vmatprep.subr.mxu0 0.0
        %1141 = vmatpush1.msra.mxu0 0.0
        %1142 = vmatprep.subr.mxu0 0.0
        %1143 = vmatpush1.msra.mxu0 0.0
        %1144 = vmatprep.subr.mxu0 0.0
        %1145 = vmatpush1.msra.mxu0 0.0
        %1146 = vmatprep.subr.mxu0 0.0
        %1147 = vmatpush1.msra.mxu0 0.0
        %1148 = vmatprep.subr.mxu0 0.0
        %1149 = vmatpush1.msra.mxu0 0.0
        %1150 = vmatprep.subr.mxu0 0.0
        %1151 = vmatpush1.msra.mxu0 0.0
        %1152 = vmatprep.subr.mxu0 0.0
        %1153 = vmatpush1.msra.mxu0 0.0
        %1154 = vmatprep.subr.mxu0 0.0
        %1155 = vmatpush1.msra.mxu0 0.0
        %1156 = vmatprep.subr.mxu0 0.0
        %1157 = vmatpush1.msra.mxu0 0.0
        %1158 = vmatprep.subr.mxu0 0.0
        %1159 = vmatpush1.msra.mxu0 0.0
        %1160 = vmatprep.subr.mxu0 0.0
        %1161 = vmatpush1.msra.mxu0 0.0
        %1162 = vmatprep.subr.mxu0 0.0
        %1163 = vmatpush1.msra.mxu0 0.0
        %1164 = vmatprep.subr.mxu0 0.0
        %1165 = vmatpush1.msra.mxu0 0.0
        %1166 = vmatprep.subr.mxu0 0.0
        %1167 = vmatpush1.msra.mxu0 0.0
        %1168 = vmatprep.mubr.f32.mxu0 0.0
        %v1169 = vand.u32 %v753, 4294901760
        %1170 = vmatmul.mubr.f32.gmra.mrb[0].mxu0 %v1169
        %v1171 = vpop.f32.mrb[0].mxu0
        %v1172 = vadd.f32 %v1087, %v1171
        %v1173 = vpop.f32.mrb[0].mxu0
        %1174 = vmatprep.mubr.f32.mxu0 0.0
        %v1175 = vand.u32 %v756, 4294901760
        %1176 = vmatmul.mubr.f32.gmra.mrb[0].mxu0 %v1175
        %v1177 = vpop.f32.mrb[0].mxu0
        %v1178 = vadd.f32 %v1095, %v1177
        %v1179 = vpop.f32.mrb[0].mxu0
        %1180 = vdwg.mxu0
        %1181 = vmatprep.subr.mxu0 0.0
        %v1182 = vand.u32 %v239, 4294901760
        %1183 = vmatpush1.msra.mxu0 %v1182
        %1184 = vmatprep.subr.mxu0 0.0
        %v1185 = vand.u32 %v240, 4294901760
        %1186 = vmatpush1.msra.mxu0 %v1185
        %1187 = vmatprep.subr.mxu0 0.0
        %1188 = vmatpush1.msra.mxu0 0.0
        %1189 = vmatprep.subr.mxu0 0.0
        %1190 = vmatpush1.msra.mxu0 0.0
        %1191 = vmatprep.subr.mxu0 0.0
        %1192 = vmatpush1.msra.mxu0 0.0
        %1193 = vmatprep.subr.mxu0 0.0
        %1194 = vmatpush1.msra.mxu0 0.0
        %1195 = vmatprep.subr.mxu0 0.0
        %1196 = vmatpush1.msra.mxu0 0.0
        %1197 = vmatprep.subr.mxu0 0.0
        %1198 = vmatpush1.msra.mxu0 0.0
        %1199 = vmatprep.subr.mxu0 0.0
        %1200 = vmatpush1.msra.mxu0 0.0
        %1201 = vmatprep.subr.mxu0 0.0
        %1202 = vmatpush1.msra.mxu0 0.0
        %1203 = vmatprep.subr.mxu0 0.0
        %1204 = vmatpush1.msra.mxu0 0.0
        %1205 = vmatprep.subr.mxu0 0.0
        %1206 = vmatpush1.msra.mxu0 0.0
        %1207 = vmatprep.subr.mxu0 0.0
        %1208 = vmatpush1.msra.mxu0 0.0
        %1209 = vmatprep.subr.mxu0 0.0
        %1210 = vmatpush1.msra.mxu0 0.0
        %1211 = vmatprep.subr.mxu0 0.0
        %1212 = vmatpush1.msra.mxu0 0.0
        %1213 = vmatprep.subr.mxu0 0.0
        %1214 = vmatpush1.msra.mxu0 0.0
        %1215 = vmatprep.subr.mxu0 0.0
        %1216 = vmatpush1.msra.mxu0 0.0
        %1217 = vmatprep.subr.mxu0 0.0
        %1218 = vmatpush1.msra.mxu0 0.0
        %1219 = vmatprep.subr.mxu0 0.0
        %1220 = vmatpush1.msra.mxu0 0.0
        %1221 = vmatprep.subr.mxu0 0.0
        %1222 = vmatpush1.msra.mxu0 0.0
        %1223 = vmatprep.subr.mxu0 0.0
        %1224 = vmatpush1.msra.mxu0 0.0
        %1225 = vmatprep.subr.mxu0 0.0
        %1226 = vmatpush1.msra.mxu0 0.0
        %1227 = vmatprep.subr.mxu0 0.0
        %1228 = vmatpush1.msra.mxu0 0.0
        %1229 = vmatprep.subr.mxu0 0.0
        %1230 = vmatpush1.msra.mxu0 0.0
        %1231 = vmatprep.subr.mxu0 0.0
        %1232 = vmatpush1.msra.mxu0 0.0
        %1233 = vmatprep.subr.mxu0 0.0
        %1234 = vmatpush1.msra.mxu0 0.0
        %1235 = vmatprep.subr.mxu0 0.0
        %1236 = vmatpush1.msra.mxu0 0.0
        %1237 = vmatprep.subr.mxu0 0.0
        %1238 = vmatpush1.msra.mxu0 0.0
        %1239 = vmatprep.subr.mxu0 0.0
        %1240 = vmatpush1.msra.mxu0 0.0
        %1241 = vmatprep.subr.mxu0 0.0
        %1242 = vmatpush1.msra.mxu0 0.0
        %1243 = vmatprep.subr.mxu0 0.0
        %1244 = vmatpush1.msra.mxu0 0.0
        %1245 = vmatprep.subr.mxu0 0.0
        %1246 = vmatpush1.msra.mxu0 0.0
        %1247 = vmatprep.mubr.f32.mxu0 0.0
        %v1248 = vand.u32 %v753, 4294901760
        %1249 = vmatmul.mubr.f32.gmra.mrb[0].mxu0 %v1248
        %v1250 = vpop.f32.mrb[0].mxu0
        %v1251 = vadd.f32 %v1172, %v1250
        %v1252 = vpop.f32.mrb[0].mxu0
        %1253 = vmatprep.mubr.f32.mxu0 0.0
        %v1254 = vand.u32 %v756, 4294901760
        %1255 = vmatmul.mubr.f32.gmra.mrb[0].mxu0 %v1254
        %v1256 = vpop.f32.mrb[0].mxu0
        %v1257 = vadd.f32 %v1178, %v1256
        %v1258 = vpop.f32.mrb[0].mxu0
        %1259 = vdwg.mxu0
        %vm1260 = vcmask 27648
        %1261 = vst.msk [vmem:[%s234] sm:$0xf] %vm1260, %v1251
        %1263 = vrot.lane.b32.xlu0 %v1251, 124
        %v1264 = vpop.permute.xlu0 %1263
        %s1266 = scalar_lea.vmem %s234, 4 [#allocation8]
        %1267 = vst.msk [vmem:[%s1266] sm:$0xf] %vm1260, %v1264
        %1268 = vrot.lane.b32.xlu0 %v1251, 120
        %v1269 = vpop.permute.xlu0 %1268
        %s1271 = scalar_lea.vmem %s234, 8 [#allocation8]
        %1272 = vst.msk [vmem:[%s1271] sm:$0xf] %vm1260, %v1269
        %1273 = vrot.lane.b32.xlu0 %v1251, 116
        %v1274 = vpop.permute.xlu0 %1273
        %s1276 = scalar_lea.vmem %s234, 12 [#allocation8]
        %1277 = vst.msk [vmem:[%s1276] sm:$0xf] %vm1260, %v1274
        %s1278 = scalar_lea.vmem %s234, 16 [#allocation8]
        %vm1279 = vcmask 31748
        %1280 = vst.msk [vmem:[%s1278 - $0x4] sm:$0xf0] %vm1279, %v1251
        %s1281 = scalar_lea.vmem %s234, 20 [#allocation8]
        %1282 = vst.msk [vmem:[%s1281 - $0x4] sm:$0xf0] %vm1279, %v1264
        %s1283 = scalar_lea.vmem %s234, 24 [#allocation8]
        %1284 = vst.msk [vmem:[%s1283 - $0x4] sm:$0xf0] %vm1279, %v1269
        %s1285 = scalar_lea.vmem %s234, 28 [#allocation8]
        %1286 = vst.msk [vmem:[%s1285 - $0x4] sm:$0xf0] %vm1279, %v1274
        %s1287 = scalar_lea.vmem %s234, 32 [#allocation8]
        %1288 = vst.msk [vmem:[%s1287] sm:$0xf] %vm1260, %v1257
        %1290 = vrot.lane.b32.xlu0 %v1257, 124
        %v1291 = vpop.permute.xlu0 %1290
        %s1293 = scalar_lea.vmem %s234, 36 [#allocation8]
        %1294 = vst.msk [vmem:[%s1293] sm:$0xf] %vm1260, %v1291
        %1295 = vrot.lane.b32.xlu0 %v1257, 120
        %v1296 = vpop.permute.xlu0 %1295
        %s1298 = scalar_lea.vmem %s234, 40 [#allocation8]
        %1299 = vst.msk [vmem:[%s1298] sm:$0xf] %vm1260, %v1296
        %1300 = vrot.lane.b32.xlu0 %v1257, 116
        %v1301 = vpop.permute.xlu0 %1300
        %s1303 = scalar_lea.vmem %s234, 44 [#allocation8]
        %1304 = vst.msk [vmem:[%s1303] sm:$0xf] %vm1260, %v1301
        %s1305 = scalar_lea.vmem %s234, 48 [#allocation8]
        %1306 = vst.msk [vmem:[%s1305 - $0x4] sm:$0xf0] %vm1279, %v1257
        %s1307 = scalar_lea.vmem %s234, 52 [#allocation8]
        %1308 = vst.msk [vmem:[%s1307 - $0x4] sm:$0xf0] %vm1279, %v1291
        %s1309 = scalar_lea.vmem %s234, 56 [#allocation8]
        %1310 = vst.msk [vmem:[%s1309 - $0x4] sm:$0xf0] %vm1279, %v1296
        %s1311 = scalar_lea.vmem %s234, 60 [#allocation8]
        %1312 = vst.msk [vmem:[%s1311 - $0x4] sm:$0xf0] %vm1279, %v1301
        %s1313 = scalar_lea.vmem %s212, 16 [#allocation7]
        %v1314 = vld [vmem:[%s1313] sm:$0xff]
        %v1315 = vld [vmem:[%s1313 + $0x8] sm:$0xff]
        %1316 = vmatprep.subr.mxu0 0.0
        %v1317 = vand.u32 %v1314, 4294901760
        %1318 = vmatpush1.msra.mxu0 %v1317
        %1319 = vmatprep.subr.mxu0 0.0
        %v1320 = vand.u32 %v1315, 4294901760
        %1321 = vmatpush1.msra.mxu0 %v1320
        %1322 = vmatprep.subr.mxu0 0.0
        %1323 = vmatpush1.msra.mxu0 0.0
        %1324 = vmatprep.subr.mxu0 0.0
        %1325 = vmatpush1.msra.mxu0 0.0
        %1326 = vmatprep.subr.mxu0 0.0
        %1327 = vmatpush1.msra.mxu0 0.0
        %1328 = vmatprep.subr.mxu0 0.0
        %1329 = vmatpush1.msra.mxu0 0.0
        %1330 = vmatprep.subr.mxu0 0.0
        %1331 = vmatpush1.msra.mxu0 0.0
        %1332 = vmatprep.subr.mxu0 0.0
        %1333 = vmatpush1.msra.mxu0 0.0
        %1334 = vmatprep.subr.mxu0 0.0
        %1335 = vmatpush1.msra.mxu0 0.0
        %1336 = vmatprep.subr.mxu0 0.0
        %1337 = vmatpush1.msra.mxu0 0.0
        %1338 = vmatprep.subr.mxu0 0.0
        %1339 = vmatpush1.msra.mxu0 0.0
        %1340 = vmatprep.subr.mxu0 0.0
        %1341 = vmatpush1.msra.mxu0 0.0
        %1342 = vmatprep.subr.mxu0 0.0
        %1343 = vmatpush1.msra.mxu0 0.0
        %1344 = vmatprep.subr.mxu0 0.0
        %1345 = vmatpush1.msra.mxu0 0.0
        %1346 = vmatprep.subr.mxu0 0.0
        %1347 = vmatpush1.msra.mxu0 0.0
        %1348 = vmatprep.subr.mxu0 0.0
        %1349 = vmatpush1.msra.mxu0 0.0
        %1350 = vmatprep.subr.mxu0 0.0
        %1351 = vmatpush1.msra.mxu0 0.0
        %1352 = vmatprep.subr.mxu0 0.0
        %1353 = vmatpush1.msra.mxu0 0.0
        %1354 = vmatprep.subr.mxu0 0.0
        %1355 = vmatpush1.msra.mxu0 0.0
        %1356 = vmatprep.subr.mxu0 0.0
        %1357 = vmatpush1.msra.mxu0 0.0
        %1358 = vmatprep.subr.mxu0 0.0
        %1359 = vmatpush1.msra.mxu0 0.0
        %1360 = vmatprep.subr.mxu0 0.0
        %1361 = vmatpush1.msra.mxu0 0.0
        %1362 = vmatprep.subr.mxu0 0.0
        %1363 = vmatpush1.msra.mxu0 0.0
        %1364 = vmatprep.subr.mxu0 0.0
        %1365 = vmatpush1.msra.mxu0 0.0
        %1366 = vmatprep.subr.mxu0 0.0
        %1367 = vmatpush1.msra.mxu0 0.0
        %1368 = vmatprep.subr.mxu0 0.0
        %1369 = vmatpush1.msra.mxu0 0.0
        %1370 = vmatprep.subr.mxu0 0.0
        %1371 = vmatpush1.msra.mxu0 0.0
        %1372 = vmatprep.subr.mxu0 0.0
        %1373 = vmatpush1.msra.mxu0 0.0
        %1374 = vmatprep.subr.mxu0 0.0
        %1375 = vmatpush1.msra.mxu0 0.0
        %1376 = vmatprep.subr.mxu0 0.0
        %1377 = vmatpush1.msra.mxu0 0.0
        %1378 = vmatprep.subr.mxu0 0.0
        %1379 = vmatpush1.msra.mxu0 0.0
        %1380 = vmatprep.subr.mxu0 0.0
        %1381 = vmatpush1.msra.mxu0 0.0
        %1382 = vmatprep.mubr.f32.mxu0 0.0
        %v1383 = vand.u32 %v245, 4294901760
        %v1384 = vsub.f32 %v245, %v1383
        %v1385 = vand.u32 %v1384, 4294901760
        %v1386 = vsub.f32 %v1384, %v1385
        %v1387 = vand.u32 %v1386, 4294901760
        %1388 = vmatmul.mubr.f32.gmra.mrb[0].mxu0 %v1387
        %v1389 = vpop.f32.mrb[0].mxu0
        %v1390 = vadd.f32 0.0, %v1389
        %v1391 = vpop.f32.mrb[0].mxu0
        %1392 = vmatprep.mubr.f32.mxu0 0.0
        %v1393 = vand.u32 %v248, 4294901760
        %v1394 = vsub.f32 %v248, %v1393
        %v1395 = vand.u32 %v1394, 4294901760
        %v1396 = vsub.f32 %v1394, %v1395
        %v1397 = vand.u32 %v1396, 4294901760
        %1398 = vmatmul.mubr.f32.gmra.mrb[0].mxu0 %v1397
        %v1399 = vpop.f32.mrb[0].mxu0
        %v1400 = vadd.f32 0.0, %v1399
        %v1401 = vpop.f32.mrb[0].mxu0
        %1402 = vdwg.mxu0
        %1403 = vmatprep.subr.mxu0 0.0
        %v1404 = vand.u32 %v1314, 4294901760
        %v1405 = vsub.f32 %v1314, %v1404
        %v1406 = vand.u32 %v1405, 4294901760
        %v1407 = vsub.f32 %v1405, %v1406
        %v1408 = vand.u32 %v1407, 4294901760
        %1409 = vmatpush1.msra.mxu0 %v1408
        %1410 = vmatprep.subr.mxu0 0.0
        %v1411 = vand.u32 %v1315, 4294901760
        %v1412 = vsub.f32 %v1315, %v1411
        %v1413 = vand.u32 %v1412, 4294901760
        %v1414 = vsub.f32 %v1412, %v1413
        %v1415 = vand.u32 %v1414, 4294901760
        %1416 = vmatpush1.msra.mxu0 %v1415
        %1417 = vmatprep.subr.mxu0 0.0
        %1418 = vmatpush1.msra.mxu0 0.0
        %1419 = vmatprep.subr.mxu0 0.0
        %1420 = vmatpush1.msra.mxu0 0.0
        %1421 = vmatprep.subr.mxu0 0.0
        %1422 = vmatpush1.msra.mxu0 0.0
        %1423 = vmatprep.subr.mxu0 0.0
        %1424 = vmatpush1.msra.mxu0 0.0
        %1425 = vmatprep.subr.mxu0 0.0
        %1426 = vmatpush1.msra.mxu0 0.0
        %1427 = vmatprep.subr.mxu0 0.0
        %1428 = vmatpush1.msra.mxu0 0.0
        %1429 = vmatprep.subr.mxu0 0.0
        %1430 = vmatpush1.msra.mxu0 0.0
        %1431 = vmatprep.subr.mxu0 0.0
        %1432 = vmatpush1.msra.mxu0 0.0
        %1433 = vmatprep.subr.mxu0 0.0
        %1434 = vmatpush1.msra.mxu0 0.0
        %1435 = vmatprep.subr.mxu0 0.0
        %1436 = vmatpush1.msra.mxu0 0.0
        %1437 = vmatprep.subr.mxu0 0.0
        %1438 = vmatpush1.msra.mxu0 0.0
        %1439 = vmatprep.subr.mxu0 0.0
        %1440 = vmatpush1.msra.mxu0 0.0
        %1441 = vmatprep.subr.mxu0 0.0
        %1442 = vmatpush1.msra.mxu0 0.0
        %1443 = vmatprep.subr.mxu0 0.0
        %1444 = vmatpush1.msra.mxu0 0.0
        %1445 = vmatprep.subr.mxu0 0.0
        %1446 = vmatpush1.msra.mxu0 0.0
        %1447 = vmatprep.subr.mxu0 0.0
        %1448 = vmatpush1.msra.mxu0 0.0
        %1449 = vmatprep.subr.mxu0 0.0
        %1450 = vmatpush1.msra.mxu0 0.0
        %1451 = vmatprep.subr.mxu0 0.0
        %1452 = vmatpush1.msra.mxu0 0.0
        %1453 = vmatprep.subr.mxu0 0.0
        %1454 = vmatpush1.msra.mxu0 0.0
        %1455 = vmatprep.subr.mxu0 0.0
        %1456 = vmatpush1.msra.mxu0 0.0
        %1457 = vmatprep.subr.mxu0 0.0
        %1458 = vmatpush1.msra.mxu0 0.0
        %1459 = vmatprep.subr.mxu0 0.0
        %1460 = vmatpush1.msra.mxu0 0.0
        %1461 = vmatprep.subr.mxu0 0.0
        %1462 = vmatpush1.msra.mxu0 0.0
        %1463 = vmatprep.subr.mxu0 0.0
        %1464 = vmatpush1.msra.mxu0 0.0
        %1465 = vmatprep.subr.mxu0 0.0
        %1466 = vmatpush1.msra.mxu0 0.0
        %1467 = vmatprep.subr.mxu0 0.0
        %1468 = vmatpush1.msra.mxu0 0.0
        %1469 = vmatprep.subr.mxu0 0.0
        %1470 = vmatpush1.msra.mxu0 0.0
        %1471 = vmatprep.subr.mxu0 0.0
        %1472 = vmatpush1.msra.mxu0 0.0
        %1473 = vmatprep.subr.mxu0 0.0
        %1474 = vmatpush1.msra.mxu0 0.0
        %1475 = vmatprep.subr.mxu0 0.0
        %1476 = vmatpush1.msra.mxu0 0.0
        %1477 = vmatprep.mubr.f32.mxu0 0.0
        %v1478 = vand.u32 %v245, 4294901760
        %1479 = vmatmul.mubr.f32.gmra.mrb[0].mxu0 %v1478
        %v1480 = vpop.f32.mrb[0].mxu0
        %v1481 = vadd.f32 %v1390, %v1480
        %v1482 = vpop.f32.mrb[0].mxu0
        %1483 = vmatprep.mubr.f32.mxu0 0.0
        %v1484 = vand.u32 %v248, 4294901760
        %1485 = vmatmul.mubr.f32.gmra.mrb[0].mxu0 %v1484
        %v1486 = vpop.f32.mrb[0].mxu0
        %v1487 = vadd.f32 %v1400, %v1486
        %v1488 = vpop.f32.mrb[0].mxu0
        %1489 = vdwg.mxu0
        %1490 = vmatprep.subr.mxu0 0.0
        %v1491 = vand.u32 %v1314, 4294901760
        %v1492 = vsub.f32 %v1314, %v1491
        %1493 = vmatpush1.msra.mxu0 %v1492
        %1494 = vmatprep.subr.mxu0 0.0
        %v1495 = vand.u32 %v1315, 4294901760
        %v1496 = vsub.f32 %v1315, %v1495
        %1497 = vmatpush1.msra.mxu0 %v1496
        %1498 = vmatprep.subr.mxu0 0.0
        %1499 = vmatpush1.msra.mxu0 0.0
        %1500 = vmatprep.subr.mxu0 0.0
        %1501 = vmatpush1.msra.mxu0 0.0
        %1502 = vmatprep.subr.mxu0 0.0
        %1503 = vmatpush1.msra.mxu0 0.0
        %1504 = vmatprep.subr.mxu0 0.0
        %1505 = vmatpush1.msra.mxu0 0.0
        %1506 = vmatprep.subr.mxu0 0.0
        %1507 = vmatpush1.msra.mxu0 0.0
        %1508 = vmatprep.subr.mxu0 0.0
        %1509 = vmatpush1.msra.mxu0 0.0
        %1510 = vmatprep.subr.mxu0 0.0
        %1511 = vmatpush1.msra.mxu0 0.0
        %1512 = vmatprep.subr.mxu0 0.0
        %1513 = vmatpush1.msra.mxu0 0.0
        %1514 = vmatprep.subr.mxu0 0.0
        %1515 = vmatpush1.msra.mxu0 0.0
        %1516 = vmatprep.subr.mxu0 0.0
        %1517 = vmatpush1.msra.mxu0 0.0
        %1518 = vmatprep.subr.mxu0 0.0
        %1519 = vmatpush1.msra.mxu0 0.0
        %1520 = vmatprep.subr.mxu0 0.0
        %1521 = vmatpush1.msra.mxu0 0.0
        %1522 = vmatprep.subr.mxu0 0.0
        %1523 = vmatpush1.msra.mxu0 0.0
        %1524 = vmatprep.subr.mxu0 0.0
        %1525 = vmatpush1.msra.mxu0 0.0
        %1526 = vmatprep.subr.mxu0 0.0
        %1527 = vmatpush1.msra.mxu0 0.0
        %1528 = vmatprep.subr.mxu0 0.0
        %1529 = vmatpush1.msra.mxu0 0.0
        %1530 = vmatprep.subr.mxu0 0.0
        %1531 = vmatpush1.msra.mxu0 0.0
        %1532 = vmatprep.subr.mxu0 0.0
        %1533 = vmatpush1.msra.mxu0 0.0
        %1534 = vmatprep.subr.mxu0 0.0
        %1535 = vmatpush1.msra.mxu0 0.0
        %1536 = vmatprep.subr.mxu0 0.0
        %1537 = vmatpush1.msra.mxu0 0.0
        %1538 = vmatprep.subr.mxu0 0.0
        %1539 = vmatpush1.msra.mxu0 0.0
        %1540 = vmatprep.subr.mxu0 0.0
        %1541 = vmatpush1.msra.mxu0 0.0
        %1542 = vmatprep.subr.mxu0 0.0
        %1543 = vmatpush1.msra.mxu0 0.0
        %1544 = vmatprep.subr.mxu0 0.0
        %1545 = vmatpush1.msra.mxu0 0.0
        %1546 = vmatprep.subr.mxu0 0.0
        %1547 = vmatpush1.msra.mxu0 0.0
        %1548 = vmatprep.subr.mxu0 0.0
        %1549 = vmatpush1.msra.mxu0 0.0
        %1550 = vmatprep.subr.mxu0 0.0
        %1551 = vmatpush1.msra.mxu0 0.0
        %1552 = vmatprep.subr.mxu0 0.0
        %1553 = vmatpush1.msra.mxu0 0.0
        %1554 = vmatprep.subr.mxu0 0.0
        %1555 = vmatpush1.msra.mxu0 0.0
        %1556 = vmatprep.subr.mxu0 0.0
        %1557 = vmatpush1.msra.mxu0 0.0
        %1558 = vmatprep.mubr.f32.mxu0 0.0
        %v1559 = vand.u32 %v245, 4294901760
        %v1560 = vsub.f32 %v245, %v1559
        %1561 = vmatmul.mubr.f32.gmra.mrb[0].mxu0 %v1560
        %v1562 = vpop.f32.mrb[0].mxu0
        %v1563 = vadd.f32 %v1481, %v1562
        %v1564 = vpop.f32.mrb[0].mxu0
        %1565 = vmatprep.mubr.f32.mxu0 0.0
        %v1566 = vand.u32 %v248, 4294901760
        %v1567 = vsub.f32 %v248, %v1566
        %1568 = vmatmul.mubr.f32.gmra.mrb[0].mxu0 %v1567
        %v1569 = vpop.f32.mrb[0].mxu0
        %v1570 = vadd.f32 %v1487, %v1569
        %v1571 = vpop.f32.mrb[0].mxu0
        %1572 = vdwg.mxu0
        %1573 = vmatprep.subr.mxu0 0.0
        %v1574 = vand.u32 %v1314, 4294901760
        %1575 = vmatpush1.msra.mxu0 %v1574
        %1576 = vmatprep.subr.mxu0 0.0
        %v1577 = vand.u32 %v1315, 4294901760
        %1578 = vmatpush1.msra.mxu0 %v1577
        %1579 = vmatprep.subr.mxu0 0.0
        %1580 = vmatpush1.msra.mxu0 0.0
        %1581 = vmatprep.subr.mxu0 0.0
        %1582 = vmatpush1.msra.mxu0 0.0
        %1583 = vmatprep.subr.mxu0 0.0
        %1584 = vmatpush1.msra.mxu0 0.0
        %1585 = vmatprep.subr.mxu0 0.0
        %1586 = vmatpush1.msra.mxu0 0.0
        %1587 = vmatprep.subr.mxu0 0.0
        %1588 = vmatpush1.msra.mxu0 0.0
        %1589 = vmatprep.subr.mxu0 0.0
        %1590 = vmatpush1.msra.mxu0 0.0
        %1591 = vmatprep.subr.mxu0 0.0
        %1592 = vmatpush1.msra.mxu0 0.0
        %1593 = vmatprep.subr.mxu0 0.0
        %1594 = vmatpush1.msra.mxu0 0.0
        %1595 = vmatprep.subr.mxu0 0.0
        %1596 = vmatpush1.msra.mxu0 0.0
        %1597 = vmatprep.subr.mxu0 0.0
        %1598 = vmatpush1.msra.mxu0 0.0
        %1599 = vmatprep.subr.mxu0 0.0
        %1600 = vmatpush1.msra.mxu0 0.0
        %1601 = vmatprep.subr.mxu0 0.0
        %1602 = vmatpush1.msra.mxu0 0.0
        %1603 = vmatprep.subr.mxu0 0.0
        %1604 = vmatpush1.msra.mxu0 0.0
        %1605 = vmatprep.subr.mxu0 0.0
        %1606 = vmatpush1.msra.mxu0 0.0
        %1607 = vmatprep.subr.mxu0 0.0
        %1608 = vmatpush1.msra.mxu0 0.0
        %1609 = vmatprep.subr.mxu0 0.0
        %1610 = vmatpush1.msra.mxu0 0.0
        %1611 = vmatprep.subr.mxu0 0.0
        %1612 = vmatpush1.msra.mxu0 0.0
        %1613 = vmatprep.subr.mxu0 0.0
        %1614 = vmatpush1.msra.mxu0 0.0
        %1615 = vmatprep.subr.mxu0 0.0
        %1616 = vmatpush1.msra.mxu0 0.0
        %1617 = vmatprep.subr.mxu0 0.0
        %1618 = vmatpush1.msra.mxu0 0.0
        %1619 = vmatprep.subr.mxu0 0.0
        %1620 = vmatpush1.msra.mxu0 0.0
        %1621 = vmatprep.subr.mxu0 0.0
        %1622 = vmatpush1.msra.mxu0 0.0
        %1623 = vmatprep.subr.mxu0 0.0
        %1624 = vmatpush1.msra.mxu0 0.0
        %1625 = vmatprep.subr.mxu0 0.0
        %1626 = vmatpush1.msra.mxu0 0.0
        %1627 = vmatprep.subr.mxu0 0.0
        %1628 = vmatpush1.msra.mxu0 0.0
        %1629 = vmatprep.subr.mxu0 0.0
        %1630 = vmatpush1.msra.mxu0 0.0
        %1631 = vmatprep.subr.mxu0 0.0
        %1632 = vmatpush1.msra.mxu0 0.0
        %1633 = vmatprep.subr.mxu0 0.0
        %1634 = vmatpush1.msra.mxu0 0.0
        %1635 = vmatprep.subr.mxu0 0.0
        %1636 = vmatpush1.msra.mxu0 0.0
        %1637 = vmatprep.subr.mxu0 0.0
        %1638 = vmatpush1.msra.mxu0 0.0
        %1639 = vmatprep.mubr.f32.mxu0 0.0
        %v1640 = vand.u32 %v245, 4294901760
        %v1641 = vsub.f32 %v245, %v1640
        %v1642 = vand.u32 %v1641, 4294901760
        %1643 = vmatmul.mubr.f32.gmra.mrb[0].mxu0 %v1642
        %v1644 = vpop.f32.mrb[0].mxu0
        %v1645 = vadd.f32 %v1563, %v1644
        %v1646 = vpop.f32.mrb[0].mxu0
        %1647 = vmatprep.mubr.f32.mxu0 0.0
        %v1648 = vand.u32 %v248, 4294901760
        %v1649 = vsub.f32 %v248, %v1648
        %v1650 = vand.u32 %v1649, 4294901760
        %1651 = vmatmul.mubr.f32.gmra.mrb[0].mxu0 %v1650
        %v1652 = vpop.f32.mrb[0].mxu0
        %v1653 = vadd.f32 %v1570, %v1652
        %v1654 = vpop.f32.mrb[0].mxu0
        %1655 = vdwg.mxu0
        %1656 = vmatprep.subr.mxu0 0.0
        %v1657 = vand.u32 %v1314, 4294901760
        %v1658 = vsub.f32 %v1314, %v1657
        %v1659 = vand.u32 %v1658, 4294901760
        %1660 = vmatpush1.msra.mxu0 %v1659
        %1661 = vmatprep.subr.mxu0 0.0
        %v1662 = vand.u32 %v1315, 4294901760
        %v1663 = vsub.f32 %v1315, %v1662
        %v1664 = vand.u32 %v1663, 4294901760
        %1665 = vmatpush1.msra.mxu0 %v1664
        %1666 = vmatprep.subr.mxu0 0.0
        %1667 = vmatpush1.msra.mxu0 0.0
        %1668 = vmatprep.subr.mxu0 0.0
        %1669 = vmatpush1.msra.mxu0 0.0
        %1670 = vmatprep.subr.mxu0 0.0
        %1671 = vmatpush1.msra.mxu0 0.0
        %1672 = vmatprep.subr.mxu0 0.0
        %1673 = vmatpush1.msra.mxu0 0.0
        %1674 = vmatprep.subr.mxu0 0.0
        %1675 = vmatpush1.msra.mxu0 0.0
        %1676 = vmatprep.subr.mxu0 0.0
        %1677 = vmatpush1.msra.mxu0 0.0
        %1678 = vmatprep.subr.mxu0 0.0
        %1679 = vmatpush1.msra.mxu0 0.0
        %1680 = vmatprep.subr.mxu0 0.0
        %1681 = vmatpush1.msra.mxu0 0.0
        %1682 = vmatprep.subr.mxu0 0.0
        %1683 = vmatpush1.msra.mxu0 0.0
        %1684 = vmatprep.subr.mxu0 0.0
        %1685 = vmatpush1.msra.mxu0 0.0
        %1686 = vmatprep.subr.mxu0 0.0
        %1687 = vmatpush1.msra.mxu0 0.0
        %1688 = vmatprep.subr.mxu0 0.0
        %1689 = vmatpush1.msra.mxu0 0.0
        %1690 = vmatprep.subr.mxu0 0.0
        %1691 = vmatpush1.msra.mxu0 0.0
        %1692 = vmatprep.subr.mxu0 0.0
        %1693 = vmatpush1.msra.mxu0 0.0
        %1694 = vmatprep.subr.mxu0 0.0
        %1695 = vmatpush1.msra.mxu0 0.0
        %1696 = vmatprep.subr.mxu0 0.0
        %1697 = vmatpush1.msra.mxu0 0.0
        %1698 = vmatprep.subr.mxu0 0.0
        %1699 = vmatpush1.msra.mxu0 0.0
        %1700 = vmatprep.subr.mxu0 0.0
        %1701 = vmatpush1.msra.mxu0 0.0
        %1702 = vmatprep.subr.mxu0 0.0
        %1703 = vmatpush1.msra.mxu0 0.0
        %1704 = vmatprep.subr.mxu0 0.0
        %1705 = vmatpush1.msra.mxu0 0.0
        %1706 = vmatprep.subr.mxu0 0.0
        %1707 = vmatpush1.msra.mxu0 0.0
        %1708 = vmatprep.subr.mxu0 0.0
        %1709 = vmatpush1.msra.mxu0 0.0
        %1710 = vmatprep.subr.mxu0 0.0
        %1711 = vmatpush1.msra.mxu0 0.0
        %1712 = vmatprep.subr.mxu0 0.0
        %1713 = vmatpush1.msra.mxu0 0.0
        %1714 = vmatprep.subr.mxu0 0.0
        %1715 = vmatpush1.msra.mxu0 0.0
        %1716 = vmatprep.subr.mxu0 0.0
        %1717 = vmatpush1.msra.mxu0 0.0
        %1718 = vmatprep.subr.mxu0 0.0
        %1719 = vmatpush1.msra.mxu0 0.0
        %1720 = vmatprep.subr.mxu0 0.0
        %1721 = vmatpush1.msra.mxu0 0.0
        %1722 = vmatprep.subr.mxu0 0.0
        %1723 = vmatpush1.msra.mxu0 0.0
        %1724 = vmatprep.subr.mxu0 0.0
        %1725 = vmatpush1.msra.mxu0 0.0
        %1726 = vmatprep.mubr.f32.mxu0 0.0
        %v1727 = vand.u32 %v245, 4294901760
        %1728 = vmatmul.mubr.f32.gmra.mrb[0].mxu0 %v1727
        %v1729 = vpop.f32.mrb[0].mxu0
        %v1730 = vadd.f32 %v1645, %v1729
        %v1731 = vpop.f32.mrb[0].mxu0
        %1732 = vmatprep.mubr.f32.mxu0 0.0
        %v1733 = vand.u32 %v248, 4294901760
        %1734 = vmatmul.mubr.f32.gmra.mrb[0].mxu0 %v1733
        %v1735 = vpop.f32.mrb[0].mxu0
        %v1736 = vadd.f32 %v1653, %v1735
        %v1737 = vpop.f32.mrb[0].mxu0
        %1738 = vdwg.mxu0
        %1739 = vmatprep.subr.mxu0 0.0
        %v1740 = vand.u32 %v1314, 4294901760
        %1741 = vmatpush1.msra.mxu0 %v1740
        %1742 = vmatprep.subr.mxu0 0.0
        %v1743 = vand.u32 %v1315, 4294901760
        %1744 = vmatpush1.msra.mxu0 %v1743
        %1745 = vmatprep.subr.mxu0 0.0
        %1746 = vmatpush1.msra.mxu0 0.0
        %1747 = vmatprep.subr.mxu0 0.0
        %1748 = vmatpush1.msra.mxu0 0.0
        %1749 = vmatprep.subr.mxu0 0.0
        %1750 = vmatpush1.msra.mxu0 0.0
        %1751 = vmatprep.subr.mxu0 0.0
        %1752 = vmatpush1.msra.mxu0 0.0
        %1753 = vmatprep.subr.mxu0 0.0
        %1754 = vmatpush1.msra.mxu0 0.0
        %1755 = vmatprep.subr.mxu0 0.0
        %1756 = vmatpush1.msra.mxu0 0.0
        %1757 = vmatprep.subr.mxu0 0.0
        %1758 = vmatpush1.msra.mxu0 0.0
        %1759 = vmatprep.subr.mxu0 0.0
        %1760 = vmatpush1.msra.mxu0 0.0
        %1761 = vmatprep.subr.mxu0 0.0
        %1762 = vmatpush1.msra.mxu0 0.0
        %1763 = vmatprep.subr.mxu0 0.0
        %1764 = vmatpush1.msra.mxu0 0.0
        %1765 = vmatprep.subr.mxu0 0.0
        %1766 = vmatpush1.msra.mxu0 0.0
        %1767 = vmatprep.subr.mxu0 0.0
        %1768 = vmatpush1.msra.mxu0 0.0
        %1769 = vmatprep.subr.mxu0 0.0
        %1770 = vmatpush1.msra.mxu0 0.0
        %1771 = vmatprep.subr.mxu0 0.0
        %1772 = vmatpush1.msra.mxu0 0.0
        %1773 = vmatprep.subr.mxu0 0.0
        %1774 = vmatpush1.msra.mxu0 0.0
        %1775 = vmatprep.subr.mxu0 0.0
        %1776 = vmatpush1.msra.mxu0 0.0
        %1777 = vmatprep.subr.mxu0 0.0
        %1778 = vmatpush1.msra.mxu0 0.0
        %1779 = vmatprep.subr.mxu0 0.0
        %1780 = vmatpush1.msra.mxu0 0.0
        %1781 = vmatprep.subr.mxu0 0.0
        %1782 = vmatpush1.msra.mxu0 0.0
        %1783 = vmatprep.subr.mxu0 0.0
        %1784 = vmatpush1.msra.mxu0 0.0
        %1785 = vmatprep.subr.mxu0 0.0
        %1786 = vmatpush1.msra.mxu0 0.0
        %1787 = vmatprep.subr.mxu0 0.0
        %1788 = vmatpush1.msra.mxu0 0.0
        %1789 = vmatprep.subr.mxu0 0.0
        %1790 = vmatpush1.msra.mxu0 0.0
        %1791 = vmatprep.subr.mxu0 0.0
        %1792 = vmatpush1.msra.mxu0 0.0
        %1793 = vmatprep.subr.mxu0 0.0
        %1794 = vmatpush1.msra.mxu0 0.0
        %1795 = vmatprep.subr.mxu0 0.0
        %1796 = vmatpush1.msra.mxu0 0.0
        %1797 = vmatprep.subr.mxu0 0.0
        %1798 = vmatpush1.msra.mxu0 0.0
        %1799 = vmatprep.subr.mxu0 0.0
        %1800 = vmatpush1.msra.mxu0 0.0
        %1801 = vmatprep.subr.mxu0 0.0
        %1802 = vmatpush1.msra.mxu0 0.0
        %1803 = vmatprep.subr.mxu0 0.0
        %1804 = vmatpush1.msra.mxu0 0.0
        %1805 = vmatprep.mubr.f32.mxu0 0.0
        %v1806 = vand.u32 %v245, 4294901760
        %1807 = vmatmul.mubr.f32.gmra.mrb[0].mxu0 %v1806
        %v1808 = vpop.f32.mrb[0].mxu0
        %v1809 = vadd.f32 %v1730, %v1808
        %v1810 = vpop.f32.mrb[0].mxu0
        %1811 = vmatprep.mubr.f32.mxu0 0.0
        %v1812 = vand.u32 %v248, 4294901760
        %1813 = vmatmul.mubr.f32.gmra.mrb[0].mxu0 %v1812
        %v1814 = vpop.f32.mrb[0].mxu0
        %v1815 = vadd.f32 %v1736, %v1814
        %v1816 = vpop.f32.mrb[0].mxu0
        %1817 = vdwg.mxu0
        %v1819 = vsel %vm243, %v1809, 0
        %v1822 = vsel %vm243, %v1815, 0
        %1824 = vmatprep.subr.mxu0 0.0
        %v1825 = vand.u32 %v239, 4294901760
        %1826 = vmatpush1.msra.mxu0 %v1825
        %1827 = vmatprep.subr.mxu0 0.0
        %v1828 = vand.u32 %v240, 4294901760
        %1829 = vmatpush1.msra.mxu0 %v1828
        %1830 = vmatprep.subr.mxu0 0.0
        %1831 = vmatpush1.msra.mxu0 0.0
        %1832 = vmatprep.subr.mxu0 0.0
        %1833 = vmatpush1.msra.mxu0 0.0
        %1834 = vmatprep.subr.mxu0 0.0
        %1835 = vmatpush1.msra.mxu0 0.0
        %1836 = vmatprep.subr.mxu0 0.0
        %1837 = vmatpush1.msra.mxu0 0.0
        %1838 = vmatprep.subr.mxu0 0.0
        %1839 = vmatpush1.msra.mxu0 0.0
        %1840 = vmatprep.subr.mxu0 0.0
        %1841 = vmatpush1.msra.mxu0 0.0
        %1842 = vmatprep.subr.mxu0 0.0
        %1843 = vmatpush1.msra.mxu0 0.0
        %1844 = vmatprep.subr.mxu0 0.0
        %1845 = vmatpush1.msra.mxu0 0.0
        %1846 = vmatprep.subr.mxu0 0.0
        %1847 = vmatpush1.msra.mxu0 0.0
        %1848 = vmatprep.subr.mxu0 0.0
        %1849 = vmatpush1.msra.mxu0 0.0
        %1850 = vmatprep.subr.mxu0 0.0
        %1851 = vmatpush1.msra.mxu0 0.0
        %1852 = vmatprep.subr.mxu0 0.0
        %1853 = vmatpush1.msra.mxu0 0.0
        %1854 = vmatprep.subr.mxu0 0.0
        %1855 = vmatpush1.msra.mxu0 0.0
        %1856 = vmatprep.subr.mxu0 0.0
        %1857 = vmatpush1.msra.mxu0 0.0
        %1858 = vmatprep.subr.mxu0 0.0
        %1859 = vmatpush1.msra.mxu0 0.0
        %1860 = vmatprep.subr.mxu0 0.0
        %1861 = vmatpush1.msra.mxu0 0.0
        %1862 = vmatprep.subr.mxu0 0.0
        %1863 = vmatpush1.msra.mxu0 0.0
        %1864 = vmatprep.subr.mxu0 0.0
        %1865 = vmatpush1.msra.mxu0 0.0
        %1866 = vmatprep.subr.mxu0 0.0
        %1867 = vmatpush1.msra.mxu0 0.0
        %1868 = vmatprep.subr.mxu0 0.0
        %1869 = vmatpush1.msra.mxu0 0.0
        %1870 = vmatprep.subr.mxu0 0.0
        %1871 = vmatpush1.msra.mxu0 0.0
        %1872 = vmatprep.subr.mxu0 0.0
        %1873 = vmatpush1.msra.mxu0 0.0
        %1874 = vmatprep.subr.mxu0 0.0
        %1875 = vmatpush1.msra.mxu0 0.0
        %1876 = vmatprep.subr.mxu0 0.0
        %1877 = vmatpush1.msra.mxu0 0.0
        %1878 = vmatprep.subr.mxu0 0.0
        %1879 = vmatpush1.msra.mxu0 0.0
        %1880 = vmatprep.subr.mxu0 0.0
        %1881 = vmatpush1.msra.mxu0 0.0
        %1882 = vmatprep.subr.mxu0 0.0
        %1883 = vmatpush1.msra.mxu0 0.0
        %1884 = vmatprep.subr.mxu0 0.0
        %1885 = vmatpush1.msra.mxu0 0.0
        %1886 = vmatprep.subr.mxu0 0.0
        %1887 = vmatpush1.msra.mxu0 0.0
        %1888 = vmatprep.subr.mxu0 0.0
        %1889 = vmatpush1.msra.mxu0 0.0
        %1890 = vmatprep.mubr.f32.mxu0 0.0
        %v1891 = vand.u32 %v1819, 4294901760
        %v1892 = vsub.f32 %v1819, %v1891
        %v1893 = vand.u32 %v1892, 4294901760
        %v1894 = vsub.f32 %v1892, %v1893
        %v1895 = vand.u32 %v1894, 4294901760
        %1896 = vmatmul.mubr.f32.gmra.mrb[0].mxu0 %v1895
        %v1897 = vpop.f32.mrb[0].mxu0
        %v1898 = vadd.f32 0.0, %v1897
        %v1899 = vpop.f32.mrb[0].mxu0
        %1900 = vmatprep.mubr.f32.mxu0 0.0
        %v1901 = vand.u32 %v1822, 4294901760
        %v1902 = vsub.f32 %v1822, %v1901
        %v1903 = vand.u32 %v1902, 4294901760
        %v1904 = vsub.f32 %v1902, %v1903
        %v1905 = vand.u32 %v1904, 4294901760
        %1906 = vmatmul.mubr.f32.gmra.mrb[0].mxu0 %v1905
        %v1907 = vpop.f32.mrb[0].mxu0
        %v1908 = vadd.f32 0.0, %v1907
        %v1909 = vpop.f32.mrb[0].mxu0
        %1910 = vdwg.mxu0
        %1911 = vmatprep.subr.mxu0 0.0
        %v1912 = vand.u32 %v239, 4294901760
        %v1913 = vsub.f32 %v239, %v1912
        %v1914 = vand.u32 %v1913, 4294901760
        %v1915 = vsub.f32 %v1913, %v1914
        %v1916 = vand.u32 %v1915, 4294901760
        %1917 = vmatpush1.msra.mxu0 %v1916
        %1918 = vmatprep.subr.mxu0 0.0
        %v1919 = vand.u32 %v240, 4294901760
        %v1920 = vsub.f32 %v240, %v1919
        %v1921 = vand.u32 %v1920, 4294901760
        %v1922 = vsub.f32 %v1920, %v1921
        %v1923 = vand.u32 %v1922, 4294901760
        %1924 = vmatpush1.msra.mxu0 %v1923
        %1925 = vmatprep.subr.mxu0 0.0
        %1926 = vmatpush1.msra.mxu0 0.0
        %1927 = vmatprep.subr.mxu0 0.0
        %1928 = vmatpush1.msra.mxu0 0.0
        %1929 = vmatprep.subr.mxu0 0.0
        %1930 = vmatpush1.msra.mxu0 0.0
        %1931 = vmatprep.subr.mxu0 0.0
        %1932 = vmatpush1.msra.mxu0 0.0
        %1933 = vmatprep.subr.mxu0 0.0
        %1934 = vmatpush1.msra.mxu0 0.0
        %1935 = vmatprep.subr.mxu0 0.0
        %1936 = vmatpush1.msra.mxu0 0.0
        %1937 = vmatprep.subr.mxu0 0.0
        %1938 = vmatpush1.msra.mxu0 0.0
        %1939 = vmatprep.subr.mxu0 0.0
        %1940 = vmatpush1.msra.mxu0 0.0
        %1941 = vmatprep.subr.mxu0 0.0
        %1942 = vmatpush1.msra.mxu0 0.0
        %1943 = vmatprep.subr.mxu0 0.0
        %1944 = vmatpush1.msra.mxu0 0.0
        %1945 = vmatprep.subr.mxu0 0.0
        %1946 = vmatpush1.msra.mxu0 0.0
        %1947 = vmatprep.subr.mxu0 0.0
        %1948 = vmatpush1.msra.mxu0 0.0
        %1949 = vmatprep.subr.mxu0 0.0
        %1950 = vmatpush1.msra.mxu0 0.0
        %1951 = vmatprep.subr.mxu0 0.0
        %1952 = vmatpush1.msra.mxu0 0.0
        %1953 = vmatprep.subr.mxu0 0.0
        %1954 = vmatpush1.msra.mxu0 0.0
        %1955 = vmatprep.subr.mxu0 0.0
        %1956 = vmatpush1.msra.mxu0 0.0
        %1957 = vmatprep.subr.mxu0 0.0
        %1958 = vmatpush1.msra.mxu0 0.0
        %1959 = vmatprep.subr.mxu0 0.0
        %1960 = vmatpush1.msra.mxu0 0.0
        %1961 = vmatprep.subr.mxu0 0.0
        %1962 = vmatpush1.msra.mxu0 0.0
        %1963 = vmatprep.subr.mxu0 0.0
        %1964 = vmatpush1.msra.mxu0 0.0
        %1965 = vmatprep.subr.mxu0 0.0
        %1966 = vmatpush1.msra.mxu0 0.0
        %1967 = vmatprep.subr.mxu0 0.0
        %1968 = vmatpush1.msra.mxu0 0.0
        %1969 = vmatprep.subr.mxu0 0.0
        %1970 = vmatpush1.msra.mxu0 0.0
        %1971 = vmatprep.subr.mxu0 0.0
        %1972 = vmatpush1.msra.mxu0 0.0
        %1973 = vmatprep.subr.mxu0 0.0
        %1974 = vmatpush1.msra.mxu0 0.0
        %1975 = vmatprep.subr.mxu0 0.0
        %1976 = vmatpush1.msra.mxu0 0.0
        %1977 = vmatprep.subr.mxu0 0.0
        %1978 = vmatpush1.msra.mxu0 0.0
        %1979 = vmatprep.subr.mxu0 0.0
        %1980 = vmatpush1.msra.mxu0 0.0
        %1981 = vmatprep.subr.mxu0 0.0
        %1982 = vmatpush1.msra.mxu0 0.0
        %1983 = vmatprep.subr.mxu0 0.0
        %1984 = vmatpush1.msra.mxu0 0.0
        %1985 = vmatprep.mubr.f32.mxu0 0.0
        %v1986 = vand.u32 %v1819, 4294901760
        %1987 = vmatmul.mubr.f32.gmra.mrb[0].mxu0 %v1986
        %v1988 = vpop.f32.mrb[0].mxu0
        %v1989 = vadd.f32 %v1898, %v1988
        %v1990 = vpop.f32.mrb[0].mxu0
        %1991 = vmatprep.mubr.f32.mxu0 0.0
        %v1992 = vand.u32 %v1822, 4294901760
        %1993 = vmatmul.mubr.f32.gmra.mrb[0].mxu0 %v1992
        %v1994 = vpop.f32.mrb[0].mxu0
        %v1995 = vadd.f32 %v1908, %v1994
        %v1996 = vpop.f32.mrb[0].mxu0
        %1997 = vdwg.mxu0
        %1998 = vmatprep.subr.mxu0 0.0
        %v1999 = vand.u32 %v239, 4294901760
        %v2000 = vsub.f32 %v239, %v1999
        %2001 = vmatpush1.msra.mxu0 %v2000
        %2002 = vmatprep.subr.mxu0 0.0
        %v2003 = vand.u32 %v240, 4294901760
        %v2004 = vsub.f32 %v240, %v2003
        %2005 = vmatpush1.msra.mxu0 %v2004
        %2006 = vmatprep.subr.mxu0 0.0
        %2007 = vmatpush1.msra.mxu0 0.0
        %2008 = vmatprep.subr.mxu0 0.0
        %2009 = vmatpush1.msra.mxu0 0.0
        %2010 = vmatprep.subr.mxu0 0.0
        %2011 = vmatpush1.msra.mxu0 0.0
        %2012 = vmatprep.subr.mxu0 0.0
        %2013 = vmatpush1.msra.mxu0 0.0
        %2014 = vmatprep.subr.mxu0 0.0
        %2015 = vmatpush1.msra.mxu0 0.0
        %2016 = vmatprep.subr.mxu0 0.0
        %2017 = vmatpush1.msra.mxu0 0.0
        %2018 = vmatprep.subr.mxu0 0.0
        %2019 = vmatpush1.msra.mxu0 0.0
        %2020 = vmatprep.subr.mxu0 0.0
        %2021 = vmatpush1.msra.mxu0 0.0
        %2022 = vmatprep.subr.mxu0 0.0
        %2023 = vmatpush1.msra.mxu0 0.0
        %2024 = vmatprep.subr.mxu0 0.0
        %2025 = vmatpush1.msra.mxu0 0.0
        %2026 = vmatprep.subr.mxu0 0.0
        %2027 = vmatpush1.msra.mxu0 0.0
        %2028 = vmatprep.subr.mxu0 0.0
        %2029 = vmatpush1.msra.mxu0 0.0
        %2030 = vmatprep.subr.mxu0 0.0
        %2031 = vmatpush1.msra.mxu0 0.0
        %2032 = vmatprep.subr.mxu0 0.0
        %2033 = vmatpush1.msra.mxu0 0.0
        %2034 = vmatprep.subr.mxu0 0.0
        %2035 = vmatpush1.msra.mxu0 0.0
        %2036 = vmatprep.subr.mxu0 0.0
        %2037 = vmatpush1.msra.mxu0 0.0
        %2038 = vmatprep.subr.mxu0 0.0
        %2039 = vmatpush1.msra.mxu0 0.0
        %2040 = vmatprep.subr.mxu0 0.0
        %2041 = vmatpush1.msra.mxu0 0.0
        %2042 = vmatprep.subr.mxu0 0.0
        %2043 = vmatpush1.msra.mxu0 0.0
        %2044 = vmatprep.subr.mxu0 0.0
        %2045 = vmatpush1.msra.mxu0 0.0
        %2046 = vmatprep.subr.mxu0 0.0
        %2047 = vmatpush1.msra.mxu0 0.0
        %2048 = vmatprep.subr.mxu0 0.0
        %2049 = vmatpush1.msra.mxu0 0.0
        %2050 = vmatprep.subr.mxu0 0.0
        %2051 = vmatpush1.msra.mxu0 0.0
        %2052 = vmatprep.subr.mxu0 0.0
        %2053 = vmatpush1.msra.mxu0 0.0
        %2054 = vmatprep.subr.mxu0 0.0
        %2055 = vmatpush1.msra.mxu0 0.0
        %2056 = vmatprep.subr.mxu0 0.0
        %2057 = vmatpush1.msra.mxu0 0.0
        %2058 = vmatprep.subr.mxu0 0.0
        %2059 = vmatpush1.msra.mxu0 0.0
        %2060 = vmatprep.subr.mxu0 0.0
        %2061 = vmatpush1.msra.mxu0 0.0
        %2062 = vmatprep.subr.mxu0 0.0
        %2063 = vmatpush1.msra.mxu0 0.0
        %2064 = vmatprep.subr.mxu0 0.0
        %2065 = vmatpush1.msra.mxu0 0.0
        %2066 = vmatprep.mubr.f32.mxu0 0.0
        %v2067 = vand.u32 %v1819, 4294901760
        %v2068 = vsub.f32 %v1819, %v2067
        %2069 = vmatmul.mubr.f32.gmra.mrb[0].mxu0 %v2068
        %v2070 = vpop.f32.mrb[0].mxu0
        %v2071 = vadd.f32 %v1989, %v2070
        %v2072 = vpop.f32.mrb[0].mxu0
        %2073 = vmatprep.mubr.f32.mxu0 0.0
        %v2074 = vand.u32 %v1822, 4294901760
        %v2075 = vsub.f32 %v1822, %v2074
        %2076 = vmatmul.mubr.f32.gmra.mrb[0].mxu0 %v2075
        %v2077 = vpop.f32.mrb[0].mxu0
        %v2078 = vadd.f32 %v1995, %v2077
        %v2079 = vpop.f32.mrb[0].mxu0
        %2080 = vdwg.mxu0
        %2081 = vmatprep.subr.mxu0 0.0
        %v2082 = vand.u32 %v239, 4294901760
        %2083 = vmatpush1.msra.mxu0 %v2082
        %2084 = vmatprep.subr.mxu0 0.0
        %v2085 = vand.u32 %v240, 4294901760
        %2086 = vmatpush1.msra.mxu0 %v2085
        %2087 = vmatprep.subr.mxu0 0.0
        %2088 = vmatpush1.msra.mxu0 0.0
        %2089 = vmatprep.subr.mxu0 0.0
        %2090 = vmatpush1.msra.mxu0 0.0
        %2091 = vmatprep.subr.mxu0 0.0
        %2092 = vmatpush1.msra.mxu0 0.0
        %2093 = vmatprep.subr.mxu0 0.0
        %2094 = vmatpush1.msra.mxu0 0.0
        %2095 = vmatprep.subr.mxu0 0.0
        %2096 = vmatpush1.msra.mxu0 0.0
        %2097 = vmatprep.subr.mxu0 0.0
        %2098 = vmatpush1.msra.mxu0 0.0
        %2099 = vmatprep.subr.mxu0 0.0
        %2100 = vmatpush1.msra.mxu0 0.0
        %2101 = vmatprep.subr.mxu0 0.0
        %2102 = vmatpush1.msra.mxu0 0.0
        %2103 = vmatprep.subr.mxu0 0.0
        %2104 = vmatpush1.msra.mxu0 0.0
        %2105 = vmatprep.subr.mxu0 0.0
        %2106 = vmatpush1.msra.mxu0 0.0
        %2107 = vmatprep.subr.mxu0 0.0
        %2108 = vmatpush1.msra.mxu0 0.0
        %2109 = vmatprep.subr.mxu0 0.0
        %2110 = vmatpush1.msra.mxu0 0.0
        %2111 = vmatprep.subr.mxu0 0.0
        %2112 = vmatpush1.msra.mxu0 0.0
        %2113 = vmatprep.subr.mxu0 0.0
        %2114 = vmatpush1.msra.mxu0 0.0
        %2115 = vmatprep.subr.mxu0 0.0
        %2116 = vmatpush1.msra.mxu0 0.0
        %2117 = vmatprep.subr.mxu0 0.0
        %2118 = vmatpush1.msra.mxu0 0.0
        %2119 = vmatprep.subr.mxu0 0.0
        %2120 = vmatpush1.msra.mxu0 0.0
        %2121 = vmatprep.subr.mxu0 0.0
        %2122 = vmatpush1.msra.mxu0 0.0
        %2123 = vmatprep.subr.mxu0 0.0
        %2124 = vmatpush1.msra.mxu0 0.0
        %2125 = vmatprep.subr.mxu0 0.0
        %2126 = vmatpush1.msra.mxu0 0.0
        %2127 = vmatprep.subr.mxu0 0.0
        %2128 = vmatpush1.msra.mxu0 0.0
        %2129 = vmatprep.subr.mxu0 0.0
        %2130 = vmatpush1.msra.mxu0 0.0
        %2131 = vmatprep.subr.mxu0 0.0
        %2132 = vmatpush1.msra.mxu0 0.0
        %2133 = vmatprep.subr.mxu0 0.0
        %2134 = vmatpush1.msra.mxu0 0.0
        %2135 = vmatprep.subr.mxu0 0.0
        %2136 = vmatpush1.msra.mxu0 0.0
        %2137 = vmatprep.subr.mxu0 0.0
        %2138 = vmatpush1.msra.mxu0 0.0
        %2139 = vmatprep.subr.mxu0 0.0
        %2140 = vmatpush1.msra.mxu0 0.0
        %2141 = vmatprep.subr.mxu0 0.0
        %2142 = vmatpush1.msra.mxu0 0.0
        %2143 = vmatprep.subr.mxu0 0.0
        %2144 = vmatpush1.msra.mxu0 0.0
        %2145 = vmatprep.subr.mxu0 0.0
        %2146 = vmatpush1.msra.mxu0 0.0
        %2147 = vmatprep.mubr.f32.mxu0 0.0
        %v2148 = vand.u32 %v1819, 4294901760
        %v2149 = vsub.f32 %v1819, %v2148
        %v2150 = vand.u32 %v2149, 4294901760
        %2151 = vmatmul.mubr.f32.gmra.mrb[0].mxu0 %v2150
        %v2152 = vpop.f32.mrb[0].mxu0
        %v2153 = vadd.f32 %v2071, %v2152
        %v2154 = vpop.f32.mrb[0].mxu0
        %2155 = vmatprep.mubr.f32.mxu0 0.0
        %v2156 = vand.u32 %v1822, 4294901760
        %v2157 = vsub.f32 %v1822, %v2156
        %v2158 = vand.u32 %v2157, 4294901760
        %2159 = vmatmul.mubr.f32.gmra.mrb[0].mxu0 %v2158
        %v2160 = vpop.f32.mrb[0].mxu0
        %v2161 = vadd.f32 %v2078, %v2160
        %v2162 = vpop.f32.mrb[0].mxu0
        %2163 = vdwg.mxu0
        %2164 = vmatprep.subr.mxu0 0.0
        %v2165 = vand.u32 %v239, 4294901760
        %v2166 = vsub.f32 %v239, %v2165
        %v2167 = vand.u32 %v2166, 4294901760
        %2168 = vmatpush1.msra.mxu0 %v2167
        %2169 = vmatprep.subr.mxu0 0.0
        %v2170 = vand.u32 %v240, 4294901760
        %v2171 = vsub.f32 %v240, %v2170
        %v2172 = vand.u32 %v2171, 4294901760
        %2173 = vmatpush1.msra.mxu0 %v2172
        %2174 = vmatprep.subr.mxu0 0.0
        %2175 = vmatpush1.msra.mxu0 0.0
        %2176 = vmatprep.subr.mxu0 0.0
        %2177 = vmatpush1.msra.mxu0 0.0
        %2178 = vmatprep.subr.mxu0 0.0
        %2179 = vmatpush1.msra.mxu0 0.0
        %2180 = vmatprep.subr.mxu0 0.0
        %2181 = vmatpush1.msra.mxu0 0.0
        %2182 = vmatprep.subr.mxu0 0.0
        %2183 = vmatpush1.msra.mxu0 0.0
        %2184 = vmatprep.subr.mxu0 0.0
        %2185 = vmatpush1.msra.mxu0 0.0
        %2186 = vmatprep.subr.mxu0 0.0
        %2187 = vmatpush1.msra.mxu0 0.0
        %2188 = vmatprep.subr.mxu0 0.0
        %2189 = vmatpush1.msra.mxu0 0.0
        %2190 = vmatprep.subr.mxu0 0.0
        %2191 = vmatpush1.msra.mxu0 0.0
        %2192 = vmatprep.subr.mxu0 0.0
        %2193 = vmatpush1.msra.mxu0 0.0
        %2194 = vmatprep.subr.mxu0 0.0
        %2195 = vmatpush1.msra.mxu0 0.0
        %2196 = vmatprep.subr.mxu0 0.0
        %2197 = vmatpush1.msra.mxu0 0.0
        %2198 = vmatprep.subr.mxu0 0.0
        %2199 = vmatpush1.msra.mxu0 0.0
        %2200 = vmatprep.subr.mxu0 0.0
        %2201 = vmatpush1.msra.mxu0 0.0
        %2202 = vmatprep.subr.mxu0 0.0
        %2203 = vmatpush1.msra.mxu0 0.0
        %2204 = vmatprep.subr.mxu0 0.0
        %2205 = vmatpush1.msra.mxu0 0.0
        %2206 = vmatprep.subr.mxu0 0.0
        %2207 = vmatpush1.msra.mxu0 0.0
        %2208 = vmatprep.subr.mxu0 0.0
        %2209 = vmatpush1.msra.mxu0 0.0
        %2210 = vmatprep.subr.mxu0 0.0
        %2211 = vmatpush1.msra.mxu0 0.0
        %2212 = vmatprep.subr.mxu0 0.0
        %2213 = vmatpush1.msra.mxu0 0.0
        %2214 = vmatprep.subr.mxu0 0.0
        %2215 = vmatpush1.msra.mxu0 0.0
        %2216 = vmatprep.subr.mxu0 0.0
        %2217 = vmatpush1.msra.mxu0 0.0
        %2218 = vmatprep.subr.mxu0 0.0
        %2219 = vmatpush1.msra.mxu0 0.0
        %2220 = vmatprep.subr.mxu0 0.0
        %2221 = vmatpush1.msra.mxu0 0.0
        %2222 = vmatprep.subr.mxu0 0.0
        %2223 = vmatpush1.msra.mxu0 0.0
        %2224 = vmatprep.subr.mxu0 0.0
        %2225 = vmatpush1.msra.mxu0 0.0
        %2226 = vmatprep.subr.mxu0 0.0
        %2227 = vmatpush1.msra.mxu0 0.0
        %2228 = vmatprep.subr.mxu0 0.0
        %2229 = vmatpush1.msra.mxu0 0.0
        %2230 = vmatprep.subr.mxu0 0.0
        %2231 = vmatpush1.msra.mxu0 0.0
        %2232 = vmatprep.subr.mxu0 0.0
        %2233 = vmatpush1.msra.mxu0 0.0
        %2234 = vmatprep.mubr.f32.mxu0 0.0
        %v2235 = vand.u32 %v1819, 4294901760
        %2236 = vmatmul.mubr.f32.gmra.mrb[0].mxu0 %v2235
        %v2237 = vpop.f32.mrb[0].mxu0
        %v2238 = vadd.f32 %v2153, %v2237
        %v2239 = vpop.f32.mrb[0].mxu0
        %2240 = vmatprep.mubr.f32.mxu0 0.0
        %v2241 = vand.u32 %v1822, 4294901760
        %2242 = vmatmul.mubr.f32.gmra.mrb[0].mxu0 %v2241
        %v2243 = vpop.f32.mrb[0].mxu0
        %v2244 = vadd.f32 %v2161, %v2243
        %v2245 = vpop.f32.mrb[0].mxu0
        %2246 = vdwg.mxu0
        %2247 = vmatprep.subr.mxu0 0.0
        %v2248 = vand.u32 %v239, 4294901760
        %2249 = vmatpush1.msra.mxu0 %v2248
        %2250 = vmatprep.subr.mxu0 0.0
        %v2251 = vand.u32 %v240, 4294901760
        %2252 = vmatpush1.msra.mxu0 %v2251
        %2253 = vmatprep.subr.mxu0 0.0
        %2254 = vmatpush1.msra.mxu0 0.0
        %2255 = vmatprep.subr.mxu0 0.0
        %2256 = vmatpush1.msra.mxu0 0.0
        %2257 = vmatprep.subr.mxu0 0.0
        %2258 = vmatpush1.msra.mxu0 0.0
        %2259 = vmatprep.subr.mxu0 0.0
        %2260 = vmatpush1.msra.mxu0 0.0
        %2261 = vmatprep.subr.mxu0 0.0
        %2262 = vmatpush1.msra.mxu0 0.0
        %2263 = vmatprep.subr.mxu0 0.0
        %2264 = vmatpush1.msra.mxu0 0.0
        %2265 = vmatprep.subr.mxu0 0.0
        %2266 = vmatpush1.msra.mxu0 0.0
        %2267 = vmatprep.subr.mxu0 0.0
        %2268 = vmatpush1.msra.mxu0 0.0
        %2269 = vmatprep.subr.mxu0 0.0
        %2270 = vmatpush1.msra.mxu0 0.0
        %2271 = vmatprep.subr.mxu0 0.0
        %2272 = vmatpush1.msra.mxu0 0.0
        %2273 = vmatprep.subr.mxu0 0.0
        %2274 = vmatpush1.msra.mxu0 0.0
        %2275 = vmatprep.subr.mxu0 0.0
        %2276 = vmatpush1.msra.mxu0 0.0
        %2277 = vmatprep.subr.mxu0 0.0
        %2278 = vmatpush1.msra.mxu0 0.0
        %2279 = vmatprep.subr.mxu0 0.0
        %2280 = vmatpush1.msra.mxu0 0.0
        %2281 = vmatprep.subr.mxu0 0.0
        %2282 = vmatpush1.msra.mxu0 0.0
        %2283 = vmatprep.subr.mxu0 0.0
        %2284 = vmatpush1.msra.mxu0 0.0
        %2285 = vmatprep.subr.mxu0 0.0
        %2286 = vmatpush1.msra.mxu0 0.0
        %2287 = vmatprep.subr.mxu0 0.0
        %2288 = vmatpush1.msra.mxu0 0.0
        %2289 = vmatprep.subr.mxu0 0.0
        %2290 = vmatpush1.msra.mxu0 0.0
        %2291 = vmatprep.subr.mxu0 0.0
        %2292 = vmatpush1.msra.mxu0 0.0
        %2293 = vmatprep.subr.mxu0 0.0
        %2294 = vmatpush1.msra.mxu0 0.0
        %2295 = vmatprep.subr.mxu0 0.0
        %2296 = vmatpush1.msra.mxu0 0.0
        %2297 = vmatprep.subr.mxu0 0.0
        %2298 = vmatpush1.msra.mxu0 0.0
        %2299 = vmatprep.subr.mxu0 0.0
        %2300 = vmatpush1.msra.mxu0 0.0
        %2301 = vmatprep.subr.mxu0 0.0
        %2302 = vmatpush1.msra.mxu0 0.0
        %2303 = vmatprep.subr.mxu0 0.0
        %2304 = vmatpush1.msra.mxu0 0.0
        %2305 = vmatprep.subr.mxu0 0.0
        %2306 = vmatpush1.msra.mxu0 0.0
        %2307 = vmatprep.subr.mxu0 0.0
        %2308 = vmatpush1.msra.mxu0 0.0
        %2309 = vmatprep.subr.mxu0 0.0
        %2310 = vmatpush1.msra.mxu0 0.0
        %2311 = vmatprep.subr.mxu0 0.0
        %2312 = vmatpush1.msra.mxu0 0.0
        %2313 = vmatprep.mubr.f32.mxu0 0.0
        %v2314 = vand.u32 %v1819, 4294901760
        %2315 = vmatmul.mubr.f32.gmra.mrb[0].mxu0 %v2314
        %v2316 = vpop.f32.mrb[0].mxu0
        %v2317 = vadd.f32 %v2238, %v2316
        %v2318 = vpop.f32.mrb[0].mxu0
        %2319 = vmatprep.mubr.f32.mxu0 0.0
        %v2320 = vand.u32 %v1822, 4294901760
        %2321 = vmatmul.mubr.f32.gmra.mrb[0].mxu0 %v2320
        %v2322 = vpop.f32.mrb[0].mxu0
        %v2323 = vadd.f32 %v2244, %v2322
        %v2324 = vpop.f32.mrb[0].mxu0
        %2325 = vdwg.mxu0
        %s2326 = scalar_lea.vmem %s234, 64 [#allocation8]
        %2327 = vst.msk [vmem:[%s2326] sm:$0xf] %vm1260, %v2317
        %2329 = vrot.lane.b32.xlu0 %v2317, 124
        %v2330 = vpop.permute.xlu0 %2329
        %s2332 = scalar_lea.vmem %s234, 68 [#allocation8]
        %2333 = vst.msk [vmem:[%s2332] sm:$0xf] %vm1260, %v2330
        %2334 = vrot.lane.b32.xlu0 %v2317, 120
        %v2335 = vpop.permute.xlu0 %2334
        %s2337 = scalar_lea.vmem %s234, 72 [#allocation8]
        %2338 = vst.msk [vmem:[%s2337] sm:$0xf] %vm1260, %v2335
        %2339 = vrot.lane.b32.xlu0 %v2317, 116
        %v2340 = vpop.permute.xlu0 %2339
        %s2342 = scalar_lea.vmem %s234, 76 [#allocation8]
        %2343 = vst.msk [vmem:[%s2342] sm:$0xf] %vm1260, %v2340
        %s2344 = scalar_lea.vmem %s234, 80 [#allocation8]
        %2345 = vst.msk [vmem:[%s2344 - $0x4] sm:$0xf0] %vm1279, %v2317
        %s2346 = scalar_lea.vmem %s234, 84 [#allocation8]
        %2347 = vst.msk [vmem:[%s2346 - $0x4] sm:$0xf0] %vm1279, %v2330
        %s2348 = scalar_lea.vmem %s234, 88 [#allocation8]
        %2349 = vst.msk [vmem:[%s2348 - $0x4] sm:$0xf0] %vm1279, %v2335
        %s2350 = scalar_lea.vmem %s234, 92 [#allocation8]
        %2351 = vst.msk [vmem:[%s2350 - $0x4] sm:$0xf0] %vm1279, %v2340
        %s2352 = scalar_lea.vmem %s234, 96 [#allocation8]
        %2353 = vst.msk [vmem:[%s2352] sm:$0xf] %vm1260, %v2323
        %2355 = vrot.lane.b32.xlu0 %v2323, 124
        %v2356 = vpop.permute.xlu0 %2355
        %s2358 = scalar_lea.vmem %s234, 100 [#allocation8]
        %2359 = vst.msk [vmem:[%s2358] sm:$0xf] %vm1260, %v2356
        %2360 = vrot.lane.b32.xlu0 %v2323, 120
        %v2361 = vpop.permute.xlu0 %2360
        %s2363 = scalar_lea.vmem %s234, 104 [#allocation8]
        %2364 = vst.msk [vmem:[%s2363] sm:$0xf] %vm1260, %v2361
        %2365 = vrot.lane.b32.xlu0 %v2323, 116
        %v2366 = vpop.permute.xlu0 %2365
        %s2368 = scalar_lea.vmem %s234, 108 [#allocation8]
        %2369 = vst.msk [vmem:[%s2368] sm:$0xf] %vm1260, %v2366
        %s2370 = scalar_lea.vmem %s234, 112 [#allocation8]
        %2371 = vst.msk [vmem:[%s2370 - $0x4] sm:$0xf0] %vm1279, %v2323
        %s2372 = scalar_lea.vmem %s234, 116 [#allocation8]
        %2373 = vst.msk [vmem:[%s2372 - $0x4] sm:$0xf0] %vm1279, %v2356
        %s2374 = scalar_lea.vmem %s234, 120 [#allocation8]
        %2375 = vst.msk [vmem:[%s2374 - $0x4] sm:$0xf0] %vm1279, %v2361
        %s2376 = scalar_lea.vmem %s234, 124 [#allocation8]
        %2377 = vst.msk [vmem:[%s2376 - $0x4] sm:$0xf0] %vm1279, %v2366
        %s2378 = scalar_lea.vmem %s212, 32 [#allocation7]
        %v2379 = vld [vmem:[%s2378] sm:$0xff]
        %v2380 = vld [vmem:[%s2378 + $0x8] sm:$0xff]
        %2381 = vmatprep.subr.mxu0 0.0
        %v2382 = vand.u32 %v2379, 4294901760
        %2383 = vmatpush1.msra.mxu0 %v2382
        %2384 = vmatprep.subr.mxu0 0.0
        %v2385 = vand.u32 %v2380, 4294901760
        %2386 = vmatpush1.msra.mxu0 %v2385
        %2387 = vmatprep.subr.mxu0 0.0
        %2388 = vmatpush1.msra.mxu0 0.0
        %2389 = vmatprep.subr.mxu0 0.0
        %2390 = vmatpush1.msra.mxu0 0.0
        %2391 = vmatprep.subr.mxu0 0.0
        %2392 = vmatpush1.msra.mxu0 0.0
        %2393 = vmatprep.subr.mxu0 0.0
        %2394 = vmatpush1.msra.mxu0 0.0
        %2395 = vmatprep.subr.mxu0 0.0
        %2396 = vmatpush1.msra.mxu0 0.0
        %2397 = vmatprep.subr.mxu0 0.0
        %2398 = vmatpush1.msra.mxu0 0.0
        %2399 = vmatprep.subr.mxu0 0.0
        %2400 = vmatpush1.msra.mxu0 0.0
        %2401 = vmatprep.subr.mxu0 0.0
        %2402 = vmatpush1.msra.mxu0 0.0
        %2403 = vmatprep.subr.mxu0 0.0
        %2404 = vmatpush1.msra.mxu0 0.0
        %2405 = vmatprep.subr.mxu0 0.0
        %2406 = vmatpush1.msra.mxu0 0.0
        %2407 = vmatprep.subr.mxu0 0.0
        %2408 = vmatpush1.msra.mxu0 0.0
        %2409 = vmatprep.subr.mxu0 0.0
        %2410 = vmatpush1.msra.mxu0 0.0
        %2411 = vmatprep.subr.mxu0 0.0
        %2412 = vmatpush1.msra.mxu0 0.0
        %2413 = vmatprep.subr.mxu0 0.0
        %2414 = vmatpush1.msra.mxu0 0.0
        %2415 = vmatprep.subr.mxu0 0.0
        %2416 = vmatpush1.msra.mxu0 0.0
        %2417 = vmatprep.subr.mxu0 0.0
        %2418 = vmatpush1.msra.mxu0 0.0
        %2419 = vmatprep.subr.mxu0 0.0
        %2420 = vmatpush1.msra.mxu0 0.0
        %2421 = vmatprep.subr.mxu0 0.0
        %2422 = vmatpush1.msra.mxu0 0.0
        %2423 = vmatprep.subr.mxu0 0.0
        %2424 = vmatpush1.msra.mxu0 0.0
        %2425 = vmatprep.subr.mxu0 0.0
        %2426 = vmatpush1.msra.mxu0 0.0
        %2427 = vmatprep.subr.mxu0 0.0
        %2428 = vmatpush1.msra.mxu0 0.0
        %2429 = vmatprep.subr.mxu0 0.0
        %2430 = vmatpush1.msra.mxu0 0.0
        %2431 = vmatprep.subr.mxu0 0.0
        %2432 = vmatpush1.msra.mxu0 0.0
        %2433 = vmatprep.subr.mxu0 0.0
        %2434 = vmatpush1.msra.mxu0 0.0
        %2435 = vmatprep.subr.mxu0 0.0
        %2436 = vmatpush1.msra.mxu0 0.0
        %2437 = vmatprep.subr.mxu0 0.0
        %2438 = vmatpush1.msra.mxu0 0.0
        %2439 = vmatprep.subr.mxu0 0.0
        %2440 = vmatpush1.msra.mxu0 0.0
        %2441 = vmatprep.subr.mxu0 0.0
        %2442 = vmatpush1.msra.mxu0 0.0
        %2443 = vmatprep.subr.mxu0 0.0
        %2444 = vmatpush1.msra.mxu0 0.0
        %2445 = vmatprep.subr.mxu0 0.0
        %2446 = vmatpush1.msra.mxu0 0.0
        %2447 = vmatprep.mubr.f32.mxu0 0.0
        %v2448 = vand.u32 %v245, 4294901760
        %v2449 = vsub.f32 %v245, %v2448
        %v2450 = vand.u32 %v2449, 4294901760
        %v2451 = vsub.f32 %v2449, %v2450
        %v2452 = vand.u32 %v2451, 4294901760
        %2453 = vmatmul.mubr.f32.gmra.mrb[0].mxu0 %v2452
        %v2454 = vpop.f32.mrb[0].mxu0
        %v2455 = vadd.f32 0.0, %v2454
        %v2456 = vpop.f32.mrb[0].mxu0
        %2457 = vmatprep.mubr.f32.mxu0 0.0
        %v2458 = vand.u32 %v248, 4294901760
        %v2459 = vsub.f32 %v248, %v2458
        %v2460 = vand.u32 %v2459, 4294901760
        %v2461 = vsub.f32 %v2459, %v2460
        %v2462 = vand.u32 %v2461, 4294901760
        %2463 = vmatmul.mubr.f32.gmra.mrb[0].mxu0 %v2462
        %v2464 = vpop.f32.mrb[0].mxu0
        %v2465 = vadd.f32 0.0, %v2464
        %v2466 = vpop.f32.mrb[0].mxu0
        %2467 = vdwg.mxu0
        %2468 = vmatprep.subr.mxu0 0.0
        %v2469 = vand.u32 %v2379, 4294901760
        %v2470 = vsub.f32 %v2379, %v2469
        %v2471 = vand.u32 %v2470, 4294901760
        %v2472 = vsub.f32 %v2470, %v2471
        %v2473 = vand.u32 %v2472, 4294901760
        %2474 = vmatpush1.msra.mxu0 %v2473
        %2475 = vmatprep.subr.mxu0 0.0
        %v2476 = vand.u32 %v2380, 4294901760
        %v2477 = vsub.f32 %v2380, %v2476
        %v2478 = vand.u32 %v2477, 4294901760
        %v2479 = vsub.f32 %v2477, %v2478
        %v2480 = vand.u32 %v2479, 4294901760
        %2481 = vmatpush1.msra.mxu0 %v2480
        %2482 = vmatprep.subr.mxu0 0.0
        %2483 = vmatpush1.msra.mxu0 0.0
        %2484 = vmatprep.subr.mxu0 0.0
        %2485 = vmatpush1.msra.mxu0 0.0
        %2486 = vmatprep.subr.mxu0 0.0
        %2487 = vmatpush1.msra.mxu0 0.0
        %2488 = vmatprep.subr.mxu0 0.0
        %2489 = vmatpush1.msra.mxu0 0.0
        %2490 = vmatprep.subr.mxu0 0.0
        %2491 = vmatpush1.msra.mxu0 0.0
        %2492 = vmatprep.subr.mxu0 0.0
        %2493 = vmatpush1.msra.mxu0 0.0
        %2494 = vmatprep.subr.mxu0 0.0
        %2495 = vmatpush1.msra.mxu0 0.0
        %2496 = vmatprep.subr.mxu0 0.0
        %2497 = vmatpush1.msra.mxu0 0.0
        %2498 = vmatprep.subr.mxu0 0.0
        %2499 = vmatpush1.msra.mxu0 0.0
        %2500 = vmatprep.subr.mxu0 0.0
        %2501 = vmatpush1.msra.mxu0 0.0
        %2502 = vmatprep.subr.mxu0 0.0
        %2503 = vmatpush1.msra.mxu0 0.0
        %2504 = vmatprep.subr.mxu0 0.0
        %2505 = vmatpush1.msra.mxu0 0.0
        %2506 = vmatprep.subr.mxu0 0.0
        %2507 = vmatpush1.msra.mxu0 0.0
        %2508 = vmatprep.subr.mxu0 0.0
        %2509 = vmatpush1.msra.mxu0 0.0
        %2510 = vmatprep.subr.mxu0 0.0
        %2511 = vmatpush1.msra.mxu0 0.0
        %2512 = vmatprep.subr.mxu0 0.0
        %2513 = vmatpush1.msra.mxu0 0.0
        %2514 = vmatprep.subr.mxu0 0.0
        %2515 = vmatpush1.msra.mxu0 0.0
        %2516 = vmatprep.subr.mxu0 0.0
        %2517 = vmatpush1.msra.mxu0 0.0
        %2518 = vmatprep.subr.mxu0 0.0
        %2519 = vmatpush1.msra.mxu0 0.0
        %2520 = vmatprep.subr.mxu0 0.0
        %2521 = vmatpush1.msra.mxu0 0.0
        %2522 = vmatprep.subr.mxu0 0.0
        %2523 = vmatpush1.msra.mxu0 0.0
        %2524 = vmatprep.subr.mxu0 0.0
        %2525 = vmatpush1.msra.mxu0 0.0
        %2526 = vmatprep.subr.mxu0 0.0
        %2527 = vmatpush1.msra.mxu0 0.0
        %2528 = vmatprep.subr.mxu0 0.0
        %2529 = vmatpush1.msra.mxu0 0.0
        %2530 = vmatprep.subr.mxu0 0.0
        %2531 = vmatpush1.msra.mxu0 0.0
        %2532 = vmatprep.subr.mxu0 0.0
        %2533 = vmatpush1.msra.mxu0 0.0
        %2534 = vmatprep.subr.mxu0 0.0
        %2535 = vmatpush1.msra.mxu0 0.0
        %2536 = vmatprep.subr.mxu0 0.0
        %2537 = vmatpush1.msra.mxu0 0.0
        %2538 = vmatprep.subr.mxu0 0.0
        %2539 = vmatpush1.msra.mxu0 0.0
        %2540 = vmatprep.subr.mxu0 0.0
        %2541 = vmatpush1.msra.mxu0 0.0
        %2542 = vmatprep.mubr.f32.mxu0 0.0
        %v2543 = vand.u32 %v245, 4294901760
        %2544 = vmatmul.mubr.f32.gmra.mrb[0].mxu0 %v2543
        %v2545 = vpop.f32.mrb[0].mxu0
        %v2546 = vadd.f32 %v2455, %v2545
        %v2547 = vpop.f32.mrb[0].mxu0
        %2548 = vmatprep.mubr.f32.mxu0 0.0
        %v2549 = vand.u32 %v248, 4294901760
        %2550 = vmatmul.mubr.f32.gmra.mrb[0].mxu0 %v2549
        %v2551 = vpop.f32.mrb[0].mxu0
        %v2552 = vadd.f32 %v2465, %v2551
        %v2553 = vpop.f32.mrb[0].mxu0
        %2554 = vdwg.mxu0
        %2555 = vmatprep.subr.mxu0 0.0
        %v2556 = vand.u32 %v2379, 4294901760
        %v2557 = vsub.f32 %v2379, %v2556
        %2558 = vmatpush1.msra.mxu0 %v2557
        %2559 = vmatprep.subr.mxu0 0.0
        %v2560 = vand.u32 %v2380, 4294901760
        %v2561 = vsub.f32 %v2380, %v2560
        %2562 = vmatpush1.msra.mxu0 %v2561
        %2563 = vmatprep.subr.mxu0 0.0
        %2564 = vmatpush1.msra.mxu0 0.0
        %2565 = vmatprep.subr.mxu0 0.0
        %2566 = vmatpush1.msra.mxu0 0.0
        %2567 = vmatprep.subr.mxu0 0.0
        %2568 = vmatpush1.msra.mxu0 0.0
        %2569 = vmatprep.subr.mxu0 0.0
        %2570 = vmatpush1.msra.mxu0 0.0
        %2571 = vmatprep.subr.mxu0 0.0
        %2572 = vmatpush1.msra.mxu0 0.0
        %2573 = vmatprep.subr.mxu0 0.0
        %2574 = vmatpush1.msra.mxu0 0.0
        %2575 = vmatprep.subr.mxu0 0.0
        %2576 = vmatpush1.msra.mxu0 0.0
        %2577 = vmatprep.subr.mxu0 0.0
        %2578 = vmatpush1.msra.mxu0 0.0
        %2579 = vmatprep.subr.mxu0 0.0
        %2580 = vmatpush1.msra.mxu0 0.0
        %2581 = vmatprep.subr.mxu0 0.0
        %2582 = vmatpush1.msra.mxu0 0.0
        %2583 = vmatprep.subr.mxu0 0.0
        %2584 = vmatpush1.msra.mxu0 0.0
        %2585 = vmatprep.subr.mxu0 0.0
        %2586 = vmatpush1.msra.mxu0 0.0
        %2587 = vmatprep.subr.mxu0 0.0
        %2588 = vmatpush1.msra.mxu0 0.0
        %2589 = vmatprep.subr.mxu0 0.0
        %2590 = vmatpush1.msra.mxu0 0.0
        %2591 = vmatprep.subr.mxu0 0.0
        %2592 = vmatpush1.msra.mxu0 0.0
        %2593 = vmatprep.subr.mxu0 0.0
        %2594 = vmatpush1.msra.mxu0 0.0
        %2595 = vmatprep.subr.mxu0 0.0
        %2596 = vmatpush1.msra.mxu0 0.0
        %2597 = vmatprep.subr.mxu0 0.0
        %2598 = vmatpush1.msra.mxu0 0.0
        %2599 = vmatprep.subr.mxu0 0.0
        %2600 = vmatpush1.msra.mxu0 0.0
        %2601 = vmatprep.subr.mxu0 0.0
        %2602 = vmatpush1.msra.mxu0 0.0
        %2603 = vmatprep.subr.mxu0 0.0
        %2604 = vmatpush1.msra.mxu0 0.0
        %2605 = vmatprep.subr.mxu0 0.0
        %2606 = vmatpush1.msra.mxu0 0.0
        %2607 = vmatprep.subr.mxu0 0.0
        %2608 = vmatpush1.msra.mxu0 0.0
        %2609 = vmatprep.subr.mxu0 0.0
        %2610 = vmatpush1.msra.mxu0 0.0
        %2611 = vmatprep.subr.mxu0 0.0
        %2612 = vmatpush1.msra.mxu0 0.0
        %2613 = vmatprep.subr.mxu0 0.0
        %2614 = vmatpush1.msra.mxu0 0.0
        %2615 = vmatprep.subr.mxu0 0.0
        %2616 = vmatpush1.msra.mxu0 0.0
        %2617 = vmatprep.subr.mxu0 0.0
        %2618 = vmatpush1.msra.mxu0 0.0
        %2619 = vmatprep.subr.mxu0 0.0
        %2620 = vmatpush1.msra.mxu0 0.0
        %2621 = vmatprep.subr.mxu0 0.0
        %2622 = vmatpush1.msra.mxu0 0.0
        %2623 = vmatprep.mubr.f32.mxu0 0.0
        %v2624 = vand.u32 %v245, 4294901760
        %v2625 = vsub.f32 %v245, %v2624
        %2626 = vmatmul.mubr.f32.gmra.mrb[0].mxu0 %v2625
        %v2627 = vpop.f32.mrb[0].mxu0
        %v2628 = vadd.f32 %v2546, %v2627
        %v2629 = vpop.f32.mrb[0].mxu0
        %2630 = vmatprep.mubr.f32.mxu0 0.0
        %v2631 = vand.u32 %v248, 4294901760
        %v2632 = vsub.f32 %v248, %v2631
        %2633 = vmatmul.mubr.f32.gmra.mrb[0].mxu0 %v2632
        %v2634 = vpop.f32.mrb[0].mxu0
        %v2635 = vadd.f32 %v2552, %v2634
        %v2636 = vpop.f32.mrb[0].mxu0
        %2637 = vdwg.mxu0
        %2638 = vmatprep.subr.mxu0 0.0
        %v2639 = vand.u32 %v2379, 4294901760
        %2640 = vmatpush1.msra.mxu0 %v2639
        %2641 = vmatprep.subr.mxu0 0.0
        %v2642 = vand.u32 %v2380, 4294901760
        %2643 = vmatpush1.msra.mxu0 %v2642
        %2644 = vmatprep.subr.mxu0 0.0
        %2645 = vmatpush1.msra.mxu0 0.0
        %2646 = vmatprep.subr.mxu0 0.0
        %2647 = vmatpush1.msra.mxu0 0.0
        %2648 = vmatprep.subr.mxu0 0.0
        %2649 = vmatpush1.msra.mxu0 0.0
        %2650 = vmatprep.subr.mxu0 0.0
        %2651 = vmatpush1.msra.mxu0 0.0
        %2652 = vmatprep.subr.mxu0 0.0
        %2653 = vmatpush1.msra.mxu0 0.0
        %2654 = vmatprep.subr.mxu0 0.0
        %2655 = vmatpush1.msra.mxu0 0.0
        %2656 = vmatprep.subr.mxu0 0.0
        %2657 = vmatpush1.msra.mxu0 0.0
        %2658 = vmatprep.subr.mxu0 0.0
        %2659 = vmatpush1.msra.mxu0 0.0
        %2660 = vmatprep.subr.mxu0 0.0
        %2661 = vmatpush1.msra.mxu0 0.0
        %2662 = vmatprep.subr.mxu0 0.0
        %2663 = vmatpush1.msra.mxu0 0.0
        %2664 = vmatprep.subr.mxu0 0.0
        %2665 = vmatpush1.msra.mxu0 0.0
        %2666 = vmatprep.subr.mxu0 0.0
        %2667 = vmatpush1.msra.mxu0 0.0
        %2668 = vmatprep.subr.mxu0 0.0
        %2669 = vmatpush1.msra.mxu0 0.0
        %2670 = vmatprep.subr.mxu0 0.0
        %2671 = vmatpush1.msra.mxu0 0.0
        %2672 = vmatprep.subr.mxu0 0.0
        %2673 = vmatpush1.msra.mxu0 0.0
        %2674 = vmatprep.subr.mxu0 0.0
        %2675 = vmatpush1.msra.mxu0 0.0
        %2676 = vmatprep.subr.mxu0 0.0
        %2677 = vmatpush1.msra.mxu0 0.0
        %2678 = vmatprep.subr.mxu0 0.0
        %2679 = vmatpush1.msra.mxu0 0.0
        %2680 = vmatprep.subr.mxu0 0.0
        %2681 = vmatpush1.msra.mxu0 0.0
        %2682 = vmatprep.subr.mxu0 0.0
        %2683 = vmatpush1.msra.mxu0 0.0
        %2684 = vmatprep.subr.mxu0 0.0
        %2685 = vmatpush1.msra.mxu0 0.0
        %2686 = vmatprep.subr.mxu0 0.0
        %2687 = vmatpush1.msra.mxu0 0.0
        %2688 = vmatprep.subr.mxu0 0.0
        %2689 = vmatpush1.msra.mxu0 0.0
        %2690 = vmatprep.subr.mxu0 0.0
        %2691 = vmatpush1.msra.mxu0 0.0
        %2692 = vmatprep.subr.mxu0 0.0
        %2693 = vmatpush1.msra.mxu0 0.0
        %2694 = vmatprep.subr.mxu0 0.0
        %2695 = vmatpush1.msra.mxu0 0.0
        %2696 = vmatprep.subr.mxu0 0.0
        %2697 = vmatpush1.msra.mxu0 0.0
        %2698 = vmatprep.subr.mxu0 0.0
        %2699 = vmatpush1.msra.mxu0 0.0
        %2700 = vmatprep.subr.mxu0 0.0
        %2701 = vmatpush1.msra.mxu0 0.0
        %2702 = vmatprep.subr.mxu0 0.0
        %2703 = vmatpush1.msra.mxu0 0.0
        %2704 = vmatprep.mubr.f32.mxu0 0.0
        %v2705 = vand.u32 %v245, 4294901760
        %v2706 = vsub.f32 %v245, %v2705
        %v2707 = vand.u32 %v2706, 4294901760
        %2708 = vmatmul.mubr.f32.gmra.mrb[0].mxu0 %v2707
        %v2709 = vpop.f32.mrb[0].mxu0
        %v2710 = vadd.f32 %v2628, %v2709
        %v2711 = vpop.f32.mrb[0].mxu0
        %2712 = vmatprep.mubr.f32.mxu0 0.0
        %v2713 = vand.u32 %v248, 4294901760
        %v2714 = vsub.f32 %v248, %v2713
        %v2715 = vand.u32 %v2714, 4294901760
        %2716 = vmatmul.mubr.f32.gmra.mrb[0].mxu0 %v2715
        %v2717 = vpop.f32.mrb[0].mxu0
        %v2718 = vadd.f32 %v2635, %v2717
        %v2719 = vpop.f32.mrb[0].mxu0
        %2720 = vdwg.mxu0
        %2721 = vmatprep.subr.mxu0 0.0
        %v2722 = vand.u32 %v2379, 4294901760
        %v2723 = vsub.f32 %v2379, %v2722
        %v2724 = vand.u32 %v2723, 4294901760
        %2725 = vmatpush1.msra.mxu0 %v2724
        %2726 = vmatprep.subr.mxu0 0.0
        %v2727 = vand.u32 %v2380, 4294901760
        %v2728 = vsub.f32 %v2380, %v2727
        %v2729 = vand.u32 %v2728, 4294901760
        %2730 = vmatpush1.msra.mxu0 %v2729
        %2731 = vmatprep.subr.mxu0 0.0
        %2732 = vmatpush1.msra.mxu0 0.0
        %2733 = vmatprep.subr.mxu0 0.0
        %2734 = vmatpush1.msra.mxu0 0.0
        %2735 = vmatprep.subr.mxu0 0.0
        %2736 = vmatpush1.msra.mxu0 0.0
        %2737 = vmatprep.subr.mxu0 0.0
        %2738 = vmatpush1.msra.mxu0 0.0
        %2739 = vmatprep.subr.mxu0 0.0
        %2740 = vmatpush1.msra.mxu0 0.0
        %2741 = vmatprep.subr.mxu0 0.0
        %2742 = vmatpush1.msra.mxu0 0.0
        %2743 = vmatprep.subr.mxu0 0.0
        %2744 = vmatpush1.msra.mxu0 0.0
        %2745 = vmatprep.subr.mxu0 0.0
        %2746 = vmatpush1.msra.mxu0 0.0
        %2747 = vmatprep.subr.mxu0 0.0
        %2748 = vmatpush1.msra.mxu0 0.0
        %2749 = vmatprep.subr.mxu0 0.0
        %2750 = vmatpush1.msra.mxu0 0.0
        %2751 = vmatprep.subr.mxu0 0.0
        %2752 = vmatpush1.msra.mxu0 0.0
        %2753 = vmatprep.subr.mxu0 0.0
        %2754 = vmatpush1.msra.mxu0 0.0
        %2755 = vmatprep.subr.mxu0 0.0
        %2756 = vmatpush1.msra.mxu0 0.0
        %2757 = vmatprep.subr.mxu0 0.0
        %2758 = vmatpush1.msra.mxu0 0.0
        %2759 = vmatprep.subr.mxu0 0.0
        %2760 = vmatpush1.msra.mxu0 0.0
        %2761 = vmatprep.subr.mxu0 0.0
        %2762 = vmatpush1.msra.mxu0 0.0
        %2763 = vmatprep.subr.mxu0 0.0
        %2764 = vmatpush1.msra.mxu0 0.0
        %2765 = vmatprep.subr.mxu0 0.0
        %2766 = vmatpush1.msra.mxu0 0.0
        %2767 = vmatprep.subr.mxu0 0.0
        %2768 = vmatpush1.msra.mxu0 0.0
        %2769 = vmatprep.subr.mxu0 0.0
        %2770 = vmatpush1.msra.mxu0 0.0
        %2771 = vmatprep.subr.mxu0 0.0
        %2772 = vmatpush1.msra.mxu0 0.0
        %2773 = vmatprep.subr.mxu0 0.0
        %2774 = vmatpush1.msra.mxu0 0.0
        %2775 = vmatprep.subr.mxu0 0.0
        %2776 = vmatpush1.msra.mxu0 0.0
        %2777 = vmatprep.subr.mxu0 0.0
        %2778 = vmatpush1.msra.mxu0 0.0
        %2779 = vmatprep.subr.mxu0 0.0
        %2780 = vmatpush1.msra.mxu0 0.0
        %2781 = vmatprep.subr.mxu0 0.0
        %2782 = vmatpush1.msra.mxu0 0.0
        %2783 = vmatprep.subr.mxu0 0.0
        %2784 = vmatpush1.msra.mxu0 0.0
        %2785 = vmatprep.subr.mxu0 0.0
        %2786 = vmatpush1.msra.mxu0 0.0
        %2787 = vmatprep.subr.mxu0 0.0
        %2788 = vmatpush1.msra.mxu0 0.0
        %2789 = vmatprep.subr.mxu0 0.0
        %2790 = vmatpush1.msra.mxu0 0.0
        %2791 = vmatprep.mubr.f32.mxu0 0.0
        %v2792 = vand.u32 %v245, 4294901760
        %2793 = vmatmul.mubr.f32.gmra.mrb[0].mxu0 %v2792
        %v2794 = vpop.f32.mrb[0].mxu0
        %v2795 = vadd.f32 %v2710, %v2794
        %v2796 = vpop.f32.mrb[0].mxu0
        %2797 = vmatprep.mubr.f32.mxu0 0.0
        %v2798 = vand.u32 %v248, 4294901760
        %2799 = vmatmul.mubr.f32.gmra.mrb[0].mxu0 %v2798
        %v2800 = vpop.f32.mrb[0].mxu0
        %v2801 = vadd.f32 %v2718, %v2800
        %v2802 = vpop.f32.mrb[0].mxu0
        %2803 = vdwg.mxu0
        %2804 = vmatprep.subr.mxu0 0.0
        %v2805 = vand.u32 %v2379, 4294901760
        %2806 = vmatpush1.msra.mxu0 %v2805
        %2807 = vmatprep.subr.mxu0 0.0
        %v2808 = vand.u32 %v2380, 4294901760
        %2809 = vmatpush1.msra.mxu0 %v2808
        %2810 = vmatprep.subr.mxu0 0.0
        %2811 = vmatpush1.msra.mxu0 0.0
        %2812 = vmatprep.subr.mxu0 0.0
        %2813 = vmatpush1.msra.mxu0 0.0
        %2814 = vmatprep.subr.mxu0 0.0
        %2815 = vmatpush1.msra.mxu0 0.0
        %2816 = vmatprep.subr.mxu0 0.0
        %2817 = vmatpush1.msra.mxu0 0.0
        %2818 = vmatprep.subr.mxu0 0.0
        %2819 = vmatpush1.msra.mxu0 0.0
        %2820 = vmatprep.subr.mxu0 0.0
        %2821 = vmatpush1.msra.mxu0 0.0
        %2822 = vmatprep.subr.mxu0 0.0
        %2823 = vmatpush1.msra.mxu0 0.0
        %2824 = vmatprep.subr.mxu0 0.0
        %2825 = vmatpush1.msra.mxu0 0.0
        %2826 = vmatprep.subr.mxu0 0.0
        %2827 = vmatpush1.msra.mxu0 0.0
        %2828 = vmatprep.subr.mxu0 0.0
        %2829 = vmatpush1.msra.mxu0 0.0
        %2830 = vmatprep.subr.mxu0 0.0
        %2831 = vmatpush1.msra.mxu0 0.0
        %2832 = vmatprep.subr.mxu0 0.0
        %2833 = vmatpush1.msra.mxu0 0.0
        %2834 = vmatprep.subr.mxu0 0.0
        %2835 = vmatpush1.msra.mxu0 0.0
        %2836 = vmatprep.subr.mxu0 0.0
        %2837 = vmatpush1.msra.mxu0 0.0
        %2838 = vmatprep.subr.mxu0 0.0
        %2839 = vmatpush1.msra.mxu0 0.0
        %2840 = vmatprep.subr.mxu0 0.0
        %2841 = vmatpush1.msra.mxu0 0.0
        %2842 = vmatprep.subr.mxu0 0.0
        %2843 = vmatpush1.msra.mxu0 0.0
        %2844 = vmatprep.subr.mxu0 0.0
        %2845 = vmatpush1.msra.mxu0 0.0
        %2846 = vmatprep.subr.mxu0 0.0
        %2847 = vmatpush1.msra.mxu0 0.0
        %2848 = vmatprep.subr.mxu0 0.0
        %2849 = vmatpush1.msra.mxu0 0.0
        %2850 = vmatprep.subr.mxu0 0.0
        %2851 = vmatpush1.msra.mxu0 0.0
        %2852 = vmatprep.subr.mxu0 0.0
        %2853 = vmatpush1.msra.mxu0 0.0
        %2854 = vmatprep.subr.mxu0 0.0
        %2855 = vmatpush1.msra.mxu0 0.0
        %2856 = vmatprep.subr.mxu0 0.0
        %2857 = vmatpush1.msra.mxu0 0.0
        %2858 = vmatprep.subr.mxu0 0.0
        %2859 = vmatpush1.msra.mxu0 0.0
        %2860 = vmatprep.subr.mxu0 0.0
        %2861 = vmatpush1.msra.mxu0 0.0
        %2862 = vmatprep.subr.mxu0 0.0
        %2863 = vmatpush1.msra.mxu0 0.0
        %2864 = vmatprep.subr.mxu0 0.0
        %2865 = vmatpush1.msra.mxu0 0.0
        %2866 = vmatprep.subr.mxu0 0.0
        %2867 = vmatpush1.msra.mxu0 0.0
        %2868 = vmatprep.subr.mxu0 0.0
        %2869 = vmatpush1.msra.mxu0 0.0
        %2870 = vmatprep.mubr.f32.mxu0 0.0
        %v2871 = vand.u32 %v245, 4294901760
        %2872 = vmatmul.mubr.f32.gmra.mrb[0].mxu0 %v2871
        %v2873 = vpop.f32.mrb[0].mxu0
        %v2874 = vadd.f32 %v2795, %v2873
        %v2875 = vpop.f32.mrb[0].mxu0
        %2876 = vmatprep.mubr.f32.mxu0 0.0
        %v2877 = vand.u32 %v248, 4294901760
        %2878 = vmatmul.mubr.f32.gmra.mrb[0].mxu0 %v2877
        %v2879 = vpop.f32.mrb[0].mxu0
        %v2880 = vadd.f32 %v2801, %v2879
        %v2881 = vpop.f32.mrb[0].mxu0
        %2882 = vdwg.mxu0
        %v2884 = vsel %vm243, %v2874, 0
        %v2887 = vsel %vm243, %v2880, 0
        %2889 = vmatprep.subr.mxu0 0.0
        %v2890 = vand.u32 %v239, 4294901760
        %2891 = vmatpush1.msra.mxu0 %v2890
        %2892 = vmatprep.subr.mxu0 0.0
        %v2893 = vand.u32 %v240, 4294901760
        %2894 = vmatpush1.msra.mxu0 %v2893
        %2895 = vmatprep.subr.mxu0 0.0
        %2896 = vmatpush1.msra.mxu0 0.0
        %2897 = vmatprep.subr.mxu0 0.0
        %2898 = vmatpush1.msra.mxu0 0.0
        %2899 = vmatprep.subr.mxu0 0.0
        %2900 = vmatpush1.msra.mxu0 0.0
        %2901 = vmatprep.subr.mxu0 0.0
        %2902 = vmatpush1.msra.mxu0 0.0
        %2903 = vmatprep.subr.mxu0 0.0
        %2904 = vmatpush1.msra.mxu0 0.0
        %2905 = vmatprep.subr.mxu0 0.0
        %2906 = vmatpush1.msra.mxu0 0.0
        %2907 = vmatprep.subr.mxu0 0.0
        %2908 = vmatpush1.msra.mxu0 0.0
        %2909 = vmatprep.subr.mxu0 0.0
        %2910 = vmatpush1.msra.mxu0 0.0
        %2911 = vmatprep.subr.mxu0 0.0
        %2912 = vmatpush1.msra.mxu0 0.0
        %2913 = vmatprep.subr.mxu0 0.0
        %2914 = vmatpush1.msra.mxu0 0.0
        %2915 = vmatprep.subr.mxu0 0.0
        %2916 = vmatpush1.msra.mxu0 0.0
        %2917 = vmatprep.subr.mxu0 0.0
        %2918 = vmatpush1.msra.mxu0 0.0
        %2919 = vmatprep.subr.mxu0 0.0
        %2920 = vmatpush1.msra.mxu0 0.0
        %2921 = vmatprep.subr.mxu0 0.0
        %2922 = vmatpush1.msra.mxu0 0.0
        %2923 = vmatprep.subr.mxu0 0.0
        %2924 = vmatpush1.msra.mxu0 0.0
        %2925 = vmatprep.subr.mxu0 0.0
        %2926 = vmatpush1.msra.mxu0 0.0
        %2927 = vmatprep.subr.mxu0 0.0
        %2928 = vmatpush1.msra.mxu0 0.0
        %2929 = vmatprep.subr.mxu0 0.0
        %2930 = vmatpush1.msra.mxu0 0.0
        %2931 = vmatprep.subr.mxu0 0.0
        %2932 = vmatpush1.msra.mxu0 0.0
        %2933 = vmatprep.subr.mxu0 0.0
        %2934 = vmatpush1.msra.mxu0 0.0
        %2935 = vmatprep.subr.mxu0 0.0
        %2936 = vmatpush1.msra.mxu0 0.0
        %2937 = vmatprep.subr.mxu0 0.0
        %2938 = vmatpush1.msra.mxu0 0.0
        %2939 = vmatprep.subr.mxu0 0.0
        %2940 = vmatpush1.msra.mxu0 0.0
        %2941 = vmatprep.subr.mxu0 0.0
        %2942 = vmatpush1.msra.mxu0 0.0
        %2943 = vmatprep.subr.mxu0 0.0
        %2944 = vmatpush1.msra.mxu0 0.0
        %2945 = vmatprep.subr.mxu0 0.0
        %2946 = vmatpush1.msra.mxu0 0.0
        %2947 = vmatprep.subr.mxu0 0.0
        %2948 = vmatpush1.msra.mxu0 0.0
        %2949 = vmatprep.subr.mxu0 0.0
        %2950 = vmatpush1.msra.mxu0 0.0
        %2951 = vmatprep.subr.mxu0 0.0
        %2952 = vmatpush1.msra.mxu0 0.0
        %2953 = vmatprep.subr.mxu0 0.0
        %2954 = vmatpush1.msra.mxu0 0.0
        %2955 = vmatprep.mubr.f32.mxu0 0.0
        %v2956 = vand.u32 %v2884, 4294901760
        %v2957 = vsub.f32 %v2884, %v2956
        %v2958 = vand.u32 %v2957, 4294901760
        %v2959 = vsub.f32 %v2957, %v2958
        %v2960 = vand.u32 %v2959, 4294901760
        %2961 = vmatmul.mubr.f32.gmra.mrb[0].mxu0 %v2960
        %v2962 = vpop.f32.mrb[0].mxu0
        %v2963 = vadd.f32 0.0, %v2962
        %v2964 = vpop.f32.mrb[0].mxu0
        %2965 = vmatprep.mubr.f32.mxu0 0.0
        %v2966 = vand.u32 %v2887, 4294901760
        %v2967 = vsub.f32 %v2887, %v2966
        %v2968 = vand.u32 %v2967, 4294901760
        %v2969 = vsub.f32 %v2967, %v2968
        %v2970 = vand.u32 %v2969, 4294901760
        %2971 = vmatmul.mubr.f32.gmra.mrb[0].mxu0 %v2970
        %v2972 = vpop.f32.mrb[0].mxu0
        %v2973 = vadd.f32 0.0, %v2972
        %v2974 = vpop.f32.mrb[0].mxu0
        %2975 = vdwg.mxu0
        %2976 = vmatprep.subr.mxu0 0.0
        %v2977 = vand.u32 %v239, 4294901760
        %v2978 = vsub.f32 %v239, %v2977
        %v2979 = vand.u32 %v2978, 4294901760
        %v2980 = vsub.f32 %v2978, %v2979
        %v2981 = vand.u32 %v2980, 4294901760
        %2982 = vmatpush1.msra.mxu0 %v2981
        %2983 = vmatprep.subr.mxu0 0.0
        %v2984 = vand.u32 %v240, 4294901760
        %v2985 = vsub.f32 %v240, %v2984
        %v2986 = vand.u32 %v2985, 4294901760
        %v2987 = vsub.f32 %v2985, %v2986
        %v2988 = vand.u32 %v2987, 4294901760
        %2989 = vmatpush1.msra.mxu0 %v2988
        %2990 = vmatprep.subr.mxu0 0.0
        %2991 = vmatpush1.msra.mxu0 0.0
        %2992 = vmatprep.subr.mxu0 0.0
        %2993 = vmatpush1.msra.mxu0 0.0
        %2994 = vmatprep.subr.mxu0 0.0
        %2995 = vmatpush1.msra.mxu0 0.0
        %2996 = vmatprep.subr.mxu0 0.0
        %2997 = vmatpush1.msra.mxu0 0.0
        %2998 = vmatprep.subr.mxu0 0.0
        %2999 = vmatpush1.msra.mxu0 0.0
        %3000 = vmatprep.subr.mxu0 0.0
        %3001 = vmatpush1.msra.mxu0 0.0
        %3002 = vmatprep.subr.mxu0 0.0
        %3003 = vmatpush1.msra.mxu0 0.0
        %3004 = vmatprep.subr.mxu0 0.0
        %3005 = vmatpush1.msra.mxu0 0.0
        %3006 = vmatprep.subr.mxu0 0.0
        %3007 = vmatpush1.msra.mxu0 0.0
        %3008 = vmatprep.subr.mxu0 0.0
        %3009 = vmatpush1.msra.mxu0 0.0
        %3010 = vmatprep.subr.mxu0 0.0
        %3011 = vmatpush1.msra.mxu0 0.0
        %3012 = vmatprep.subr.mxu0 0.0
        %3013 = vmatpush1.msra.mxu0 0.0
        %3014 = vmatprep.subr.mxu0 0.0
        %3015 = vmatpush1.msra.mxu0 0.0
        %3016 = vmatprep.subr.mxu0 0.0
        %3017 = vmatpush1.msra.mxu0 0.0
        %3018 = vmatprep.subr.mxu0 0.0
        %3019 = vmatpush1.msra.mxu0 0.0
        %3020 = vmatprep.subr.mxu0 0.0
        %3021 = vmatpush1.msra.mxu0 0.0
        %3022 = vmatprep.subr.mxu0 0.0
        %3023 = vmatpush1.msra.mxu0 0.0
        %3024 = vmatprep.subr.mxu0 0.0
        %3025 = vmatpush1.msra.mxu0 0.0
        %3026 = vmatprep.subr.mxu0 0.0
        %3027 = vmatpush1.msra.mxu0 0.0
        %3028 = vmatprep.subr.mxu0 0.0
        %3029 = vmatpush1.msra.mxu0 0.0
        %3030 = vmatprep.subr.mxu0 0.0
        %3031 = vmatpush1.msra.mxu0 0.0
        %3032 = vmatprep.subr.mxu0 0.0
        %3033 = vmatpush1.msra.mxu0 0.0
        %3034 = vmatprep.subr.mxu0 0.0
        %3035 = vmatpush1.msra.mxu0 0.0
        %3036 = vmatprep.subr.mxu0 0.0
        %3037 = vmatpush1.msra.mxu0 0.0
        %3038 = vmatprep.subr.mxu0 0.0
        %3039 = vmatpush1.msra.mxu0 0.0
        %3040 = vmatprep.subr.mxu0 0.0
        %3041 = vmatpush1.msra.mxu0 0.0
        %3042 = vmatprep.subr.mxu0 0.0
        %3043 = vmatpush1.msra.mxu0 0.0
        %3044 = vmatprep.subr.mxu0 0.0
        %3045 = vmatpush1.msra.mxu0 0.0
        %3046 = vmatprep.subr.mxu0 0.0
        %3047 = vmatpush1.msra.mxu0 0.0
        %3048 = vmatprep.subr.mxu0 0.0
        %3049 = vmatpush1.msra.mxu0 0.0
        %3050 = vmatprep.mubr.f32.mxu0 0.0
        %v3051 = vand.u32 %v2884, 4294901760
        %3052 = vmatmul.mubr.f32.gmra.mrb[0].mxu0 %v3051
        %v3053 = vpop.f32.mrb[0].mxu0
        %v3054 = vadd.f32 %v2963, %v3053
        %v3055 = vpop.f32.mrb[0].mxu0
        %3056 = vmatprep.mubr.f32.mxu0 0.0
        %v3057 = vand.u32 %v2887, 4294901760
        %3058 = vmatmul.mubr.f32.gmra.mrb[0].mxu0 %v3057
        %v3059 = vpop.f32.mrb[0].mxu0
        %v3060 = vadd.f32 %v2973, %v3059
        %v3061 = vpop.f32.mrb[0].mxu0
        %3062 = vdwg.mxu0
        %3063 = vmatprep.subr.mxu0 0.0
        %v3064 = vand.u32 %v239, 4294901760
        %v3065 = vsub.f32 %v239, %v3064
        %3066 = vmatpush1.msra.mxu0 %v3065
        %3067 = vmatprep.subr.mxu0 0.0
        %v3068 = vand.u32 %v240, 4294901760
        %v3069 = vsub.f32 %v240, %v3068
        %3070 = vmatpush1.msra.mxu0 %v3069
        %3071 = vmatprep.subr.mxu0 0.0
        %3072 = vmatpush1.msra.mxu0 0.0
        %3073 = vmatprep.subr.mxu0 0.0
        %3074 = vmatpush1.msra.mxu0 0.0
        %3075 = vmatprep.subr.mxu0 0.0
        %3076 = vmatpush1.msra.mxu0 0.0
        %3077 = vmatprep.subr.mxu0 0.0
        %3078 = vmatpush1.msra.mxu0 0.0
        %3079 = vmatprep.subr.mxu0 0.0
        %3080 = vmatpush1.msra.mxu0 0.0
        %3081 = vmatprep.subr.mxu0 0.0
        %3082 = vmatpush1.msra.mxu0 0.0
        %3083 = vmatprep.subr.mxu0 0.0
        %3084 = vmatpush1.msra.mxu0 0.0
        %3085 = vmatprep.subr.mxu0 0.0
        %3086 = vmatpush1.msra.mxu0 0.0
        %3087 = vmatprep.subr.mxu0 0.0
        %3088 = vmatpush1.msra.mxu0 0.0
        %3089 = vmatprep.subr.mxu0 0.0
        %3090 = vmatpush1.msra.mxu0 0.0
        %3091 = vmatprep.subr.mxu0 0.0
        %3092 = vmatpush1.msra.mxu0 0.0
        %3093 = vmatprep.subr.mxu0 0.0
        %3094 = vmatpush1.msra.mxu0 0.0
        %3095 = vmatprep.subr.mxu0 0.0
        %3096 = vmatpush1.msra.mxu0 0.0
        %3097 = vmatprep.subr.mxu0 0.0
        %3098 = vmatpush1.msra.mxu0 0.0
        %3099 = vmatprep.subr.mxu0 0.0
        %3100 = vmatpush1.msra.mxu0 0.0
        %3101 = vmatprep.subr.mxu0 0.0
        %3102 = vmatpush1.msra.mxu0 0.0
        %3103 = vmatprep.subr.mxu0 0.0
        %3104 = vmatpush1.msra.mxu0 0.0
        %3105 = vmatprep.subr.mxu0 0.0
        %3106 = vmatpush1.msra.mxu0 0.0
        %3107 = vmatprep.subr.mxu0 0.0
        %3108 = vmatpush1.msra.mxu0 0.0
        %3109 = vmatprep.subr.mxu0 0.0
        %3110 = vmatpush1.msra.mxu0 0.0
        %3111 = vmatprep.subr.mxu0 0.0
        %3112 = vmatpush1.msra.mxu0 0.0
        %3113 = vmatprep.subr.mxu0 0.0
        %3114 = vmatpush1.msra.mxu0 0.0
        %3115 = vmatprep.subr.mxu0 0.0
        %3116 = vmatpush1.msra.mxu0 0.0
        %3117 = vmatprep.subr.mxu0 0.0
        %3118 = vmatpush1.msra.mxu0 0.0
        %3119 = vmatprep.subr.mxu0 0.0
        %3120 = vmatpush1.msra.mxu0 0.0
        %3121 = vmatprep.subr.mxu0 0.0
        %3122 = vmatpush1.msra.mxu0 0.0
        %3123 = vmatprep.subr.mxu0 0.0
        %3124 = vmatpush1.msra.mxu0 0.0
        %3125 = vmatprep.subr.mxu0 0.0
        %3126 = vmatpush1.msra.mxu0 0.0
        %3127 = vmatprep.subr.mxu0 0.0
        %3128 = vmatpush1.msra.mxu0 0.0
        %3129 = vmatprep.subr.mxu0 0.0
        %3130 = vmatpush1.msra.mxu0 0.0
        %3131 = vmatprep.mubr.f32.mxu0 0.0
        %v3132 = vand.u32 %v2884, 4294901760
        %v3133 = vsub.f32 %v2884, %v3132
        %3134 = vmatmul.mubr.f32.gmra.mrb[0].mxu0 %v3133
        %v3135 = vpop.f32.mrb[0].mxu0
        %v3136 = vadd.f32 %v3054, %v3135
        %v3137 = vpop.f32.mrb[0].mxu0
        %3138 = vmatprep.mubr.f32.mxu0 0.0
        %v3139 = vand.u32 %v2887, 4294901760
        %v3140 = vsub.f32 %v2887, %v3139
        %3141 = vmatmul.mubr.f32.gmra.mrb[0].mxu0 %v3140
        %v3142 = vpop.f32.mrb[0].mxu0
        %v3143 = vadd.f32 %v3060, %v3142
        %v3144 = vpop.f32.mrb[0].mxu0
        %3145 = vdwg.mxu0
        %3146 = vmatprep.subr.mxu0 0.0
        %v3147 = vand.u32 %v239, 4294901760
        %3148 = vmatpush1.msra.mxu0 %v3147
        %3149 = vmatprep.subr.mxu0 0.0
        %v3150 = vand.u32 %v240, 4294901760
        %3151 = vmatpush1.msra.mxu0 %v3150
        %3152 = vmatprep.subr.mxu0 0.0
        %3153 = vmatpush1.msra.mxu0 0.0
        %3154 = vmatprep.subr.mxu0 0.0
        %3155 = vmatpush1.msra.mxu0 0.0
        %3156 = vmatprep.subr.mxu0 0.0
        %3157 = vmatpush1.msra.mxu0 0.0
        %3158 = vmatprep.subr.mxu0 0.0
        %3159 = vmatpush1.msra.mxu0 0.0
        %3160 = vmatprep.subr.mxu0 0.0
        %3161 = vmatpush1.msra.mxu0 0.0
        %3162 = vmatprep.subr.mxu0 0.0
        %3163 = vmatpush1.msra.mxu0 0.0
        %3164 = vmatprep.subr.mxu0 0.0
        %3165 = vmatpush1.msra.mxu0 0.0
        %3166 = vmatprep.subr.mxu0 0.0
        %3167 = vmatpush1.msra.mxu0 0.0
        %3168 = vmatprep.subr.mxu0 0.0
        %3169 = vmatpush1.msra.mxu0 0.0
        %3170 = vmatprep.subr.mxu0 0.0
        %3171 = vmatpush1.msra.mxu0 0.0
        %3172 = vmatprep.subr.mxu0 0.0
        %3173 = vmatpush1.msra.mxu0 0.0
        %3174 = vmatprep.subr.mxu0 0.0
        %3175 = vmatpush1.msra.mxu0 0.0
        %3176 = vmatprep.subr.mxu0 0.0
        %3177 = vmatpush1.msra.mxu0 0.0
        %3178 = vmatprep.subr.mxu0 0.0
        %3179 = vmatpush1.msra.mxu0 0.0
        %3180 = vmatprep.subr.mxu0 0.0
        %3181 = vmatpush1.msra.mxu0 0.0
        %3182 = vmatprep.subr.mxu0 0.0
        %3183 = vmatpush1.msra.mxu0 0.0
        %3184 = vmatprep.subr.mxu0 0.0
        %3185 = vmatpush1.msra.mxu0 0.0
        %3186 = vmatprep.subr.mxu0 0.0
        %3187 = vmatpush1.msra.mxu0 0.0
        %3188 = vmatprep.subr.mxu0 0.0
        %3189 = vmatpush1.msra.mxu0 0.0
        %3190 = vmatprep.subr.mxu0 0.0
        %3191 = vmatpush1.msra.mxu0 0.0
        %3192 = vmatprep.subr.mxu0 0.0
        %3193 = vmatpush1.msra.mxu0 0.0
        %3194 = vmatprep.subr.mxu0 0.0
        %3195 = vmatpush1.msra.mxu0 0.0
        %3196 = vmatprep.subr.mxu0 0.0
        %3197 = vmatpush1.msra.mxu0 0.0
        %3198 = vmatprep.subr.mxu0 0.0
        %3199 = vmatpush1.msra.mxu0 0.0
        %3200 = vmatprep.subr.mxu0 0.0
        %3201 = vmatpush1.msra.mxu0 0.0
        %3202 = vmatprep.subr.mxu0 0.0
        %3203 = vmatpush1.msra.mxu0 0.0
        %3204 = vmatprep.subr.mxu0 0.0
        %3205 = vmatpush1.msra.mxu0 0.0
        %3206 = vmatprep.subr.mxu0 0.0
        %3207 = vmatpush1.msra.mxu0 0.0
        %3208 = vmatprep.subr.mxu0 0.0
        %3209 = vmatpush1.msra.mxu0 0.0
        %3210 = vmatprep.subr.mxu0 0.0
        %3211 = vmatpush1.msra.mxu0 0.0
        %3212 = vmatprep.mubr.f32.mxu0 0.0
        %v3213 = vand.u32 %v2884, 4294901760
        %v3214 = vsub.f32 %v2884, %v3213
        %v3215 = vand.u32 %v3214, 4294901760
        %3216 = vmatmul.mubr.f32.gmra.mrb[0].mxu0 %v3215
        %v3217 = vpop.f32.mrb[0].mxu0
        %v3218 = vadd.f32 %v3136, %v3217
        %v3219 = vpop.f32.mrb[0].mxu0
        %3220 = vmatprep.mubr.f32.mxu0 0.0
        %v3221 = vand.u32 %v2887, 4294901760
        %v3222 = vsub.f32 %v2887, %v3221
        %v3223 = vand.u32 %v3222, 4294901760
        %3224 = vmatmul.mubr.f32.gmra.mrb[0].mxu0 %v3223
        %v3225 = vpop.f32.mrb[0].mxu0
        %v3226 = vadd.f32 %v3143, %v3225
        %v3227 = vpop.f32.mrb[0].mxu0
        %3228 = vdwg.mxu0
        %3229 = vmatprep.subr.mxu0 0.0
        %v3230 = vand.u32 %v239, 4294901760
        %v3231 = vsub.f32 %v239, %v3230
        %v3232 = vand.u32 %v3231, 4294901760
        %3233 = vmatpush1.msra.mxu0 %v3232
        %3234 = vmatprep.subr.mxu0 0.0
        %v3235 = vand.u32 %v240, 4294901760
        %v3236 = vsub.f32 %v240, %v3235
        %v3237 = vand.u32 %v3236, 4294901760
        %3238 = vmatpush1.msra.mxu0 %v3237
        %3239 = vmatprep.subr.mxu0 0.0
        %3240 = vmatpush1.msra.mxu0 0.0
        %3241 = vmatprep.subr.mxu0 0.0
        %3242 = vmatpush1.msra.mxu0 0.0
        %3243 = vmatprep.subr.mxu0 0.0
        %3244 = vmatpush1.msra.mxu0 0.0
        %3245 = vmatprep.subr.mxu0 0.0
        %3246 = vmatpush1.msra.mxu0 0.0
        %3247 = vmatprep.subr.mxu0 0.0
        %3248 = vmatpush1.msra.mxu0 0.0
        %3249 = vmatprep.subr.mxu0 0.0
        %3250 = vmatpush1.msra.mxu0 0.0
        %3251 = vmatprep.subr.mxu0 0.0
        %3252 = vmatpush1.msra.mxu0 0.0
        %3253 = vmatprep.subr.mxu0 0.0
        %3254 = vmatpush1.msra.mxu0 0.0
        %3255 = vmatprep.subr.mxu0 0.0
        %3256 = vmatpush1.msra.mxu0 0.0
        %3257 = vmatprep.subr.mxu0 0.0
        %3258 = vmatpush1.msra.mxu0 0.0
        %3259 = vmatprep.subr.mxu0 0.0
        %3260 = vmatpush1.msra.mxu0 0.0
        %3261 = vmatprep.subr.mxu0 0.0
        %3262 = vmatpush1.msra.mxu0 0.0
        %3263 = vmatprep.subr.mxu0 0.0
        %3264 = vmatpush1.msra.mxu0 0.0
        %3265 = vmatprep.subr.mxu0 0.0
        %3266 = vmatpush1.msra.mxu0 0.0
        %3267 = vmatprep.subr.mxu0 0.0
        %3268 = vmatpush1.msra.mxu0 0.0
        %3269 = vmatprep.subr.mxu0 0.0
        %3270 = vmatpush1.msra.mxu0 0.0
        %3271 = vmatprep.subr.mxu0 0.0
        %3272 = vmatpush1.msra.mxu0 0.0
        %3273 = vmatprep.subr.mxu0 0.0
        %3274 = vmatpush1.msra.mxu0 0.0
        %3275 = vmatprep.subr.mxu0 0.0
        %3276 = vmatpush1.msra.mxu0 0.0
        %3277 = vmatprep.subr.mxu0 0.0
        %3278 = vmatpush1.msra.mxu0 0.0
        %3279 = vmatprep.subr.mxu0 0.0
        %3280 = vmatpush1.msra.mxu0 0.0
        %3281 = vmatprep.subr.mxu0 0.0
        %3282 = vmatpush1.msra.mxu0 0.0
        %3283 = vmatprep.subr.mxu0 0.0
        %3284 = vmatpush1.msra.mxu0 0.0
        %3285 = vmatprep.subr.mxu0 0.0
        %3286 = vmatpush1.msra.mxu0 0.0
        %3287 = vmatprep.subr.mxu0 0.0
        %3288 = vmatpush1.msra.mxu0 0.0
        %3289 = vmatprep.subr.mxu0 0.0
        %3290 = vmatpush1.msra.mxu0 0.0
        %3291 = vmatprep.subr.mxu0 0.0
        %3292 = vmatpush1.msra.mxu0 0.0
        %3293 = vmatprep.subr.mxu0 0.0
        %3294 = vmatpush1.msra.mxu0 0.0
        %3295 = vmatprep.subr.mxu0 0.0
        %3296 = vmatpush1.msra.mxu0 0.0
        %3297 = vmatprep.subr.mxu0 0.0
        %3298 = vmatpush1.msra.mxu0 0.0
        %3299 = vmatprep.mubr.f32.mxu0 0.0
        %v3300 = vand.u32 %v2884, 4294901760
        %3301 = vmatmul.mubr.f32.gmra.mrb[0].mxu0 %v3300
        %v3302 = vpop.f32.mrb[0].mxu0
        %v3303 = vadd.f32 %v3218, %v3302
        %v3304 = vpop.f32.mrb[0].mxu0
        %3305 = vmatprep.mubr.f32.mxu0 0.0
        %v3306 = vand.u32 %v2887, 4294901760
        %3307 = vmatmul.mubr.f32.gmra.mrb[0].mxu0 %v3306
        %v3308 = vpop.f32.mrb[0].mxu0
        %v3309 = vadd.f32 %v3226, %v3308
        %v3310 = vpop.f32.mrb[0].mxu0
        %3311 = vdwg.mxu0
        %3312 = vmatprep.subr.mxu0 0.0
        %v3313 = vand.u32 %v239, 4294901760
        %3314 = vmatpush1.msra.mxu0 %v3313
        %3315 = vmatprep.subr.mxu0 0.0
        %v3316 = vand.u32 %v240, 4294901760
        %3317 = vmatpush1.msra.mxu0 %v3316
        %3318 = vmatprep.subr.mxu0 0.0
        %3319 = vmatpush1.msra.mxu0 0.0
        %3320 = vmatprep.subr.mxu0 0.0
        %3321 = vmatpush1.msra.mxu0 0.0
        %3322 = vmatprep.subr.mxu0 0.0
        %3323 = vmatpush1.msra.mxu0 0.0
        %3324 = vmatprep.subr.mxu0 0.0
        %3325 = vmatpush1.msra.mxu0 0.0
        %3326 = vmatprep.subr.mxu0 0.0
        %3327 = vmatpush1.msra.mxu0 0.0
        %3328 = vmatprep.subr.mxu0 0.0
        %3329 = vmatpush1.msra.mxu0 0.0
        %3330 = vmatprep.subr.mxu0 0.0
        %3331 = vmatpush1.msra.mxu0 0.0
        %3332 = vmatprep.subr.mxu0 0.0
        %3333 = vmatpush1.msra.mxu0 0.0
        %3334 = vmatprep.subr.mxu0 0.0
        %3335 = vmatpush1.msra.mxu0 0.0
        %3336 = vmatprep.subr.mxu0 0.0
        %3337 = vmatpush1.msra.mxu0 0.0
        %3338 = vmatprep.subr.mxu0 0.0
        %3339 = vmatpush1.msra.mxu0 0.0
        %3340 = vmatprep.subr.mxu0 0.0
        %3341 = vmatpush1.msra.mxu0 0.0
        %3342 = vmatprep.subr.mxu0 0.0
        %3343 = vmatpush1.msra.mxu0 0.0
        %3344 = vmatprep.subr.mxu0 0.0
        %3345 = vmatpush1.msra.mxu0 0.0
        %3346 = vmatprep.subr.mxu0 0.0
        %3347 = vmatpush1.msra.mxu0 0.0
        %3348 = vmatprep.subr.mxu0 0.0
        %3349 = vmatpush1.msra.mxu0 0.0
        %3350 = vmatprep.subr.mxu0 0.0
        %3351 = vmatpush1.msra.mxu0 0.0
        %3352 = vmatprep.subr.mxu0 0.0
        %3353 = vmatpush1.msra.mxu0 0.0
        %3354 = vmatprep.subr.mxu0 0.0
        %3355 = vmatpush1.msra.mxu0 0.0
        %3356 = vmatprep.subr.mxu0 0.0
        %3357 = vmatpush1.msra.mxu0 0.0
        %3358 = vmatprep.subr.mxu0 0.0
        %3359 = vmatpush1.msra.mxu0 0.0
        %3360 = vmatprep.subr.mxu0 0.0
        %3361 = vmatpush1.msra.mxu0 0.0
        %3362 = vmatprep.subr.mxu0 0.0
        %3363 = vmatpush1.msra.mxu0 0.0
        %3364 = vmatprep.subr.mxu0 0.0
        %3365 = vmatpush1.msra.mxu0 0.0
        %3366 = vmatprep.subr.mxu0 0.0
        %3367 = vmatpush1.msra.mxu0 0.0
        %3368 = vmatprep.subr.mxu0 0.0
        %3369 = vmatpush1.msra.mxu0 0.0
        %3370 = vmatprep.subr.mxu0 0.0
        %3371 = vmatpush1.msra.mxu0 0.0
        %3372 = vmatprep.subr.mxu0 0.0
        %3373 = vmatpush1.msra.mxu0 0.0
        %3374 = vmatprep.subr.mxu0 0.0
        %3375 = vmatpush1.msra.mxu0 0.0
        %3376 = vmatprep.subr.mxu0 0.0
        %3377 = vmatpush1.msra.mxu0 0.0
        %3378 = vmatprep.mubr.f32.mxu0 0.0
        %v3379 = vand.u32 %v2884, 4294901760
        %3380 = vmatmul.mubr.f32.gmra.mrb[0].mxu0 %v3379
        %v3381 = vpop.f32.mrb[0].mxu0
        %v3382 = vadd.f32 %v3303, %v3381
        %v3383 = vpop.f32.mrb[0].mxu0
        %3384 = vmatprep.mubr.f32.mxu0 0.0
        %v3385 = vand.u32 %v2887, 4294901760
        %3386 = vmatmul.mubr.f32.gmra.mrb[0].mxu0 %v3385
        %v3387 = vpop.f32.mrb[0].mxu0
        %v3388 = vadd.f32 %v3309, %v3387
        %v3389 = vpop.f32.mrb[0].mxu0
        %3390 = vdwg.mxu0
        %s3391 = scalar_lea.vmem %s234, 128 [#allocation8]
        %3392 = vst.msk [vmem:[%s3391] sm:$0xf] %vm1260, %v3382
        %3394 = vrot.lane.b32.xlu0 %v3382, 124
        %v3395 = vpop.permute.xlu0 %3394
        %s3397 = scalar_lea.vmem %s234, 132 [#allocation8]
        %3398 = vst.msk [vmem:[%s3397] sm:$0xf] %vm1260, %v3395
        %3399 = vrot.lane.b32.xlu0 %v3382, 120
        %v3400 = vpop.permute.xlu0 %3399
        %s3402 = scalar_lea.vmem %s234, 136 [#allocation8]
        %3403 = vst.msk [vmem:[%s3402] sm:$0xf] %vm1260, %v3400
        %3404 = vrot.lane.b32.xlu0 %v3382, 116
        %v3405 = vpop.permute.xlu0 %3404
        %s3407 = scalar_lea.vmem %s234, 140 [#allocation8]
        %3408 = vst.msk [vmem:[%s3407] sm:$0xf] %vm1260, %v3405
        %s3409 = scalar_lea.vmem %s234, 144 [#allocation8]
        %3410 = vst.msk [vmem:[%s3409 - $0x4] sm:$0xf0] %vm1279, %v3382
        %s3411 = scalar_lea.vmem %s234, 148 [#allocation8]
        %3412 = vst.msk [vmem:[%s3411 - $0x4] sm:$0xf0] %vm1279, %v3395
        %s3413 = scalar_lea.vmem %s234, 152 [#allocation8]
        %3414 = vst.msk [vmem:[%s3413 - $0x4] sm:$0xf0] %vm1279, %v3400
        %s3415 = scalar_lea.vmem %s234, 156 [#allocation8]
        %3416 = vst.msk [vmem:[%s3415 - $0x4] sm:$0xf0] %vm1279, %v3405
        %s3417 = scalar_lea.vmem %s234, 160 [#allocation8]
        %3418 = vst.msk [vmem:[%s3417] sm:$0xf] %vm1260, %v3388
        %3420 = vrot.lane.b32.xlu0 %v3388, 124
        %v3421 = vpop.permute.xlu0 %3420
        %s3423 = scalar_lea.vmem %s234, 164 [#allocation8]
        %3424 = vst.msk [vmem:[%s3423] sm:$0xf] %vm1260, %v3421
        %3425 = vrot.lane.b32.xlu0 %v3388, 120
        %v3426 = vpop.permute.xlu0 %3425
        %s3428 = scalar_lea.vmem %s234, 168 [#allocation8]
        %3429 = vst.msk [vmem:[%s3428] sm:$0xf] %vm1260, %v3426
        %3430 = vrot.lane.b32.xlu0 %v3388, 116
        %v3431 = vpop.permute.xlu0 %3430
        %s3433 = scalar_lea.vmem %s234, 172 [#allocation8]
        %3434 = vst.msk [vmem:[%s3433] sm:$0xf] %vm1260, %v3431
        %s3435 = scalar_lea.vmem %s234, 176 [#allocation8]
        %3436 = vst.msk [vmem:[%s3435 - $0x4] sm:$0xf0] %vm1279, %v3388
        %s3437 = scalar_lea.vmem %s234, 180 [#allocation8]
        %3438 = vst.msk [vmem:[%s3437 - $0x4] sm:$0xf0] %vm1279, %v3421
        %s3439 = scalar_lea.vmem %s234, 184 [#allocation8]
        %3440 = vst.msk [vmem:[%s3439 - $0x4] sm:$0xf0] %vm1279, %v3426
        %s3441 = scalar_lea.vmem %s234, 188 [#allocation8]
        %3442 = vst.msk [vmem:[%s3441 - $0x4] sm:$0xf0] %vm1279, %v3431
        %s3443 = scalar_lea.vmem %s212, 48 [#allocation7]
        %v3444 = vld [vmem:[%s3443] sm:$0xff]
        %v3445 = vld [vmem:[%s3443 + $0x8] sm:$0xff]
        %3446 = vmatprep.subr.mxu0 0.0
        %v3447 = vand.u32 %v3444, 4294901760
        %3448 = vmatpush1.msra.mxu0 %v3447
        %3449 = vmatprep.subr.mxu0 0.0
        %v3450 = vand.u32 %v3445, 4294901760
        %3451 = vmatpush1.msra.mxu0 %v3450
        %3452 = vmatprep.subr.mxu0 0.0
        %3453 = vmatpush1.msra.mxu0 0.0
        %3454 = vmatprep.subr.mxu0 0.0
        %3455 = vmatpush1.msra.mxu0 0.0
        %3456 = vmatprep.subr.mxu0 0.0
        %3457 = vmatpush1.msra.mxu0 0.0
        %3458 = vmatprep.subr.mxu0 0.0
        %3459 = vmatpush1.msra.mxu0 0.0
        %3460 = vmatprep.subr.mxu0 0.0
        %3461 = vmatpush1.msra.mxu0 0.0
        %3462 = vmatprep.subr.mxu0 0.0
        %3463 = vmatpush1.msra.mxu0 0.0
        %3464 = vmatprep.subr.mxu0 0.0
        %3465 = vmatpush1.msra.mxu0 0.0
        %3466 = vmatprep.subr.mxu0 0.0
        %3467 = vmatpush1.msra.mxu0 0.0
        %3468 = vmatprep.subr.mxu0 0.0
        %3469 = vmatpush1.msra.mxu0 0.0
        %3470 = vmatprep.subr.mxu0 0.0
        %3471 = vmatpush1.msra.mxu0 0.0
        %3472 = vmatprep.subr.mxu0 0.0
        %3473 = vmatpush1.msra.mxu0 0.0
        %3474 = vmatprep.subr.mxu0 0.0
        %3475 = vmatpush1.msra.mxu0 0.0
        %3476 = vmatprep.subr.mxu0 0.0
        %3477 = vmatpush1.msra.mxu0 0.0
        %3478 = vmatprep.subr.mxu0 0.0
        %3479 = vmatpush1.msra.mxu0 0.0
        %3480 = vmatprep.subr.mxu0 0.0
        %3481 = vmatpush1.msra.mxu0 0.0
        %3482 = vmatprep.subr.mxu0 0.0
        %3483 = vmatpush1.msra.mxu0 0.0
        %3484 = vmatprep.subr.mxu0 0.0
        %3485 = vmatpush1.msra.mxu0 0.0
        %3486 = vmatprep.subr.mxu0 0.0
        %3487 = vmatpush1.msra.mxu0 0.0
        %3488 = vmatprep.subr.mxu0 0.0
        %3489 = vmatpush1.msra.mxu0 0.0
        %3490 = vmatprep.subr.mxu0 0.0
        %3491 = vmatpush1.msra.mxu0 0.0
        %3492 = vmatprep.subr.mxu0 0.0
        %3493 = vmatpush1.msra.mxu0 0.0
        %3494 = vmatprep.subr.mxu0 0.0
        %3495 = vmatpush1.msra.mxu0 0.0
        %3496 = vmatprep.subr.mxu0 0.0
        %3497 = vmatpush1.msra.mxu0 0.0
        %3498 = vmatprep.subr.mxu0 0.0
        %3499 = vmatpush1.msra.mxu0 0.0
        %3500 = vmatprep.subr.mxu0 0.0
        %3501 = vmatpush1.msra.mxu0 0.0
        %3502 = vmatprep.subr.mxu0 0.0
        %3503 = vmatpush1.msra.mxu0 0.0
        %3504 = vmatprep.subr.mxu0 0.0
        %3505 = vmatpush1.msra.mxu0 0.0
        %3506 = vmatprep.subr.mxu0 0.0
        %3507 = vmatpush1.msra.mxu0 0.0
        %3508 = vmatprep.subr.mxu0 0.0
        %3509 = vmatpush1.msra.mxu0 0.0
        %3510 = vmatprep.subr.mxu0 0.0
        %3511 = vmatpush1.msra.mxu0 0.0
        %3512 = vmatprep.mubr.f32.mxu0 0.0
        %v3513 = vand.u32 %v245, 4294901760
        %v3514 = vsub.f32 %v245, %v3513
        %v3515 = vand.u32 %v3514, 4294901760
        %v3516 = vsub.f32 %v3514, %v3515
        %v3517 = vand.u32 %v3516, 4294901760
        %3518 = vmatmul.mubr.f32.gmra.mrb[0].mxu0 %v3517
        %v3519 = vpop.f32.mrb[0].mxu0
        %v3520 = vadd.f32 0.0, %v3519
        %v3521 = vpop.f32.mrb[0].mxu0
        %3522 = vmatprep.mubr.f32.mxu0 0.0
        %v3523 = vand.u32 %v248, 4294901760
        %v3524 = vsub.f32 %v248, %v3523
        %v3525 = vand.u32 %v3524, 4294901760
        %v3526 = vsub.f32 %v3524, %v3525
        %v3527 = vand.u32 %v3526, 4294901760
        %3528 = vmatmul.mubr.f32.gmra.mrb[0].mxu0 %v3527
        %v3529 = vpop.f32.mrb[0].mxu0
        %v3530 = vadd.f32 0.0, %v3529
        %v3531 = vpop.f32.mrb[0].mxu0
        %3532 = vdwg.mxu0
        %3533 = vmatprep.subr.mxu0 0.0
        %v3534 = vand.u32 %v3444, 4294901760
        %v3535 = vsub.f32 %v3444, %v3534
        %v3536 = vand.u32 %v3535, 4294901760
        %v3537 = vsub.f32 %v3535, %v3536
        %v3538 = vand.u32 %v3537, 4294901760
        %3539 = vmatpush1.msra.mxu0 %v3538
        %3540 = vmatprep.subr.mxu0 0.0
        %v3541 = vand.u32 %v3445, 4294901760
        %v3542 = vsub.f32 %v3445, %v3541
        %v3543 = vand.u32 %v3542, 4294901760
        %v3544 = vsub.f32 %v3542, %v3543
        %v3545 = vand.u32 %v3544, 4294901760
        %3546 = vmatpush1.msra.mxu0 %v3545
        %3547 = vmatprep.subr.mxu0 0.0
        %3548 = vmatpush1.msra.mxu0 0.0
        %3549 = vmatprep.subr.mxu0 0.0
        %3550 = vmatpush1.msra.mxu0 0.0
        %3551 = vmatprep.subr.mxu0 0.0
        %3552 = vmatpush1.msra.mxu0 0.0
        %3553 = vmatprep.subr.mxu0 0.0
        %3554 = vmatpush1.msra.mxu0 0.0
        %3555 = vmatprep.subr.mxu0 0.0
        %3556 = vmatpush1.msra.mxu0 0.0
        %3557 = vmatprep.subr.mxu0 0.0
        %3558 = vmatpush1.msra.mxu0 0.0
        %3559 = vmatprep.subr.mxu0 0.0
        %3560 = vmatpush1.msra.mxu0 0.0
        %3561 = vmatprep.subr.mxu0 0.0
        %3562 = vmatpush1.msra.mxu0 0.0
        %3563 = vmatprep.subr.mxu0 0.0
        %3564 = vmatpush1.msra.mxu0 0.0
        %3565 = vmatprep.subr.mxu0 0.0
        %3566 = vmatpush1.msra.mxu0 0.0
        %3567 = vmatprep.subr.mxu0 0.0
        %3568 = vmatpush1.msra.mxu0 0.0
        %3569 = vmatprep.subr.mxu0 0.0
        %3570 = vmatpush1.msra.mxu0 0.0
        %3571 = vmatprep.subr.mxu0 0.0
        %3572 = vmatpush1.msra.mxu0 0.0
        %3573 = vmatprep.subr.mxu0 0.0
        %3574 = vmatpush1.msra.mxu0 0.0
        %3575 = vmatprep.subr.mxu0 0.0
        %3576 = vmatpush1.msra.mxu0 0.0
        %3577 = vmatprep.subr.mxu0 0.0
        %3578 = vmatpush1.msra.mxu0 0.0
        %3579 = vmatprep.subr.mxu0 0.0
        %3580 = vmatpush1.msra.mxu0 0.0
        %3581 = vmatprep.subr.mxu0 0.0
        %3582 = vmatpush1.msra.mxu0 0.0
        %3583 = vmatprep.subr.mxu0 0.0
        %3584 = vmatpush1.msra.mxu0 0.0
        %3585 = vmatprep.subr.mxu0 0.0
        %3586 = vmatpush1.msra.mxu0 0.0
        %3587 = vmatprep.subr.mxu0 0.0
        %3588 = vmatpush1.msra.mxu0 0.0
        %3589 = vmatprep.subr.mxu0 0.0
        %3590 = vmatpush1.msra.mxu0 0.0
        %3591 = vmatprep.subr.mxu0 0.0
        %3592 = vmatpush1.msra.mxu0 0.0
        %3593 = vmatprep.subr.mxu0 0.0
        %3594 = vmatpush1.msra.mxu0 0.0
        %3595 = vmatprep.subr.mxu0 0.0
        %3596 = vmatpush1.msra.mxu0 0.0
        %3597 = vmatprep.subr.mxu0 0.0
        %3598 = vmatpush1.msra.mxu0 0.0
        %3599 = vmatprep.subr.mxu0 0.0
        %3600 = vmatpush1.msra.mxu0 0.0
        %3601 = vmatprep.subr.mxu0 0.0
        %3602 = vmatpush1.msra.mxu0 0.0
        %3603 = vmatprep.subr.mxu0 0.0
        %3604 = vmatpush1.msra.mxu0 0.0
        %3605 = vmatprep.subr.mxu0 0.0
        %3606 = vmatpush1.msra.mxu0 0.0
        %3607 = vmatprep.mubr.f32.mxu0 0.0
        %v3608 = vand.u32 %v245, 4294901760
        %3609 = vmatmul.mubr.f32.gmra.mrb[0].mxu0 %v3608
        %v3610 = vpop.f32.mrb[0].mxu0
        %v3611 = vadd.f32 %v3520, %v3610
        %v3612 = vpop.f32.mrb[0].mxu0
        %3613 = vmatprep.mubr.f32.mxu0 0.0
        %v3614 = vand.u32 %v248, 4294901760
        %3615 = vmatmul.mubr.f32.gmra.mrb[0].mxu0 %v3614
        %v3616 = vpop.f32.mrb[0].mxu0
        %v3617 = vadd.f32 %v3530, %v3616
        %v3618 = vpop.f32.mrb[0].mxu0
        %3619 = vdwg.mxu0
        %3620 = vmatprep.subr.mxu0 0.0
        %v3621 = vand.u32 %v3444, 4294901760
        %v3622 = vsub.f32 %v3444, %v3621
        %3623 = vmatpush1.msra.mxu0 %v3622
        %3624 = vmatprep.subr.mxu0 0.0
        %v3625 = vand.u32 %v3445, 4294901760
        %v3626 = vsub.f32 %v3445, %v3625
        %3627 = vmatpush1.msra.mxu0 %v3626
        %3628 = vmatprep.subr.mxu0 0.0
        %3629 = vmatpush1.msra.mxu0 0.0
        %3630 = vmatprep.subr.mxu0 0.0
        %3631 = vmatpush1.msra.mxu0 0.0
        %3632 = vmatprep.subr.mxu0 0.0
        %3633 = vmatpush1.msra.mxu0 0.0
        %3634 = vmatprep.subr.mxu0 0.0
        %3635 = vmatpush1.msra.mxu0 0.0
        %3636 = vmatprep.subr.mxu0 0.0
        %3637 = vmatpush1.msra.mxu0 0.0
        %3638 = vmatprep.subr.mxu0 0.0
        %3639 = vmatpush1.msra.mxu0 0.0
        %3640 = vmatprep.subr.mxu0 0.0
        %3641 = vmatpush1.msra.mxu0 0.0
        %3642 = vmatprep.subr.mxu0 0.0
        %3643 = vmatpush1.msra.mxu0 0.0
        %3644 = vmatprep.subr.mxu0 0.0
        %3645 = vmatpush1.msra.mxu0 0.0
        %3646 = vmatprep.subr.mxu0 0.0
        %3647 = vmatpush1.msra.mxu0 0.0
        %3648 = vmatprep.subr.mxu0 0.0
        %3649 = vmatpush1.msra.mxu0 0.0
        %3650 = vmatprep.subr.mxu0 0.0
        %3651 = vmatpush1.msra.mxu0 0.0
        %3652 = vmatprep.subr.mxu0 0.0
        %3653 = vmatpush1.msra.mxu0 0.0
        %3654 = vmatprep.subr.mxu0 0.0
        %3655 = vmatpush1.msra.mxu0 0.0
        %3656 = vmatprep.subr.mxu0 0.0
        %3657 = vmatpush1.msra.mxu0 0.0
        %3658 = vmatprep.subr.mxu0 0.0
        %3659 = vmatpush1.msra.mxu0 0.0
        %3660 = vmatprep.subr.mxu0 0.0
        %3661 = vmatpush1.msra.mxu0 0.0
        %3662 = vmatprep.subr.mxu0 0.0
        %3663 = vmatpush1.msra.mxu0 0.0
        %3664 = vmatprep.subr.mxu0 0.0
        %3665 = vmatpush1.msra.mxu0 0.0
        %3666 = vmatprep.subr.mxu0 0.0
        %3667 = vmatpush1.msra.mxu0 0.0
        %3668 = vmatprep.subr.mxu0 0.0
        %3669 = vmatpush1.msra.mxu0 0.0
        %3670 = vmatprep.subr.mxu0 0.0
        %3671 = vmatpush1.msra.mxu0 0.0
        %3672 = vmatprep.subr.mxu0 0.0
        %3673 = vmatpush1.msra.mxu0 0.0
        %3674 = vmatprep.subr.mxu0 0.0
        %3675 = vmatpush1.msra.mxu0 0.0
        %3676 = vmatprep.subr.mxu0 0.0
        %3677 = vmatpush1.msra.mxu0 0.0
        %3678 = vmatprep.subr.mxu0 0.0
        %3679 = vmatpush1.msra.mxu0 0.0
        %3680 = vmatprep.subr.mxu0 0.0
        %3681 = vmatpush1.msra.mxu0 0.0
        %3682 = vmatprep.subr.mxu0 0.0
        %3683 = vmatpush1.msra.mxu0 0.0
        %3684 = vmatprep.subr.mxu0 0.0
        %3685 = vmatpush1.msra.mxu0 0.0
        %3686 = vmatprep.subr.mxu0 0.0
        %3687 = vmatpush1.msra.mxu0 0.0
        %3688 = vmatprep.mubr.f32.mxu0 0.0
        %v3689 = vand.u32 %v245, 4294901760
        %v3690 = vsub.f32 %v245, %v3689
        %3691 = vmatmul.mubr.f32.gmra.mrb[0].mxu0 %v3690
        %v3692 = vpop.f32.mrb[0].mxu0
        %v3693 = vadd.f32 %v3611, %v3692
        %v3694 = vpop.f32.mrb[0].mxu0
        %3695 = vmatprep.mubr.f32.mxu0 0.0
        %v3696 = vand.u32 %v248, 4294901760
        %v3697 = vsub.f32 %v248, %v3696
        %3698 = vmatmul.mubr.f32.gmra.mrb[0].mxu0 %v3697
        %v3699 = vpop.f32.mrb[0].mxu0
        %v3700 = vadd.f32 %v3617, %v3699
        %v3701 = vpop.f32.mrb[0].mxu0
        %3702 = vdwg.mxu0
        %3703 = vmatprep.subr.mxu0 0.0
        %v3704 = vand.u32 %v3444, 4294901760
        %3705 = vmatpush1.msra.mxu0 %v3704
        %3706 = vmatprep.subr.mxu0 0.0
        %v3707 = vand.u32 %v3445, 4294901760
        %3708 = vmatpush1.msra.mxu0 %v3707
        %3709 = vmatprep.subr.mxu0 0.0
        %3710 = vmatpush1.msra.mxu0 0.0
        %3711 = vmatprep.subr.mxu0 0.0
        %3712 = vmatpush1.msra.mxu0 0.0
        %3713 = vmatprep.subr.mxu0 0.0
        %3714 = vmatpush1.msra.mxu0 0.0
        %3715 = vmatprep.subr.mxu0 0.0
        %3716 = vmatpush1.msra.mxu0 0.0
        %3717 = vmatprep.subr.mxu0 0.0
        %3718 = vmatpush1.msra.mxu0 0.0
        %3719 = vmatprep.subr.mxu0 0.0
        %3720 = vmatpush1.msra.mxu0 0.0
        %3721 = vmatprep.subr.mxu0 0.0
        %3722 = vmatpush1.msra.mxu0 0.0
        %3723 = vmatprep.subr.mxu0 0.0
        %3724 = vmatpush1.msra.mxu0 0.0
        %3725 = vmatprep.subr.mxu0 0.0
        %3726 = vmatpush1.msra.mxu0 0.0
        %3727 = vmatprep.subr.mxu0 0.0
        %3728 = vmatpush1.msra.mxu0 0.0
        %3729 = vmatprep.subr.mxu0 0.0
        %3730 = vmatpush1.msra.mxu0 0.0
        %3731 = vmatprep.subr.mxu0 0.0
        %3732 = vmatpush1.msra.mxu0 0.0
        %3733 = vmatprep.subr.mxu0 0.0
        %3734 = vmatpush1.msra.mxu0 0.0
        %3735 = vmatprep.subr.mxu0 0.0
        %3736 = vmatpush1.msra.mxu0 0.0
        %3737 = vmatprep.subr.mxu0 0.0
        %3738 = vmatpush1.msra.mxu0 0.0
        %3739 = vmatprep.subr.mxu0 0.0
        %3740 = vmatpush1.msra.mxu0 0.0
        %3741 = vmatprep.subr.mxu0 0.0
        %3742 = vmatpush1.msra.mxu0 0.0
        %3743 = vmatprep.subr.mxu0 0.0
        %3744 = vmatpush1.msra.mxu0 0.0
        %3745 = vmatprep.subr.mxu0 0.0
        %3746 = vmatpush1.msra.mxu0 0.0
        %3747 = vmatprep.subr.mxu0 0.0
        %3748 = vmatpush1.msra.mxu0 0.0
        %3749 = vmatprep.subr.mxu0 0.0
        %3750 = vmatpush1.msra.mxu0 0.0
        %3751 = vmatprep.subr.mxu0 0.0
        %3752 = vmatpush1.msra.mxu0 0.0
        %3753 = vmatprep.subr.mxu0 0.0
        %3754 = vmatpush1.msra.mxu0 0.0
        %3755 = vmatprep.subr.mxu0 0.0
        %3756 = vmatpush1.msra.mxu0 0.0
        %3757 = vmatprep.subr.mxu0 0.0
        %3758 = vmatpush1.msra.mxu0 0.0
        %3759 = vmatprep.subr.mxu0 0.0
        %3760 = vmatpush1.msra.mxu0 0.0
        %3761 = vmatprep.subr.mxu0 0.0
        %3762 = vmatpush1.msra.mxu0 0.0
        %3763 = vmatprep.subr.mxu0 0.0
        %3764 = vmatpush1.msra.mxu0 0.0
        %3765 = vmatprep.subr.mxu0 0.0
        %3766 = vmatpush1.msra.mxu0 0.0
        %3767 = vmatprep.subr.mxu0 0.0
        %3768 = vmatpush1.msra.mxu0 0.0
        %3769 = vmatprep.mubr.f32.mxu0 0.0
        %v3770 = vand.u32 %v245, 4294901760
        %v3771 = vsub.f32 %v245, %v3770
        %v3772 = vand.u32 %v3771, 4294901760
        %3773 = vmatmul.mubr.f32.gmra.mrb[0].mxu0 %v3772
        %v3774 = vpop.f32.mrb[0].mxu0
        %v3775 = vadd.f32 %v3693, %v3774
        %v3776 = vpop.f32.mrb[0].mxu0
        %3777 = vmatprep.mubr.f32.mxu0 0.0
        %v3778 = vand.u32 %v248, 4294901760
        %v3779 = vsub.f32 %v248, %v3778
        %v3780 = vand.u32 %v3779, 4294901760
        %3781 = vmatmul.mubr.f32.gmra.mrb[0].mxu0 %v3780
        %v3782 = vpop.f32.mrb[0].mxu0
        %v3783 = vadd.f32 %v3700, %v3782
        %v3784 = vpop.f32.mrb[0].mxu0
        %3785 = vdwg.mxu0
        %3786 = vmatprep.subr.mxu0 0.0
        %v3787 = vand.u32 %v3444, 4294901760
        %v3788 = vsub.f32 %v3444, %v3787
        %v3789 = vand.u32 %v3788, 4294901760
        %3790 = vmatpush1.msra.mxu0 %v3789
        %3791 = vmatprep.subr.mxu0 0.0
        %v3792 = vand.u32 %v3445, 4294901760
        %v3793 = vsub.f32 %v3445, %v3792
        %v3794 = vand.u32 %v3793, 4294901760
        %3795 = vmatpush1.msra.mxu0 %v3794
        %3796 = vmatprep.subr.mxu0 0.0
        %3797 = vmatpush1.msra.mxu0 0.0
        %3798 = vmatprep.subr.mxu0 0.0
        %3799 = vmatpush1.msra.mxu0 0.0
        %3800 = vmatprep.subr.mxu0 0.0
        %3801 = vmatpush1.msra.mxu0 0.0
        %3802 = vmatprep.subr.mxu0 0.0
        %3803 = vmatpush1.msra.mxu0 0.0
        %3804 = vmatprep.subr.mxu0 0.0
        %3805 = vmatpush1.msra.mxu0 0.0
        %3806 = vmatprep.subr.mxu0 0.0
        %3807 = vmatpush1.msra.mxu0 0.0
        %3808 = vmatprep.subr.mxu0 0.0
        %3809 = vmatpush1.msra.mxu0 0.0
        %3810 = vmatprep.subr.mxu0 0.0
        %3811 = vmatpush1.msra.mxu0 0.0
        %3812 = vmatprep.subr.mxu0 0.0
        %3813 = vmatpush1.msra.mxu0 0.0
        %3814 = vmatprep.subr.mxu0 0.0
        %3815 = vmatpush1.msra.mxu0 0.0
        %3816 = vmatprep.subr.mxu0 0.0
        %3817 = vmatpush1.msra.mxu0 0.0
        %3818 = vmatprep.subr.mxu0 0.0
        %3819 = vmatpush1.msra.mxu0 0.0
        %3820 = vmatprep.subr.mxu0 0.0
        %3821 = vmatpush1.msra.mxu0 0.0
        %3822 = vmatprep.subr.mxu0 0.0
        %3823 = vmatpush1.msra.mxu0 0.0
        %3824 = vmatprep.subr.mxu0 0.0
        %3825 = vmatpush1.msra.mxu0 0.0
        %3826 = vmatprep.subr.mxu0 0.0
        %3827 = vmatpush1.msra.mxu0 0.0
        %3828 = vmatprep.subr.mxu0 0.0
        %3829 = vmatpush1.msra.mxu0 0.0
        %3830 = vmatprep.subr.mxu0 0.0
        %3831 = vmatpush1.msra.mxu0 0.0
        %3832 = vmatprep.subr.mxu0 0.0
        %3833 = vmatpush1.msra.mxu0 0.0
        %3834 = vmatprep.subr.mxu0 0.0
        %3835 = vmatpush1.msra.mxu0 0.0
        %3836 = vmatprep.subr.mxu0 0.0
        %3837 = vmatpush1.msra.mxu0 0.0
        %3838 = vmatprep.subr.mxu0 0.0
        %3839 = vmatpush1.msra.mxu0 0.0
        %3840 = vmatprep.subr.mxu0 0.0
        %3841 = vmatpush1.msra.mxu0 0.0
        %3842 = vmatprep.subr.mxu0 0.0
        %3843 = vmatpush1.msra.mxu0 0.0
        %3844 = vmatprep.subr.mxu0 0.0
        %3845 = vmatpush1.msra.mxu0 0.0
        %3846 = vmatprep.subr.mxu0 0.0
        %3847 = vmatpush1.msra.mxu0 0.0
        %3848 = vmatprep.subr.mxu0 0.0
        %3849 = vmatpush1.msra.mxu0 0.0
        %3850 = vmatprep.subr.mxu0 0.0
        %3851 = vmatpush1.msra.mxu0 0.0
        %3852 = vmatprep.subr.mxu0 0.0
        %3853 = vmatpush1.msra.mxu0 0.0
        %3854 = vmatprep.subr.mxu0 0.0
        %3855 = vmatpush1.msra.mxu0 0.0
        %3856 = vmatprep.mubr.f32.mxu0 0.0
        %v3857 = vand.u32 %v245, 4294901760
        %3858 = vmatmul.mubr.f32.gmra.mrb[0].mxu0 %v3857
        %v3859 = vpop.f32.mrb[0].mxu0
        %v3860 = vadd.f32 %v3775, %v3859
        %v3861 = vpop.f32.mrb[0].mxu0
        %3862 = vmatprep.mubr.f32.mxu0 0.0
        %v3863 = vand.u32 %v248, 4294901760
        %3864 = vmatmul.mubr.f32.gmra.mrb[0].mxu0 %v3863
        %v3865 = vpop.f32.mrb[0].mxu0
        %v3866 = vadd.f32 %v3783, %v3865
        %v3867 = vpop.f32.mrb[0].mxu0
        %3868 = vdwg.mxu0
        %3869 = vmatprep.subr.mxu0 0.0
        %v3870 = vand.u32 %v3444, 4294901760
        %3871 = vmatpush1.msra.mxu0 %v3870
        %3872 = vmatprep.subr.mxu0 0.0
        %v3873 = vand.u32 %v3445, 4294901760
        %3874 = vmatpush1.msra.mxu0 %v3873
        %3875 = vmatprep.subr.mxu0 0.0
        %3876 = vmatpush1.msra.mxu0 0.0
        %3877 = vmatprep.subr.mxu0 0.0
        %3878 = vmatpush1.msra.mxu0 0.0
        %3879 = vmatprep.subr.mxu0 0.0
        %3880 = vmatpush1.msra.mxu0 0.0
        %3881 = vmatprep.subr.mxu0 0.0
        %3882 = vmatpush1.msra.mxu0 0.0
        %3883 = vmatprep.subr.mxu0 0.0
        %3884 = vmatpush1.msra.mxu0 0.0
        %3885 = vmatprep.subr.mxu0 0.0
        %3886 = vmatpush1.msra.mxu0 0.0
        %3887 = vmatprep.subr.mxu0 0.0
        %3888 = vmatpush1.msra.mxu0 0.0
        %3889 = vmatprep.subr.mxu0 0.0
        %3890 = vmatpush1.msra.mxu0 0.0
        %3891 = vmatprep.subr.mxu0 0.0
        %3892 = vmatpush1.msra.mxu0 0.0
        %3893 = vmatprep.subr.mxu0 0.0
        %3894 = vmatpush1.msra.mxu0 0.0
        %3895 = vmatprep.subr.mxu0 0.0
        %3896 = vmatpush1.msra.mxu0 0.0
        %3897 = vmatprep.subr.mxu0 0.0
        %3898 = vmatpush1.msra.mxu0 0.0
        %3899 = vmatprep.subr.mxu0 0.0
        %3900 = vmatpush1.msra.mxu0 0.0
        %3901 = vmatprep.subr.mxu0 0.0
        %3902 = vmatpush1.msra.mxu0 0.0
        %3903 = vmatprep.subr.mxu0 0.0
        %3904 = vmatpush1.msra.mxu0 0.0
        %3905 = vmatprep.subr.mxu0 0.0
        %3906 = vmatpush1.msra.mxu0 0.0
        %3907 = vmatprep.subr.mxu0 0.0
        %3908 = vmatpush1.msra.mxu0 0.0
        %3909 = vmatprep.subr.mxu0 0.0
        %3910 = vmatpush1.msra.mxu0 0.0
        %3911 = vmatprep.subr.mxu0 0.0
        %3912 = vmatpush1.msra.mxu0 0.0
        %3913 = vmatprep.subr.mxu0 0.0
        %3914 = vmatpush1.msra.mxu0 0.0
        %3915 = vmatprep.subr.mxu0 0.0
        %3916 = vmatpush1.msra.mxu0 0.0
        %3917 = vmatprep.subr.mxu0 0.0
        %3918 = vmatpush1.msra.mxu0 0.0
        %3919 = vmatprep.subr.mxu0 0.0
        %3920 = vmatpush1.msra.mxu0 0.0
        %3921 = vmatprep.subr.mxu0 0.0
        %3922 = vmatpush1.msra.mxu0 0.0
        %3923 = vmatprep.subr.mxu0 0.0
        %3924 = vmatpush1.msra.mxu0 0.0
        %3925 = vmatprep.subr.mxu0 0.0
        %3926 = vmatpush1.msra.mxu0 0.0
        %3927 = vmatprep.subr.mxu0 0.0
        %3928 = vmatpush1.msra.mxu0 0.0
        %3929 = vmatprep.subr.mxu0 0.0
        %3930 = vmatpush1.msra.mxu0 0.0
        %3931 = vmatprep.subr.mxu0 0.0
        %3932 = vmatpush1.msra.mxu0 0.0
        %3933 = vmatprep.subr.mxu0 0.0
        %3934 = vmatpush1.msra.mxu0 0.0
        %3935 = vmatprep.mubr.f32.mxu0 0.0
        %v3936 = vand.u32 %v245, 4294901760
        %3937 = vmatmul.mubr.f32.gmra.mrb[0].mxu0 %v3936
        %v3938 = vpop.f32.mrb[0].mxu0
        %v3939 = vadd.f32 %v3860, %v3938
        %v3940 = vpop.f32.mrb[0].mxu0
        %3941 = vmatprep.mubr.f32.mxu0 0.0
        %v3942 = vand.u32 %v248, 4294901760
        %3943 = vmatmul.mubr.f32.gmra.mrb[0].mxu0 %v3942
        %v3944 = vpop.f32.mrb[0].mxu0
        %v3945 = vadd.f32 %v3866, %v3944
        %v3946 = vpop.f32.mrb[0].mxu0
        %3947 = vdwg.mxu0
        %v3949 = vsel %vm243, %v3939, 0
        %v3952 = vsel %vm243, %v3945, 0
        %3954 = vmatprep.subr.mxu0 0.0
        %v3955 = vand.u32 %v239, 4294901760
        %3956 = vmatpush1.msra.mxu0 %v3955
        %3957 = vmatprep.subr.mxu0 0.0
        %v3958 = vand.u32 %v240, 4294901760
        %3959 = vmatpush1.msra.mxu0 %v3958
        %3960 = vmatprep.subr.mxu0 0.0
        %3961 = vmatpush1.msra.mxu0 0.0
        %3962 = vmatprep.subr.mxu0 0.0
        %3963 = vmatpush1.msra.mxu0 0.0
        %3964 = vmatprep.subr.mxu0 0.0
        %3965 = vmatpush1.msra.mxu0 0.0
        %3966 = vmatprep.subr.mxu0 0.0
        %3967 = vmatpush1.msra.mxu0 0.0
        %3968 = vmatprep.subr.mxu0 0.0
        %3969 = vmatpush1.msra.mxu0 0.0
        %3970 = vmatprep.subr.mxu0 0.0
        %3971 = vmatpush1.msra.mxu0 0.0
        %3972 = vmatprep.subr.mxu0 0.0
        %3973 = vmatpush1.msra.mxu0 0.0
        %3974 = vmatprep.subr.mxu0 0.0
        %3975 = vmatpush1.msra.mxu0 0.0
        %3976 = vmatprep.subr.mxu0 0.0
        %3977 = vmatpush1.msra.mxu0 0.0
        %3978 = vmatprep.subr.mxu0 0.0
        %3979 = vmatpush1.msra.mxu0 0.0
        %3980 = vmatprep.subr.mxu0 0.0
        %3981 = vmatpush1.msra.mxu0 0.0
        %3982 = vmatprep.subr.mxu0 0.0
        %3983 = vmatpush1.msra.mxu0 0.0
        %3984 = vmatprep.subr.mxu0 0.0
        %3985 = vmatpush1.msra.mxu0 0.0
        %3986 = vmatprep.subr.mxu0 0.0
        %3987 = vmatpush1.msra.mxu0 0.0
        %3988 = vmatprep.subr.mxu0 0.0
        %3989 = vmatpush1.msra.mxu0 0.0
        %3990 = vmatprep.subr.mxu0 0.0
        %3991 = vmatpush1.msra.mxu0 0.0
        %3992 = vmatprep.subr.mxu0 0.0
        %3993 = vmatpush1.msra.mxu0 0.0
        %3994 = vmatprep.subr.mxu0 0.0
        %3995 = vmatpush1.msra.mxu0 0.0
        %3996 = vmatprep.subr.mxu0 0.0
        %3997 = vmatpush1.msra.mxu0 0.0
        %3998 = vmatprep.subr.mxu0 0.0
        %3999 = vmatpush1.msra.mxu0 0.0
        %4000 = vmatprep.subr.mxu0 0.0
        %4001 = vmatpush1.msra.mxu0 0.0
        %4002 = vmatprep.subr.mxu0 0.0
        %4003 = vmatpush1.msra.mxu0 0.0
        %4004 = vmatprep.subr.mxu0 0.0
        %4005 = vmatpush1.msra.mxu0 0.0
        %4006 = vmatprep.subr.mxu0 0.0
        %4007 = vmatpush1.msra.mxu0 0.0
        %4008 = vmatprep.subr.mxu0 0.0
        %4009 = vmatpush1.msra.mxu0 0.0
        %4010 = vmatprep.subr.mxu0 0.0
        %4011 = vmatpush1.msra.mxu0 0.0
        %4012 = vmatprep.subr.mxu0 0.0
        %4013 = vmatpush1.msra.mxu0 0.0
        %4014 = vmatprep.subr.mxu0 0.0
        %4015 = vmatpush1.msra.mxu0 0.0
        %4016 = vmatprep.subr.mxu0 0.0
        %4017 = vmatpush1.msra.mxu0 0.0
        %4018 = vmatprep.subr.mxu0 0.0
        %4019 = vmatpush1.msra.mxu0 0.0
        %4020 = vmatprep.mubr.f32.mxu0 0.0
        %v4021 = vand.u32 %v3949, 4294901760
        %v4022 = vsub.f32 %v3949, %v4021
        %v4023 = vand.u32 %v4022, 4294901760
        %v4024 = vsub.f32 %v4022, %v4023
        %v4025 = vand.u32 %v4024, 4294901760
        %4026 = vmatmul.mubr.f32.gmra.mrb[0].mxu0 %v4025
        %v4027 = vpop.f32.mrb[0].mxu0
        %v4028 = vadd.f32 0.0, %v4027
        %v4029 = vpop.f32.mrb[0].mxu0
        %4030 = vmatprep.mubr.f32.mxu0 0.0
        %v4031 = vand.u32 %v3952, 4294901760
        %v4032 = vsub.f32 %v3952, %v4031
        %v4033 = vand.u32 %v4032, 4294901760
        %v4034 = vsub.f32 %v4032, %v4033
        %v4035 = vand.u32 %v4034, 4294901760
        %4036 = vmatmul.mubr.f32.gmra.mrb[0].mxu0 %v4035
        %v4037 = vpop.f32.mrb[0].mxu0
        %v4038 = vadd.f32 0.0, %v4037
        %v4039 = vpop.f32.mrb[0].mxu0
        %4040 = vdwg.mxu0
        %4041 = vmatprep.subr.mxu0 0.0
        %v4042 = vand.u32 %v239, 4294901760
        %v4043 = vsub.f32 %v239, %v4042
        %v4044 = vand.u32 %v4043, 4294901760
        %v4045 = vsub.f32 %v4043, %v4044
        %v4046 = vand.u32 %v4045, 4294901760
        %4047 = vmatpush1.msra.mxu0 %v4046
        %4048 = vmatprep.subr.mxu0 0.0
        %v4049 = vand.u32 %v240, 4294901760
        %v4050 = vsub.f32 %v240, %v4049
        %v4051 = vand.u32 %v4050, 4294901760
        %v4052 = vsub.f32 %v4050, %v4051
        %v4053 = vand.u32 %v4052, 4294901760
        %4054 = vmatpush1.msra.mxu0 %v4053
        %4055 = vmatprep.subr.mxu0 0.0
        %4056 = vmatpush1.msra.mxu0 0.0
        %4057 = vmatprep.subr.mxu0 0.0
        %4058 = vmatpush1.msra.mxu0 0.0
        %4059 = vmatprep.subr.mxu0 0.0
        %4060 = vmatpush1.msra.mxu0 0.0
        %4061 = vmatprep.subr.mxu0 0.0
        %4062 = vmatpush1.msra.mxu0 0.0
        %4063 = vmatprep.subr.mxu0 0.0
        %4064 = vmatpush1.msra.mxu0 0.0
        %4065 = vmatprep.subr.mxu0 0.0
        %4066 = vmatpush1.msra.mxu0 0.0
        %4067 = vmatprep.subr.mxu0 0.0
        %4068 = vmatpush1.msra.mxu0 0.0
        %4069 = vmatprep.subr.mxu0 0.0
        %4070 = vmatpush1.msra.mxu0 0.0
        %4071 = vmatprep.subr.mxu0 0.0
        %4072 = vmatpush1.msra.mxu0 0.0
        %4073 = vmatprep.subr.mxu0 0.0
        %4074 = vmatpush1.msra.mxu0 0.0
        %4075 = vmatprep.subr.mxu0 0.0
        %4076 = vmatpush1.msra.mxu0 0.0
        %4077 = vmatprep.subr.mxu0 0.0
        %4078 = vmatpush1.msra.mxu0 0.0
        %4079 = vmatprep.subr.mxu0 0.0
        %4080 = vmatpush1.msra.mxu0 0.0
        %4081 = vmatprep.subr.mxu0 0.0
        %4082 = vmatpush1.msra.mxu0 0.0
        %4083 = vmatprep.subr.mxu0 0.0
        %4084 = vmatpush1.msra.mxu0 0.0
        %4085 = vmatprep.subr.mxu0 0.0
        %4086 = vmatpush1.msra.mxu0 0.0
        %4087 = vmatprep.subr.mxu0 0.0
        %4088 = vmatpush1.msra.mxu0 0.0
        %4089 = vmatprep.subr.mxu0 0.0
        %4090 = vmatpush1.msra.mxu0 0.0
        %4091 = vmatprep.subr.mxu0 0.0
        %4092 = vmatpush1.msra.mxu0 0.0
        %4093 = vmatprep.subr.mxu0 0.0
        %4094 = vmatpush1.msra.mxu0 0.0
        %4095 = vmatprep.subr.mxu0 0.0
        %4096 = vmatpush1.msra.mxu0 0.0
        %4097 = vmatprep.subr.mxu0 0.0
        %4098 = vmatpush1.msra.mxu0 0.0
        %4099 = vmatprep.subr.mxu0 0.0
        %4100 = vmatpush1.msra.mxu0 0.0
        %4101 = vmatprep.subr.mxu0 0.0
        %4102 = vmatpush1.msra.mxu0 0.0
        %4103 = vmatprep.subr.mxu0 0.0
        %4104 = vmatpush1.msra.mxu0 0.0
        %4105 = vmatprep.subr.mxu0 0.0
        %4106 = vmatpush1.msra.mxu0 0.0
        %4107 = vmatprep.subr.mxu0 0.0
        %4108 = vmatpush1.msra.mxu0 0.0
        %4109 = vmatprep.subr.mxu0 0.0
        %4110 = vmatpush1.msra.mxu0 0.0
        %4111 = vmatprep.subr.mxu0 0.0
        %4112 = vmatpush1.msra.mxu0 0.0
        %4113 = vmatprep.subr.mxu0 0.0
        %4114 = vmatpush1.msra.mxu0 0.0
        %4115 = vmatprep.mubr.f32.mxu0 0.0
        %v4116 = vand.u32 %v3949, 4294901760
        %4117 = vmatmul.mubr.f32.gmra.mrb[0].mxu0 %v4116
        %v4118 = vpop.f32.mrb[0].mxu0
        %v4119 = vadd.f32 %v4028, %v4118
        %v4120 = vpop.f32.mrb[0].mxu0
        %4121 = vmatprep.mubr.f32.mxu0 0.0
        %v4122 = vand.u32 %v3952, 4294901760
        %4123 = vmatmul.mubr.f32.gmra.mrb[0].mxu0 %v4122
        %v4124 = vpop.f32.mrb[0].mxu0
        %v4125 = vadd.f32 %v4038, %v4124
        %v4126 = vpop.f32.mrb[0].mxu0
        %4127 = vdwg.mxu0
        %4128 = vmatprep.subr.mxu0 0.0
        %v4129 = vand.u32 %v239, 4294901760
        %v4130 = vsub.f32 %v239, %v4129
        %4131 = vmatpush1.msra.mxu0 %v4130
        %4132 = vmatprep.subr.mxu0 0.0
        %v4133 = vand.u32 %v240, 4294901760
        %v4134 = vsub.f32 %v240, %v4133
        %4135 = vmatpush1.msra.mxu0 %v4134
        %4136 = vmatprep.subr.mxu0 0.0
        %4137 = vmatpush1.msra.mxu0 0.0
        %4138 = vmatprep.subr.mxu0 0.0
        %4139 = vmatpush1.msra.mxu0 0.0
        %4140 = vmatprep.subr.mxu0 0.0
        %4141 = vmatpush1.msra.mxu0 0.0
        %4142 = vmatprep.subr.mxu0 0.0
        %4143 = vmatpush1.msra.mxu0 0.0
        %4144 = vmatprep.subr.mxu0 0.0
        %4145 = vmatpush1.msra.mxu0 0.0
        %4146 = vmatprep.subr.mxu0 0.0
        %4147 = vmatpush1.msra.mxu0 0.0
        %4148 = vmatprep.subr.mxu0 0.0
        %4149 = vmatpush1.msra.mxu0 0.0
        %4150 = vmatprep.subr.mxu0 0.0
        %4151 = vmatpush1.msra.mxu0 0.0
        %4152 = vmatprep.subr.mxu0 0.0
        %4153 = vmatpush1.msra.mxu0 0.0
        %4154 = vmatprep.subr.mxu0 0.0
        %4155 = vmatpush1.msra.mxu0 0.0
        %4156 = vmatprep.subr.mxu0 0.0
        %4157 = vmatpush1.msra.mxu0 0.0
        %4158 = vmatprep.subr.mxu0 0.0
        %4159 = vmatpush1.msra.mxu0 0.0
        %4160 = vmatprep.subr.mxu0 0.0
        %4161 = vmatpush1.msra.mxu0 0.0
        %4162 = vmatprep.subr.mxu0 0.0
        %4163 = vmatpush1.msra.mxu0 0.0
        %4164 = vmatprep.subr.mxu0 0.0
        %4165 = vmatpush1.msra.mxu0 0.0
        %4166 = vmatprep.subr.mxu0 0.0
        %4167 = vmatpush1.msra.mxu0 0.0
        %4168 = vmatprep.subr.mxu0 0.0
        %4169 = vmatpush1.msra.mxu0 0.0
        %4170 = vmatprep.subr.mxu0 0.0
        %4171 = vmatpush1.msra.mxu0 0.0
        %4172 = vmatprep.subr.mxu0 0.0
        %4173 = vmatpush1.msra.mxu0 0.0
        %4174 = vmatprep.subr.mxu0 0.0
        %4175 = vmatpush1.msra.mxu0 0.0
        %4176 = vmatprep.subr.mxu0 0.0
        %4177 = vmatpush1.msra.mxu0 0.0
        %4178 = vmatprep.subr.mxu0 0.0
        %4179 = vmatpush1.msra.mxu0 0.0
        %4180 = vmatprep.subr.mxu0 0.0
        %4181 = vmatpush1.msra.mxu0 0.0
        %4182 = vmatprep.subr.mxu0 0.0
        %4183 = vmatpush1.msra.mxu0 0.0
        %4184 = vmatprep.subr.mxu0 0.0
        %4185 = vmatpush1.msra.mxu0 0.0
        %4186 = vmatprep.subr.mxu0 0.0
        %4187 = vmatpush1.msra.mxu0 0.0
        %4188 = vmatprep.subr.mxu0 0.0
        %4189 = vmatpush1.msra.mxu0 0.0
        %4190 = vmatprep.subr.mxu0 0.0
        %4191 = vmatpush1.msra.mxu0 0.0
        %4192 = vmatprep.subr.mxu0 0.0
        %4193 = vmatpush1.msra.mxu0 0.0
        %4194 = vmatprep.subr.mxu0 0.0
        %4195 = vmatpush1.msra.mxu0 0.0
        %4196 = vmatprep.mubr.f32.mxu0 0.0
        %v4197 = vand.u32 %v3949, 4294901760
        %v4198 = vsub.f32 %v3949, %v4197
        %4199 = vmatmul.mubr.f32.gmra.mrb[0].mxu0 %v4198
        %v4200 = vpop.f32.mrb[0].mxu0
        %v4201 = vadd.f32 %v4119, %v4200
        %v4202 = vpop.f32.mrb[0].mxu0
        %4203 = vmatprep.mubr.f32.mxu0 0.0
        %v4204 = vand.u32 %v3952, 4294901760
        %v4205 = vsub.f32 %v3952, %v4204
        %4206 = vmatmul.mubr.f32.gmra.mrb[0].mxu0 %v4205
        %v4207 = vpop.f32.mrb[0].mxu0
        %v4208 = vadd.f32 %v4125, %v4207
        %v4209 = vpop.f32.mrb[0].mxu0
        %4210 = vdwg.mxu0
        %4211 = vmatprep.subr.mxu0 0.0
        %v4212 = vand.u32 %v239, 4294901760
        %4213 = vmatpush1.msra.mxu0 %v4212
        %4214 = vmatprep.subr.mxu0 0.0
        %v4215 = vand.u32 %v240, 4294901760
        %4216 = vmatpush1.msra.mxu0 %v4215
        %4217 = vmatprep.subr.mxu0 0.0
        %4218 = vmatpush1.msra.mxu0 0.0
        %4219 = vmatprep.subr.mxu0 0.0
        %4220 = vmatpush1.msra.mxu0 0.0
        %4221 = vmatprep.subr.mxu0 0.0
        %4222 = vmatpush1.msra.mxu0 0.0
        %4223 = vmatprep.subr.mxu0 0.0
        %4224 = vmatpush1.msra.mxu0 0.0
        %4225 = vmatprep.subr.mxu0 0.0
        %4226 = vmatpush1.msra.mxu0 0.0
        %4227 = vmatprep.subr.mxu0 0.0
        %4228 = vmatpush1.msra.mxu0 0.0
        %4229 = vmatprep.subr.mxu0 0.0
        %4230 = vmatpush1.msra.mxu0 0.0
        %4231 = vmatprep.subr.mxu0 0.0
        %4232 = vmatpush1.msra.mxu0 0.0
        %4233 = vmatprep.subr.mxu0 0.0
        %4234 = vmatpush1.msra.mxu0 0.0
        %4235 = vmatprep.subr.mxu0 0.0
        %4236 = vmatpush1.msra.mxu0 0.0
        %4237 = vmatprep.subr.mxu0 0.0
        %4238 = vmatpush1.msra.mxu0 0.0
        %4239 = vmatprep.subr.mxu0 0.0
        %4240 = vmatpush1.msra.mxu0 0.0
        %4241 = vmatprep.subr.mxu0 0.0
        %4242 = vmatpush1.msra.mxu0 0.0
        %4243 = vmatprep.subr.mxu0 0.0
        %4244 = vmatpush1.msra.mxu0 0.0
        %4245 = vmatprep.subr.mxu0 0.0
        %4246 = vmatpush1.msra.mxu0 0.0
        %4247 = vmatprep.subr.mxu0 0.0
        %4248 = vmatpush1.msra.mxu0 0.0
        %4249 = vmatprep.subr.mxu0 0.0
        %4250 = vmatpush1.msra.mxu0 0.0
        %4251 = vmatprep.subr.mxu0 0.0
        %4252 = vmatpush1.msra.mxu0 0.0
        %4253 = vmatprep.subr.mxu0 0.0
        %4254 = vmatpush1.msra.mxu0 0.0
        %4255 = vmatprep.subr.mxu0 0.0
        %4256 = vmatpush1.msra.mxu0 0.0
        %4257 = vmatprep.subr.mxu0 0.0
        %4258 = vmatpush1.msra.mxu0 0.0
        %4259 = vmatprep.subr.mxu0 0.0
        %4260 = vmatpush1.msra.mxu0 0.0
        %4261 = vmatprep.subr.mxu0 0.0
        %4262 = vmatpush1.msra.mxu0 0.0
        %4263 = vmatprep.subr.mxu0 0.0
        %4264 = vmatpush1.msra.mxu0 0.0
        %4265 = vmatprep.subr.mxu0 0.0
        %4266 = vmatpush1.msra.mxu0 0.0
        %4267 = vmatprep.subr.mxu0 0.0
        %4268 = vmatpush1.msra.mxu0 0.0
        %4269 = vmatprep.subr.mxu0 0.0
        %4270 = vmatpush1.msra.mxu0 0.0
        %4271 = vmatprep.subr.mxu0 0.0
        %4272 = vmatpush1.msra.mxu0 0.0
        %4273 = vmatprep.subr.mxu0 0.0
        %4274 = vmatpush1.msra.mxu0 0.0
        %4275 = vmatprep.subr.mxu0 0.0
        %4276 = vmatpush1.msra.mxu0 0.0
        %4277 = vmatprep.mubr.f32.mxu0 0.0
        %v4278 = vand.u32 %v3949, 4294901760
        %v4279 = vsub.f32 %v3949, %v4278
        %v4280 = vand.u32 %v4279, 4294901760
        %4281 = vmatmul.mubr.f32.gmra.mrb[0].mxu0 %v4280
        %v4282 = vpop.f32.mrb[0].mxu0
        %v4283 = vadd.f32 %v4201, %v4282
        %v4284 = vpop.f32.mrb[0].mxu0
        %4285 = vmatprep.mubr.f32.mxu0 0.0
        %v4286 = vand.u32 %v3952, 4294901760
        %v4287 = vsub.f32 %v3952, %v4286
        %v4288 = vand.u32 %v4287, 4294901760
        %4289 = vmatmul.mubr.f32.gmra.mrb[0].mxu0 %v4288
        %v4290 = vpop.f32.mrb[0].mxu0
        %v4291 = vadd.f32 %v4208, %v4290
        %v4292 = vpop.f32.mrb[0].mxu0
        %4293 = vdwg.mxu0
        %4294 = vmatprep.subr.mxu0 0.0
        %v4295 = vand.u32 %v239, 4294901760
        %v4296 = vsub.f32 %v239, %v4295
        %v4297 = vand.u32 %v4296, 4294901760
        %4298 = vmatpush1.msra.mxu0 %v4297
        %4299 = vmatprep.subr.mxu0 0.0
        %v4300 = vand.u32 %v240, 4294901760
        %v4301 = vsub.f32 %v240, %v4300
        %v4302 = vand.u32 %v4301, 4294901760
        %4303 = vmatpush1.msra.mxu0 %v4302
        %4304 = vmatprep.subr.mxu0 0.0
        %4305 = vmatpush1.msra.mxu0 0.0
        %4306 = vmatprep.subr.mxu0 0.0
        %4307 = vmatpush1.msra.mxu0 0.0
        %4308 = vmatprep.subr.mxu0 0.0
        %4309 = vmatpush1.msra.mxu0 0.0
        %4310 = vmatprep.subr.mxu0 0.0
        %4311 = vmatpush1.msra.mxu0 0.0
        %4312 = vmatprep.subr.mxu0 0.0
        %4313 = vmatpush1.msra.mxu0 0.0
        %4314 = vmatprep.subr.mxu0 0.0
        %4315 = vmatpush1.msra.mxu0 0.0
        %4316 = vmatprep.subr.mxu0 0.0
        %4317 = vmatpush1.msra.mxu0 0.0
        %4318 = vmatprep.subr.mxu0 0.0
        %4319 = vmatpush1.msra.mxu0 0.0
        %4320 = vmatprep.subr.mxu0 0.0
        %4321 = vmatpush1.msra.mxu0 0.0
        %4322 = vmatprep.subr.mxu0 0.0
        %4323 = vmatpush1.msra.mxu0 0.0
        %4324 = vmatprep.subr.mxu0 0.0
        %4325 = vmatpush1.msra.mxu0 0.0
        %4326 = vmatprep.subr.mxu0 0.0
        %4327 = vmatpush1.msra.mxu0 0.0
        %4328 = vmatprep.subr.mxu0 0.0
        %4329 = vmatpush1.msra.mxu0 0.0
        %4330 = vmatprep.subr.mxu0 0.0
        %4331 = vmatpush1.msra.mxu0 0.0
        %4332 = vmatprep.subr.mxu0 0.0
        %4333 = vmatpush1.msra.mxu0 0.0
        %4334 = vmatprep.subr.mxu0 0.0
        %4335 = vmatpush1.msra.mxu0 0.0
        %4336 = vmatprep.subr.mxu0 0.0
        %4337 = vmatpush1.msra.mxu0 0.0
        %4338 = vmatprep.subr.mxu0 0.0
        %4339 = vmatpush1.msra.mxu0 0.0
        %4340 = vmatprep.subr.mxu0 0.0
        %4341 = vmatpush1.msra.mxu0 0.0
        %4342 = vmatprep.subr.mxu0 0.0
        %4343 = vmatpush1.msra.mxu0 0.0
        %4344 = vmatprep.subr.mxu0 0.0
        %4345 = vmatpush1.msra.mxu0 0.0
        %4346 = vmatprep.subr.mxu0 0.0
        %4347 = vmatpush1.msra.mxu0 0.0
        %4348 = vmatprep.subr.mxu0 0.0
        %4349 = vmatpush1.msra.mxu0 0.0
        %4350 = vmatprep.subr.mxu0 0.0
        %4351 = vmatpush1.msra.mxu0 0.0
        %4352 = vmatprep.subr.mxu0 0.0
        %4353 = vmatpush1.msra.mxu0 0.0
        %4354 = vmatprep.subr.mxu0 0.0
        %4355 = vmatpush1.msra.mxu0 0.0
        %4356 = vmatprep.subr.mxu0 0.0
        %4357 = vmatpush1.msra.mxu0 0.0
        %4358 = vmatprep.subr.mxu0 0.0
        %4359 = vmatpush1.msra.mxu0 0.0
        %4360 = vmatprep.subr.mxu0 0.0
        %4361 = vmatpush1.msra.mxu0 0.0
        %4362 = vmatprep.subr.mxu0 0.0
        %4363 = vmatpush1.msra.mxu0 0.0
        %4364 = vmatprep.mubr.f32.mxu0 0.0
        %v4365 = vand.u32 %v3949, 4294901760
        %4366 = vmatmul.mubr.f32.gmra.mrb[0].mxu0 %v4365
        %v4367 = vpop.f32.mrb[0].mxu0
        %v4368 = vadd.f32 %v4283, %v4367
        %v4369 = vpop.f32.mrb[0].mxu0
        %4370 = vmatprep.mubr.f32.mxu0 0.0
        %v4371 = vand.u32 %v3952, 4294901760
        %4372 = vmatmul.mubr.f32.gmra.mrb[0].mxu0 %v4371
        %v4373 = vpop.f32.mrb[0].mxu0
        %v4374 = vadd.f32 %v4291, %v4373
        %v4375 = vpop.f32.mrb[0].mxu0
        %4376 = vdwg.mxu0
        %4377 = vmatprep.subr.mxu0 0.0
        %v4378 = vand.u32 %v239, 4294901760
        %4379 = vmatpush1.msra.mxu0 %v4378
        %4380 = vmatprep.subr.mxu0 0.0
        %v4381 = vand.u32 %v240, 4294901760
        %4382 = vmatpush1.msra.mxu0 %v4381
        %4383 = vmatprep.subr.mxu0 0.0
        %4384 = vmatpush1.msra.mxu0 0.0
        %4385 = vmatprep.subr.mxu0 0.0
        %4386 = vmatpush1.msra.mxu0 0.0
        %4387 = vmatprep.subr.mxu0 0.0
        %4388 = vmatpush1.msra.mxu0 0.0
        %4389 = vmatprep.subr.mxu0 0.0
        %4390 = vmatpush1.msra.mxu0 0.0
        %4391 = vmatprep.subr.mxu0 0.0
        %4392 = vmatpush1.msra.mxu0 0.0
        %4393 = vmatprep.subr.mxu0 0.0
        %4394 = vmatpush1.msra.mxu0 0.0
        %4395 = vmatprep.subr.mxu0 0.0
        %4396 = vmatpush1.msra.mxu0 0.0
        %4397 = vmatprep.subr.mxu0 0.0
        %4398 = vmatpush1.msra.mxu0 0.0
        %4399 = vmatprep.subr.mxu0 0.0
        %4400 = vmatpush1.msra.mxu0 0.0
        %4401 = vmatprep.subr.mxu0 0.0
        %4402 = vmatpush1.msra.mxu0 0.0
        %4403 = vmatprep.subr.mxu0 0.0
        %4404 = vmatpush1.msra.mxu0 0.0
        %4405 = vmatprep.subr.mxu0 0.0
        %4406 = vmatpush1.msra.mxu0 0.0
        %4407 = vmatprep.subr.mxu0 0.0
        %4408 = vmatpush1.msra.mxu0 0.0
        %4409 = vmatprep.subr.mxu0 0.0
        %4410 = vmatpush1.msra.mxu0 0.0
        %4411 = vmatprep.subr.mxu0 0.0
        %4412 = vmatpush1.msra.mxu0 0.0
        %4413 = vmatprep.subr.mxu0 0.0
        %4414 = vmatpush1.msra.mxu0 0.0
        %4415 = vmatprep.subr.mxu0 0.0
        %4416 = vmatpush1.msra.mxu0 0.0
        %4417 = vmatprep.subr.mxu0 0.0
        %4418 = vmatpush1.msra.mxu0 0.0
        %4419 = vmatprep.subr.mxu0 0.0
        %4420 = vmatpush1.msra.mxu0 0.0
        %4421 = vmatprep.subr.mxu0 0.0
        %4422 = vmatpush1.msra.mxu0 0.0
        %4423 = vmatprep.subr.mxu0 0.0
        %4424 = vmatpush1.msra.mxu0 0.0
        %4425 = vmatprep.subr.mxu0 0.0
        %4426 = vmatpush1.msra.mxu0 0.0
        %4427 = vmatprep.subr.mxu0 0.0
        %4428 = vmatpush1.msra.mxu0 0.0
        %4429 = vmatprep.subr.mxu0 0.0
        %4430 = vmatpush1.msra.mxu0 0.0
        %4431 = vmatprep.subr.mxu0 0.0
        %4432 = vmatpush1.msra.mxu0 0.0
        %4433 = vmatprep.subr.mxu0 0.0
        %4434 = vmatpush1.msra.mxu0 0.0
        %4435 = vmatprep.subr.mxu0 0.0
        %4436 = vmatpush1.msra.mxu0 0.0
        %4437 = vmatprep.subr.mxu0 0.0
        %4438 = vmatpush1.msra.mxu0 0.0
        %4439 = vmatprep.subr.mxu0 0.0
        %4440 = vmatpush1.msra.mxu0 0.0
        %4441 = vmatprep.subr.mxu0 0.0
        %4442 = vmatpush1.msra.mxu0 0.0
        %4443 = vmatprep.mubr.f32.mxu0 0.0
        %v4444 = vand.u32 %v3949, 4294901760
        %4445 = vmatmul.mubr.f32.gmra.mrb[0].mxu0 %v4444
        %v4446 = vpop.f32.mrb[0].mxu0
        %v4447 = vadd.f32 %v4368, %v4446
        %v4448 = vpop.f32.mrb[0].mxu0
        %4449 = vmatprep.mubr.f32.mxu0 0.0
        %v4450 = vand.u32 %v3952, 4294901760
        %4451 = vmatmul.mubr.f32.gmra.mrb[0].mxu0 %v4450
        %v4452 = vpop.f32.mrb[0].mxu0
        %v4453 = vadd.f32 %v4374, %v4452
        %v4454 = vpop.f32.mrb[0].mxu0
        %4455 = vdwg.mxu0
        %s4456 = scalar_lea.vmem %s234, 192 [#allocation8]
        %4457 = vst.msk [vmem:[%s4456] sm:$0xf] %vm1260, %v4447
        %4459 = vrot.lane.b32.xlu0 %v4447, 124
        %v4460 = vpop.permute.xlu0 %4459
        %s4462 = scalar_lea.vmem %s234, 196 [#allocation8]
        %4463 = vst.msk [vmem:[%s4462] sm:$0xf] %vm1260, %v4460
        %4464 = vrot.lane.b32.xlu0 %v4447, 120
        %v4465 = vpop.permute.xlu0 %4464
        %s4467 = scalar_lea.vmem %s234, 200 [#allocation8]
        %4468 = vst.msk [vmem:[%s4467] sm:$0xf] %vm1260, %v4465
        %4469 = vrot.lane.b32.xlu0 %v4447, 116
        %v4470 = vpop.permute.xlu0 %4469
        %s4472 = scalar_lea.vmem %s234, 204 [#allocation8]
        %4473 = vst.msk [vmem:[%s4472] sm:$0xf] %vm1260, %v4470
        %s4474 = scalar_lea.vmem %s234, 208 [#allocation8]
        %4475 = vst.msk [vmem:[%s4474 - $0x4] sm:$0xf0] %vm1279, %v4447
        %s4476 = scalar_lea.vmem %s234, 212 [#allocation8]
        %4477 = vst.msk [vmem:[%s4476 - $0x4] sm:$0xf0] %vm1279, %v4460
        %s4478 = scalar_lea.vmem %s234, 216 [#allocation8]
        %4479 = vst.msk [vmem:[%s4478 - $0x4] sm:$0xf0] %vm1279, %v4465
        %s4480 = scalar_lea.vmem %s234, 220 [#allocation8]
        %4481 = vst.msk [vmem:[%s4480 - $0x4] sm:$0xf0] %vm1279, %v4470
        %s4482 = scalar_lea.vmem %s234, 224 [#allocation8]
        %4483 = vst.msk [vmem:[%s4482] sm:$0xf] %vm1260, %v4453
        %4485 = vrot.lane.b32.xlu0 %v4453, 124
        %v4486 = vpop.permute.xlu0 %4485
        %s4488 = scalar_lea.vmem %s234, 228 [#allocation8]
        %4489 = vst.msk [vmem:[%s4488] sm:$0xf] %vm1260, %v4486
        %4490 = vrot.lane.b32.xlu0 %v4453, 120
        %v4491 = vpop.permute.xlu0 %4490
        %s4493 = scalar_lea.vmem %s234, 232 [#allocation8]
        %4494 = vst.msk [vmem:[%s4493] sm:$0xf] %vm1260, %v4491
        %4495 = vrot.lane.b32.xlu0 %v4453, 116
        %v4496 = vpop.permute.xlu0 %4495
        %s4498 = scalar_lea.vmem %s234, 236 [#allocation8]
        %4499 = vst.msk [vmem:[%s4498] sm:$0xf] %vm1260, %v4496
        %s4500 = scalar_lea.vmem %s234, 240 [#allocation8]
        %4501 = vst.msk [vmem:[%s4500 - $0x4] sm:$0xf0] %vm1279, %v4453
        %s4502 = scalar_lea.vmem %s234, 244 [#allocation8]
        %4503 = vst.msk [vmem:[%s4502 - $0x4] sm:$0xf0] %vm1279, %v4486
        %s4504 = scalar_lea.vmem %s234, 248 [#allocation8]
        %4505 = vst.msk [vmem:[%s4504 - $0x4] sm:$0xf0] %vm1279, %v4491
        %s4506 = scalar_lea.vmem %s234, 252 [#allocation8]
        %4507 = vst.msk [vmem:[%s4506 - $0x4] sm:$0xf0] %vm1279, %v4496
        %s4508 = sand.u32 %s111, 1
        %s4509 = scalar_lea.sflag [#allocation4], %s4508
        %s4510 = sand.u32 %s111, 1
        %s4511 = smul.addr %s4510, 256
        %s4512 = scalar_lea.vmem [#allocation8], %s4511
        // Predicated region
        $region45: #{tpu_custom_call.1} parent=31 // pred_check
          %p4513 = pneg %p121
        $region46: #{tpu_custom_call.1} parent=31 // pred_check_branch
          %4515 = sbr.rel (%p4513) target = $region48
        $region47: #{tpu_custom_call.1} parent=31 // pred_region
          %s4516 = smul.u32 4, %s24
          %s4518 = ssub.s32 4096, 4096
          %4519 = vsyncadd %s4509, %s4518
          %s4520 = smul.addr %s4516, 16
          %s4521 = smul.addr %s23, 64
          %s4522 = sadd.s32 %s4520, %s4521
          %s4523 = smul.addr %s4522, 64
          %s4524 = scalar_lea.hbm %s3, %s4523
          %s4525 = sshll.u32 %s4512, 4
          %s4526 = int_to_ptr.vmem [resolvable:$true] %s4525
          %4531 = dma.vmem_to_hbm [thread:$0]  %s4526, 4096, %s4524, %s4509, 64, 64, 4
        $region48: #{tpu_custom_call.1} parent=31 // pred_fallthru
          _
      $region32: #{tpu_custom_call.1} parent=5 // pred_fallthru
        _
      %p4532 = scmp.le.s32.totalorder 2, %s14
      // Predicated region
      $region49: #{tpu_custom_call.1} parent=5 // pred_check
        %p4533 = pneg %p4532
      $region50: #{tpu_custom_call.1} parent=5 // pred_check_branch
        %4535 = sbr.rel (%p4533) target = $region52
      $region51: #{tpu_custom_call.1} parent=5 // pred_region
        %s4536 = ssub.s32 %s14, 2
        // Predicated region
        $region53: #{tpu_custom_call.1} parent=51 // pred_check
          %p4537 = pneg %p127
        $region54: #{tpu_custom_call.1} parent=51 // pred_check_branch
          %4539 = sbr.rel (%p4537) target = $region56
        $region55: #{tpu_custom_call.1} parent=51 // pred_region
          %s4540 = sand.u32 %s112, 1
          %s4541 = scalar_lea.sflag [#allocation4], %s4540
          %s4542 = sand.u32 %s112, 1
          %s4543 = smul.addr %s4542, 256
          %s4544 = scalar_lea.vmem [#allocation8], %s4543
          %4545 = dma.done %s4541, 4096
        $region56: #{tpu_custom_call.1} parent=51 // pred_fallthru
          _
      $region52: #{tpu_custom_call.1} parent=5 // pred_fallthru
        _
    $region6: #{tpu_custom_call.1} parent=1 // loop_footer
      %s18 = sadd.s32 1, %s14
    $region7: #{tpu_custom_call.1} parent=1 // loop_footer_branch
      %13 = sbr.rel target = $region3
    $region8: #{tpu_custom_call.1} parent=1 // loop_exit
      _
    %4546 = vsyncpa [#allocation3], 1
    %s4547 = scalar_lea.sflag [#allocation3], 1
    %4548 = vsyncpa %s4547, 1
    %4549 = vsyncpa [#allocation6], 1
    %4550 = vsyncpa [#allocation4], 1
    %s4551 = scalar_lea.sflag [#allocation4], 1
    %4552 = vsyncpa %s4551, 1

</llo_original>
